<compile_context>
chip_gen: v7x
topology: tpu7x:2x2x1
jax: 0.10.0
libtpu: 0.0.40
codegen_flags: <defaults>
</compile_context>

<pallas_src>
import functools

import jax
import jax.numpy as jnp
from jax import lax
from jax.experimental import pallas as pl
from jax.experimental.pallas import tpu as pltpu

# ---------------- problem sizes (small, consistent with the module) ----------
B = 16            # batch
M = 128           # n_samples (lane-aligned)
K = 4             # len(alpha_init) == number of basis functions
DEPTH = 3         # vp_depth
DELTA = 1e-3      # VPLayer.delta (vp_delta_fix=True)
REG = 1e-3        # conf.vp_reg_factor (per-depth var_pro_jac solve)
FINAL_REG = 1e-4  # relative ridge for the final lstsq-style solve


def _solve4_sym(g, r, reg, *, approx_recip):
    """Solve (G + reg*I) c = r for symmetric 4x4 systems of per-batch scalars.

    g[(i, j)] (i <= j) and r[k] are (bt, 1) arrays.  Fused adjugate/cofactor
    formulation: the cofactors of each output row are formed, dotted with r
    and discarded immediately (small live vreg set -> no spills at bt=16).
    1/det runs on the EUP (approx) for the inner solves, exact for the final.
    """
    m00 = g[(0, 0)] + reg
    m11 = g[(1, 1)] + reg
    m22 = g[(2, 2)] + reg
    m33 = g[(3, 3)] + reg
    m01 = g[(0, 1)]; m02 = g[(0, 2)]; m03 = g[(0, 3)]
    m12 = g[(1, 2)]; m13 = g[(1, 3)]; m23 = g[(2, 3)]

    s0 = m00 * m11 - m01 * m01
    s1 = m00 * m12 - m01 * m02
    s2 = m00 * m13 - m01 * m03
    s3 = m01 * m12 - m11 * m02
    s4 = m01 * m13 - m11 * m03
    s5 = m02 * m13 - m12 * m03
    c5 = m22 * m33 - m23 * m23
    c4 = m12 * m33 - m13 * m23
    c3 = m12 * m23 - m13 * m22
    c2 = m02 * m33 - m03 * m23
    c1 = m02 * m23 - m03 * m22
    c0 = s5                      # m02*m13 - m03*m12 == s5 for symmetric G

    det = s0 * c5 - s1 * c4 + s2 * c3 + s3 * c2 - s4 * c1 + s5 * c0
    if approx_recip:
        invdet = pl.reciprocal(det, approx=True)   # EUP slot, off the VALU chain
    else:
        invdet = 1.0 / det                         # exact divide, final solve

    r0, r1, r2, r3 = r
    x0 = ((m11 * c5 - m12 * c4 + m13 * c3) * r0
          + (-m01 * c5 + m02 * c4 - m03 * c3) * r1
          + (m13 * s5 - m23 * s4 + m33 * s3) * r2
          + (-m12 * s5 + m22 * s4 - m23 * s3) * r3) * invdet
    x1 = ((-m01 * c5 + m12 * c2 - m13 * c1) * r0
          + (m00 * c5 - m02 * c2 + m03 * c1) * r1
          + (-m03 * s5 + m23 * s2 - m33 * s1) * r2
          + (m02 * s5 - m22 * s2 + m23 * s1) * r3) * invdet
    x2 = ((m01 * c4 - m11 * c2 + m13 * c0) * r0
          + (-m00 * c4 + m01 * c2 - m03 * c0) * r1
          + (m03 * s4 - m13 * s2 + m33 * s0) * r2
          + (-m02 * s4 + m12 * s2 - m23 * s0) * r3) * invdet
    x3 = ((-m01 * c3 + m11 * c1 - m12 * c0) * r0
          + (m00 * c3 - m01 * c1 + m02 * c0) * r1
          + (-m03 * s3 + m13 * s1 - m23 * s0) * r2
          + (m02 * s3 - m12 * s1 + m22 * s0) * r3) * invdet
    return [x0, x1, x2, x3]


def uvp_kernel(bt, a0_ref, w_ref, b_ref, x_ref, y_ref, alpha_ref):
    # a0_ref (K,), w_ref (DEPTH*K*K,), b_ref (DEPTH*K,) live in SMEM (prefetch)
    x = x_ref[...]                                            # (bt, M)
    # t = linspace(0, 1, M) built in-kernel: no input DMA for it.
    neg_t = (lax.broadcasted_iota(jnp.int32, (1, M), 1).astype(jnp.float32)
             * (-1.0 / (M - 1)))                              # (1, M)
    ones_col = jnp.ones((bt, 1), jnp.float32)

    # torch.tile(alpha_init, (batch, 1)) — alpha kept as K separate (bt, 1)
    # columns so nothing on the serial chain needs lane slices or padding.
    a = [a0_ref[k] * ones_col for k in range(K)]

    def basis(a_cols):
        # f_k[b, m] = exp(-alpha_k[b] * t_m); EUP exp over lane-dense (bt, M)
        return [jnp.exp(a_cols[k] * neg_t) for k in range(K)]

    def gram_and_rhs(f):
        # 10 unique Gram entries + K rhs entries: VPU multiply + XLU lane
        # reduction (keeps the tiny 4x4 contractions off the MXU entirely).
        g = {}
        for i in range(K):
            for j in range(i, K):
                g[(i, j)] = jnp.sum(f[i] * f[j], axis=1, keepdims=True)
        r = [jnp.sum(f[k] * x, axis=1, keepdims=True) for k in range(K)]
        return g, r

    for d in range(DEPTH):
        # ---- VPLayer: var_pro_jac (ridge-regularized solve) + grad step ----
        f = basis(a)
        g, r = gram_and_rhs(f)
        c = _solve4_sym(g, r, REG, approx_recip=True)            # (bt,1) x 4
        resid = c[0] * f[0] + c[1] * f[1] + c[2] * f[2] + c[3] * f[3] - x
        rt = resid * neg_t                 # shared factor of the Jacobian rows
        grad = [c[k] * jnp.sum(rt * f[k], axis=1, keepdims=True)
                for k in range(K)]
        # clip_norm (||g|| <= 1) folded with delta into ONE (bt,1) step factor.
        nrm2 = (grad[0] * grad[0] + grad[1] * grad[1]
                + grad[2] * grad[2] + grad[3] * grad[3])
        step = jnp.where(nrm2 < 1.0, DELTA,
                         DELTA * lax.rsqrt(jnp.maximum(nrm2, 1e-30)))
        a = [a[k] + grad[k] * step for k in range(K)]            # 1 FMA per k
        # ---- per-iteration Linear (identity+noise init) + ReLU -------------
        # out_j = sum_k W[j,k]*a_k + b_j as VPU FMAs with SMEM scalar weights.
        a_new = []
        for j in range(K):
            row = (d * K + j) * K
            lin = w_ref[row] * a[0]
            for k in range(1, K):
                lin = lin + w_ref[row + k] * a[k]
            lin = lin + b_ref[d * K + j]          # scalar bias, added once
            a_new.append(jnp.maximum(lin, 0.0))   # conf.vp_res = False
        a = a_new

    # ---- final linear least squares (torch.linalg.lstsq) + prediction ------
    f = basis(a)
    g, r = gram_and_rhs(f)
    # Relative ridge: FINAL_REG * trace(G)/K keeps the normal-equations solve
    # well conditioned even when ReLU collapses alphas to duplicates/zeros.
    tr = g[(0, 0)] + g[(1, 1)] + g[(2, 2)] + g[(3, 3)]
    coeff = _solve4_sym(g, r, (FINAL_REG * 0.25) * tr, approx_recip=False)
    y_ref[...] = (coeff[0] * f[0] + coeff[1] * f[1]
                  + coeff[2] * f[2] + coeff[3] * f[3])            # (bt, M)

    # Alpha output: zero the slab once, then K masked column stores (store
    # slot, instead of iota/select VALU work).  Wrapper slices [:, :K].
    alpha_ref[...] = jnp.zeros((bt, 128), jnp.float32)
    for k in range(K):
        alpha_ref[:, k:k + 1] = a[k]


@functools.partial(jax.jit, static_argnames=("num_tiles",))
def uvp_regressor(x, alpha_init, w_flat, b_flat, *, num_tiles):
    """Returns (y_pred, alpha) like UVPRegressor.forward."""
    batch, m = x.shape
    assert m == M and batch % num_tiles == 0
    bt = batch // num_tiles
    assert bt % 8 == 0
    y_pred, alpha_pad = pl.pallas_call(
        functools.partial(uvp_kernel, bt),
        out_shape=(jax.ShapeDtypeStruct((batch, M), jnp.float32),
                   jax.ShapeDtypeStruct((batch, 128), jnp.float32)),
        grid_spec=pltpu.PrefetchScalarGridSpec(
            num_scalar_prefetch=3,                 # alpha_init, W, bias -> SMEM
            grid=(num_tiles,),
            in_specs=[
                pl.BlockSpec((bt, M), lambda i, a0, w, b: (i, 0)),   # x
            ],
            out_specs=[
                pl.BlockSpec((bt, M), lambda i, a0, w, b: (i, 0)),   # y_pred
                pl.BlockSpec((bt, 128), lambda i, a0, w, b: (i, 0)), # alpha pad
            ]),
        compiler_params=pltpu.CompilerParams(
            dimension_semantics=("parallel",)),
    )(alpha_init, w_flat, b_flat, x)
    return y_pred, alpha_pad[:, :K]


def _pick_num_tiles() -> int:
    """v7x has 2 TensorCores/chip: split the batch across them (bt=8 also
    keeps every per-batch scalar in a single vreg).  Single-TC generations
    (v5e/v6e) run the whole batch in one grid step to avoid the ~0.35 us/step
    pipeline overhead on this latency-bound kernel."""
    try:
        kind = jax.devices()[0].device_kind.lower()
    except Exception:
        return 1
    return 2 if "v7" in kind else 1


def make_params(key):
    """Deterministic parameter init matching UnrolledVP.__init__."""
    alpha_init = jnp.array([0.5, 1.5, 3.0, 6.0], dtype=jnp.float32)   # (K,)
    # create_eye_lin: W = I + I * randn(K) * 0.01, bias = 0  (per depth)
    keys = jax.random.split(key, DEPTH)
    w_rows, b_rows = [], []
    for d in range(DEPTH):
        noise = jax.random.normal(keys[d], (K,), dtype=jnp.float32)
        w = jnp.eye(K, dtype=jnp.float32) * (1.0 + 0.01 * noise)      # W[j, k]
        w_rows.append(w.reshape(-1))
        b_rows.append(jnp.zeros((K,), jnp.float32))
    w_flat = jnp.concatenate(w_rows)          # (DEPTH*K*K,) row-major W[j,k]
    b_flat = jnp.concatenate(b_rows)          # (DEPTH*K,)
    return alpha_init, w_flat, b_flat


if __name__ == "__main__":
    key = jax.random.PRNGKey(0)
    k_param, k_amp, k_noise = jax.random.split(key, 3)
    alpha_init, w_flat, b_flat = make_params(k_param)

    # Synthetic input signals: mixtures of the exponential basis + small noise.
    t = jnp.linspace(0.0, 1.0, M, dtype=jnp.float32)[None, :]          # (1, M)
    basis_host = jnp.exp(-alpha_init[:, None] * t)                     # (K, M)
    amps = jax.random.uniform(k_amp, (B, K), dtype=jnp.float32,
                              minval=0.2, maxval=1.0)
    x = amps @ basis_host + 0.01 * jax.random.normal(k_noise, (B, M),
                                                     dtype=jnp.float32)
    x = x.astype(jnp.float32)

    num_tiles = _pick_num_tiles()
    y_pred, alpha = uvp_regressor(x, alpha_init, w_flat, b_flat,
                                  num_tiles=num_tiles)
    jax.block_until_ready((y_pred, alpha))

    assert y_pred.shape == (B, M) and alpha.shape == (B, K)
    assert bool(jnp.all(jnp.isfinite(y_pred))) and bool(jnp.all(jnp.isfinite(alpha)))
    print("KERNEL_OK")
</pallas_src>

<mosaic_0001>
module attributes {stable_mosaic.version = 11 : i64} {
  func.func @uvp_kernel(%arg0: i32, %arg1: memref<4xf32, #tpu.memory_space<smem>>, %arg2: memref<48xf32, #tpu.memory_space<smem>>, %arg3: memref<12xf32, #tpu.memory_space<smem>>, %arg4: memref<16x128xf32, #tpu.memory_space<vmem>>, %arg5: memref<16x128xf32, #tpu.memory_space<vmem>>, %arg6: memref<16x128xf32, #tpu.memory_space<vmem>>) attributes {dimension_semantics = [#tpu.dimension_semantics<parallel>], iteration_bounds = array<i64: 1>, scalar_prefetch = 3 : i64, scratch_operands = 0 : i64, tpu.core_type = #tpu.core_type<tc>, window_params = [{transform_indices = @transform_0, window_bounds = array<i64: 16, 128>}, {transform_indices = @transform_1, window_bounds = array<i64: 16, 128>}, {transform_indices = @transform_2, window_bounds = array<i64: 16, 128>}]} {
    %c0 = arith.constant 0 : index
    %c0_0 = arith.constant 0 : index
    %0 = vector.load %arg4[%c0, %c0_0] : memref<16x128xf32, #tpu.memory_space<vmem>>, vector<16x128xf32>
    %1 = tpu.iota {dimensions = array<i32: 1>} : vector<1x128xi32>
    %2 = arith.sitofp %1 : vector<1x128xi32> to vector<1x128xf32>
    %cst = arith.constant -0.00787401571 : f32
    %3 = vector.broadcast %cst : f32 to vector<1x128xf32>
    %4 = arith.mulf %2, %3 : vector<1x128xf32>
    %cst_1 = arith.constant 1.000000e+00 : f32
    %5 = vector.broadcast %cst_1 : f32 to vector<16x1xf32>
    %c0_2 = arith.constant 0 : index
    %6 = memref.load %arg1[%c0_2] : memref<4xf32, #tpu.memory_space<smem>>
    %7 = vector.broadcast %6 : f32 to vector<16x1xf32>
    %8 = arith.mulf %7, %5 : vector<16x1xf32>
    %c1 = arith.constant 1 : index
    %9 = memref.load %arg1[%c1] : memref<4xf32, #tpu.memory_space<smem>>
    %10 = vector.broadcast %9 : f32 to vector<16x1xf32>
    %11 = arith.mulf %10, %5 : vector<16x1xf32>
    %c2 = arith.constant 2 : index
    %12 = memref.load %arg1[%c2] : memref<4xf32, #tpu.memory_space<smem>>
    %13 = vector.broadcast %12 : f32 to vector<16x1xf32>
    %14 = arith.mulf %13, %5 : vector<16x1xf32>
    %c3 = arith.constant 3 : index
    %15 = memref.load %arg1[%c3] : memref<4xf32, #tpu.memory_space<smem>>
    %16 = vector.broadcast %15 : f32 to vector<16x1xf32>
    %17 = arith.mulf %16, %5 : vector<16x1xf32>
    %18 = vector.broadcast %8 : vector<16x1xf32> to vector<16x128xf32>
    %19 = vector.broadcast %4 : vector<1x128xf32> to vector<16x128xf32>
    %20 = arith.mulf %18, %19 : vector<16x128xf32>
    %21 = math.exp %20 : vector<16x128xf32>
    %22 = vector.broadcast %11 : vector<16x1xf32> to vector<16x128xf32>
    %23 = vector.broadcast %4 : vector<1x128xf32> to vector<16x128xf32>
    %24 = arith.mulf %22, %23 : vector<16x128xf32>
    %25 = math.exp %24 : vector<16x128xf32>
    %26 = vector.broadcast %14 : vector<16x1xf32> to vector<16x128xf32>
    %27 = vector.broadcast %4 : vector<1x128xf32> to vector<16x128xf32>
    %28 = arith.mulf %26, %27 : vector<16x128xf32>
    %29 = math.exp %28 : vector<16x128xf32>
    %30 = vector.broadcast %17 : vector<16x1xf32> to vector<16x128xf32>
    %31 = vector.broadcast %4 : vector<1x128xf32> to vector<16x128xf32>
    %32 = arith.mulf %30, %31 : vector<16x128xf32>
    %33 = math.exp %32 : vector<16x128xf32>
    %34 = arith.mulf %21, %21 : vector<16x128xf32>
    %cst_3 = arith.constant dense<0.000000e+00> : vector<16xf32>
    %35 = vector.multi_reduction <add>, %34, %cst_3 [1] : vector<16x128xf32> to vector<16xf32>
    %36 = vector.shape_cast %35 : vector<16xf32> to vector<16x1xf32>
    %37 = arith.mulf %21, %25 : vector<16x128xf32>
    %cst_4 = arith.constant dense<0.000000e+00> : vector<16xf32>
    %38 = vector.multi_reduction <add>, %37, %cst_4 [1] : vector<16x128xf32> to vector<16xf32>
    %39 = vector.shape_cast %38 : vector<16xf32> to vector<16x1xf32>
    %40 = arith.mulf %21, %29 : vector<16x128xf32>
    %cst_5 = arith.constant dense<0.000000e+00> : vector<16xf32>
    %41 = vector.multi_reduction <add>, %40, %cst_5 [1] : vector<16x128xf32> to vector<16xf32>
    %42 = vector.shape_cast %41 : vector<16xf32> to vector<16x1xf32>
    %43 = arith.mulf %21, %33 : vector<16x128xf32>
    %cst_6 = arith.constant dense<0.000000e+00> : vector<16xf32>
    %44 = vector.multi_reduction <add>, %43, %cst_6 [1] : vector<16x128xf32> to vector<16xf32>
    %45 = vector.shape_cast %44 : vector<16xf32> to vector<16x1xf32>
    %46 = arith.mulf %25, %25 : vector<16x128xf32>
    %cst_7 = arith.constant dense<0.000000e+00> : vector<16xf32>
    %47 = vector.multi_reduction <add>, %46, %cst_7 [1] : vector<16x128xf32> to vector<16xf32>
    %48 = vector.shape_cast %47 : vector<16xf32> to vector<16x1xf32>
    %49 = arith.mulf %25, %29 : vector<16x128xf32>
    %cst_8 = arith.constant dense<0.000000e+00> : vector<16xf32>
    %50 = vector.multi_reduction <add>, %49, %cst_8 [1] : vector<16x128xf32> to vector<16xf32>
    %51 = vector.shape_cast %50 : vector<16xf32> to vector<16x1xf32>
    %52 = arith.mulf %25, %33 : vector<16x128xf32>
    %cst_9 = arith.constant dense<0.000000e+00> : vector<16xf32>
    %53 = vector.multi_reduction <add>, %52, %cst_9 [1] : vector<16x128xf32> to vector<16xf32>
    %54 = vector.shape_cast %53 : vector<16xf32> to vector<16x1xf32>
    %55 = arith.mulf %29, %29 : vector<16x128xf32>
    %cst_10 = arith.constant dense<0.000000e+00> : vector<16xf32>
    %56 = vector.multi_reduction <add>, %55, %cst_10 [1] : vector<16x128xf32> to vector<16xf32>
    %57 = vector.shape_cast %56 : vector<16xf32> to vector<16x1xf32>
    %58 = arith.mulf %29, %33 : vector<16x128xf32>
    %cst_11 = arith.constant dense<0.000000e+00> : vector<16xf32>
    %59 = vector.multi_reduction <add>, %58, %cst_11 [1] : vector<16x128xf32> to vector<16xf32>
    %60 = vector.shape_cast %59 : vector<16xf32> to vector<16x1xf32>
    %61 = arith.mulf %33, %33 : vector<16x128xf32>
    %cst_12 = arith.constant dense<0.000000e+00> : vector<16xf32>
    %62 = vector.multi_reduction <add>, %61, %cst_12 [1] : vector<16x128xf32> to vector<16xf32>
    %63 = vector.shape_cast %62 : vector<16xf32> to vector<16x1xf32>
    %64 = arith.mulf %21, %0 : vector<16x128xf32>
    %cst_13 = arith.constant dense<0.000000e+00> : vector<16xf32>
    %65 = vector.multi_reduction <add>, %64, %cst_13 [1] : vector<16x128xf32> to vector<16xf32>
    %66 = vector.shape_cast %65 : vector<16xf32> to vector<16x1xf32>
    %67 = arith.mulf %25, %0 : vector<16x128xf32>
    %cst_14 = arith.constant dense<0.000000e+00> : vector<16xf32>
    %68 = vector.multi_reduction <add>, %67, %cst_14 [1] : vector<16x128xf32> to vector<16xf32>
    %69 = vector.shape_cast %68 : vector<16xf32> to vector<16x1xf32>
    %70 = arith.mulf %29, %0 : vector<16x128xf32>
    %cst_15 = arith.constant dense<0.000000e+00> : vector<16xf32>
    %71 = vector.multi_reduction <add>, %70, %cst_15 [1] : vector<16x128xf32> to vector<16xf32>
    %72 = vector.shape_cast %71 : vector<16xf32> to vector<16x1xf32>
    %73 = arith.mulf %33, %0 : vector<16x128xf32>
    %cst_16 = arith.constant dense<0.000000e+00> : vector<16xf32>
    %74 = vector.multi_reduction <add>, %73, %cst_16 [1] : vector<16x128xf32> to vector<16xf32>
    %75 = vector.shape_cast %74 : vector<16xf32> to vector<16x1xf32>
    %cst_17 = arith.constant 1.000000e-03 : f32
    %76 = vector.broadcast %cst_17 : f32 to vector<16x1xf32>
    %77 = arith.addf %36, %76 : vector<16x1xf32>
    %cst_18 = arith.constant 1.000000e-03 : f32
    %78 = vector.broadcast %cst_18 : f32 to vector<16x1xf32>
    %79 = arith.addf %48, %78 : vector<16x1xf32>
    %cst_19 = arith.constant 1.000000e-03 : f32
    %80 = vector.broadcast %cst_19 : f32 to vector<16x1xf32>
    %81 = arith.addf %57, %80 : vector<16x1xf32>
    %cst_20 = arith.constant 1.000000e-03 : f32
    %82 = vector.broadcast %cst_20 : f32 to vector<16x1xf32>
    %83 = arith.addf %63, %82 : vector<16x1xf32>
    %84 = arith.mulf %77, %79 : vector<16x1xf32>
    %85 = arith.mulf %39, %39 : vector<16x1xf32>
    %86 = arith.subf %84, %85 : vector<16x1xf32>
    %87 = arith.mulf %77, %51 : vector<16x1xf32>
    %88 = arith.mulf %39, %42 : vector<16x1xf32>
    %89 = arith.subf %87, %88 : vector<16x1xf32>
    %90 = arith.mulf %77, %54 : vector<16x1xf32>
    %91 = arith.mulf %39, %45 : vector<16x1xf32>
    %92 = arith.subf %90, %91 : vector<16x1xf32>
    %93 = arith.mulf %39, %51 : vector<16x1xf32>
    %94 = arith.mulf %79, %42 : vector<16x1xf32>
    %95 = arith.subf %93, %94 : vector<16x1xf32>
    %96 = arith.mulf %39, %54 : vector<16x1xf32>
    %97 = arith.mulf %79, %45 : vector<16x1xf32>
    %98 = arith.subf %96, %97 : vector<16x1xf32>
    %99 = arith.mulf %42, %54 : vector<16x1xf32>
    %100 = arith.mulf %51, %45 : vector<16x1xf32>
    %101 = arith.subf %99, %100 : vector<16x1xf32>
    %102 = arith.mulf %81, %83 : vector<16x1xf32>
    %103 = arith.mulf %60, %60 : vector<16x1xf32>
    %104 = arith.subf %102, %103 : vector<16x1xf32>
    %105 = arith.mulf %51, %83 : vector<16x1xf32>
    %106 = arith.mulf %54, %60 : vector<16x1xf32>
    %107 = arith.subf %105, %106 : vector<16x1xf32>
    %108 = arith.mulf %51, %60 : vector<16x1xf32>
    %109 = arith.mulf %54, %81 : vector<16x1xf32>
    %110 = arith.subf %108, %109 : vector<16x1xf32>
    %111 = arith.mulf %42, %83 : vector<16x1xf32>
    %112 = arith.mulf %45, %60 : vector<16x1xf32>
    %113 = arith.subf %111, %112 : vector<16x1xf32>
    %114 = arith.mulf %42, %60 : vector<16x1xf32>
    %115 = arith.mulf %45, %81 : vector<16x1xf32>
    %116 = arith.subf %114, %115 : vector<16x1xf32>
    %117 = arith.mulf %86, %104 : vector<16x1xf32>
    %118 = arith.mulf %89, %107 : vector<16x1xf32>
    %119 = arith.subf %117, %118 : vector<16x1xf32>
    %120 = arith.mulf %92, %110 : vector<16x1xf32>
    %121 = arith.addf %119, %120 : vector<16x1xf32>
    %122 = arith.mulf %95, %113 : vector<16x1xf32>
    %123 = arith.addf %121, %122 : vector<16x1xf32>
    %124 = arith.mulf %98, %116 : vector<16x1xf32>
    %125 = arith.subf %123, %124 : vector<16x1xf32>
    %126 = arith.mulf %101, %101 : vector<16x1xf32>
    %127 = arith.addf %125, %126 : vector<16x1xf32>
    %128 = tpu.reciprocal %127 {approx = true} : vector<16x1xf32> -> vector<16x1xf32>
    %129 = arith.mulf %79, %104 : vector<16x1xf32>
    %130 = arith.mulf %51, %107 : vector<16x1xf32>
    %131 = arith.subf %129, %130 : vector<16x1xf32>
    %132 = arith.mulf %54, %110 : vector<16x1xf32>
    %133 = arith.addf %131, %132 : vector<16x1xf32>
    %134 = arith.mulf %133, %66 : vector<16x1xf32>
    %cst_21 = arith.constant 0.000000e+00 : f32
    %135 = vector.broadcast %cst_21 : f32 to vector<16x1xf32>
    %136 = arith.subf %135, %39 : vector<16x1xf32>
    %137 = arith.mulf %136, %104 : vector<16x1xf32>
    %138 = arith.mulf %42, %107 : vector<16x1xf32>
    %139 = arith.addf %137, %138 : vector<16x1xf32>
    %140 = arith.mulf %45, %110 : vector<16x1xf32>
    %141 = arith.subf %139, %140 : vector<16x1xf32>
    %142 = arith.mulf %141, %69 : vector<16x1xf32>
    %143 = arith.addf %134, %142 : vector<16x1xf32>
    %144 = arith.mulf %54, %101 : vector<16x1xf32>
    %145 = arith.mulf %60, %98 : vector<16x1xf32>
    %146 = arith.subf %144, %145 : vector<16x1xf32>
    %147 = arith.mulf %83, %95 : vector<16x1xf32>
    %148 = arith.addf %146, %147 : vector<16x1xf32>
    %149 = arith.mulf %148, %72 : vector<16x1xf32>
    %150 = arith.addf %143, %149 : vector<16x1xf32>
    %cst_22 = arith.constant 0.000000e+00 : f32
    %151 = vector.broadcast %cst_22 : f32 to vector<16x1xf32>
    %152 = arith.subf %151, %51 : vector<16x1xf32>
    %153 = arith.mulf %152, %101 : vector<16x1xf32>
    %154 = arith.mulf %81, %98 : vector<16x1xf32>
    %155 = arith.addf %153, %154 : vector<16x1xf32>
    %156 = arith.mulf %60, %95 : vector<16x1xf32>
    %157 = arith.subf %155, %156 : vector<16x1xf32>
    %158 = arith.mulf %157, %75 : vector<16x1xf32>
    %159 = arith.addf %150, %158 : vector<16x1xf32>
    %160 = arith.mulf %159, %128 : vector<16x1xf32>
    %cst_23 = arith.constant 0.000000e+00 : f32
    %161 = vector.broadcast %cst_23 : f32 to vector<16x1xf32>
    %162 = arith.subf %161, %39 : vector<16x1xf32>
    %163 = arith.mulf %162, %104 : vector<16x1xf32>
    %164 = arith.mulf %51, %113 : vector<16x1xf32>
    %165 = arith.addf %163, %164 : vector<16x1xf32>
    %166 = arith.mulf %54, %116 : vector<16x1xf32>
    %167 = arith.subf %165, %166 : vector<16x1xf32>
    %168 = arith.mulf %167, %66 : vector<16x1xf32>
    %169 = arith.mulf %77, %104 : vector<16x1xf32>
    %170 = arith.mulf %42, %113 : vector<16x1xf32>
    %171 = arith.subf %169, %170 : vector<16x1xf32>
    %172 = arith.mulf %45, %116 : vector<16x1xf32>
    %173 = arith.addf %171, %172 : vector<16x1xf32>
    %174 = arith.mulf %173, %69 : vector<16x1xf32>
    %175 = arith.addf %168, %174 : vector<16x1xf32>
    %cst_24 = arith.constant 0.000000e+00 : f32
    %176 = vector.broadcast %cst_24 : f32 to vector<16x1xf32>
    %177 = arith.subf %176, %45 : vector<16x1xf32>
    %178 = arith.mulf %177, %101 : vector<16x1xf32>
    %179 = arith.mulf %60, %92 : vector<16x1xf32>
    %180 = arith.addf %178, %179 : vector<16x1xf32>
    %181 = arith.mulf %83, %89 : vector<16x1xf32>
    %182 = arith.subf %180, %181 : vector<16x1xf32>
    %183 = arith.mulf %182, %72 : vector<16x1xf32>
    %184 = arith.addf %175, %183 : vector<16x1xf32>
    %185 = arith.mulf %42, %101 : vector<16x1xf32>
    %186 = arith.mulf %81, %92 : vector<16x1xf32>
    %187 = arith.subf %185, %186 : vector<16x1xf32>
    %188 = arith.mulf %60, %89 : vector<16x1xf32>
    %189 = arith.addf %187, %188 : vector<16x1xf32>
    %190 = arith.mulf %189, %75 : vector<16x1xf32>
    %191 = arith.addf %184, %190 : vector<16x1xf32>
    %192 = arith.mulf %191, %128 : vector<16x1xf32>
    %193 = arith.mulf %39, %107 : vector<16x1xf32>
    %194 = arith.mulf %79, %113 : vector<16x1xf32>
    %195 = arith.subf %193, %194 : vector<16x1xf32>
    %196 = arith.mulf %54, %101 : vector<16x1xf32>
    %197 = arith.addf %195, %196 : vector<16x1xf32>
    %198 = arith.mulf %197, %66 : vector<16x1xf32>
    %cst_25 = arith.constant 0.000000e+00 : f32
    %199 = vector.broadcast %cst_25 : f32 to vector<16x1xf32>
    %200 = arith.subf %199, %77 : vector<16x1xf32>
    %201 = arith.mulf %200, %107 : vector<16x1xf32>
    %202 = arith.mulf %39, %113 : vector<16x1xf32>
    %203 = arith.addf %201, %202 : vector<16x1xf32>
    %204 = arith.mulf %45, %101 : vector<16x1xf32>
    %205 = arith.subf %203, %204 : vector<16x1xf32>
    %206 = arith.mulf %205, %69 : vector<16x1xf32>
    %207 = arith.addf %198, %206 : vector<16x1xf32>
    %208 = arith.mulf %45, %98 : vector<16x1xf32>
    %209 = arith.mulf %54, %92 : vector<16x1xf32>
    %210 = arith.subf %208, %209 : vector<16x1xf32>
    %211 = arith.mulf %83, %86 : vector<16x1xf32>
    %212 = arith.addf %210, %211 : vector<16x1xf32>
    %213 = arith.mulf %212, %72 : vector<16x1xf32>
    %214 = arith.addf %207, %213 : vector<16x1xf32>
    %cst_26 = arith.constant 0.000000e+00 : f32
    %215 = vector.broadcast %cst_26 : f32 to vector<16x1xf32>
    %216 = arith.subf %215, %42 : vector<16x1xf32>
    %217 = arith.mulf %216, %98 : vector<16x1xf32>
    %218 = arith.mulf %51, %92 : vector<16x1xf32>
    %219 = arith.addf %217, %218 : vector<16x1xf32>
    %220 = arith.mulf %60, %86 : vector<16x1xf32>
    %221 = arith.subf %219, %220 : vector<16x1xf32>
    %222 = arith.mulf %221, %75 : vector<16x1xf32>
    %223 = arith.addf %214, %222 : vector<16x1xf32>
    %224 = arith.mulf %223, %128 : vector<16x1xf32>
    %cst_27 = arith.constant 0.000000e+00 : f32
    %225 = vector.broadcast %cst_27 : f32 to vector<16x1xf32>
    %226 = arith.subf %225, %39 : vector<16x1xf32>
    %227 = arith.mulf %226, %110 : vector<16x1xf32>
    %228 = arith.mulf %79, %116 : vector<16x1xf32>
    %229 = arith.addf %227, %228 : vector<16x1xf32>
    %230 = arith.mulf %51, %101 : vector<16x1xf32>
    %231 = arith.subf %229, %230 : vector<16x1xf32>
    %232 = arith.mulf %231, %66 : vector<16x1xf32>
    %233 = arith.mulf %77, %110 : vector<16x1xf32>
    %234 = arith.mulf %39, %116 : vector<16x1xf32>
    %235 = arith.subf %233, %234 : vector<16x1xf32>
    %236 = arith.mulf %42, %101 : vector<16x1xf32>
    %237 = arith.addf %235, %236 : vector<16x1xf32>
    %238 = arith.mulf %237, %69 : vector<16x1xf32>
    %239 = arith.addf %232, %238 : vector<16x1xf32>
    %cst_28 = arith.constant 0.000000e+00 : f32
    %240 = vector.broadcast %cst_28 : f32 to vector<16x1xf32>
    %241 = arith.subf %240, %45 : vector<16x1xf32>
    %242 = arith.mulf %241, %95 : vector<16x1xf32>
    %243 = arith.mulf %54, %89 : vector<16x1xf32>
    %244 = arith.addf %242, %243 : vector<16x1xf32>
    %245 = arith.mulf %60, %86 : vector<16x1xf32>
    %246 = arith.subf %244, %245 : vector<16x1xf32>
    %247 = arith.mulf %246, %72 : vector<16x1xf32>
    %248 = arith.addf %239, %247 : vector<16x1xf32>
    %249 = arith.mulf %42, %95 : vector<16x1xf32>
    %250 = arith.mulf %51, %89 : vector<16x1xf32>
    %251 = arith.subf %249, %250 : vector<16x1xf32>
    %252 = arith.mulf %81, %86 : vector<16x1xf32>
    %253 = arith.addf %251, %252 : vector<16x1xf32>
    %254 = arith.mulf %253, %75 : vector<16x1xf32>
    %255 = arith.addf %248, %254 : vector<16x1xf32>
    %256 = arith.mulf %255, %128 : vector<16x1xf32>
    %257 = vector.broadcast %160 : vector<16x1xf32> to vector<16x128xf32>
    %258 = arith.mulf %257, %21 : vector<16x128xf32>
    %259 = vector.broadcast %192 : vector<16x1xf32> to vector<16x128xf32>
    %260 = arith.mulf %259, %25 : vector<16x128xf32>
    %261 = arith.addf %258, %260 : vector<16x128xf32>
    %262 = vector.broadcast %224 : vector<16x1xf32> to vector<16x128xf32>
    %263 = arith.mulf %262, %29 : vector<16x128xf32>
    %264 = arith.addf %261, %263 : vector<16x128xf32>
    %265 = vector.broadcast %256 : vector<16x1xf32> to vector<16x128xf32>
    %266 = arith.mulf %265, %33 : vector<16x128xf32>
    %267 = arith.addf %264, %266 : vector<16x128xf32>
    %268 = arith.subf %267, %0 : vector<16x128xf32>
    %269 = vector.broadcast %4 : vector<1x128xf32> to vector<16x128xf32>
    %270 = arith.mulf %268, %269 : vector<16x128xf32>
    %271 = arith.mulf %270, %21 : vector<16x128xf32>
    %cst_29 = arith.constant dense<0.000000e+00> : vector<16xf32>
    %272 = vector.multi_reduction <add>, %271, %cst_29 [1] : vector<16x128xf32> to vector<16xf32>
    %273 = vector.shape_cast %272 : vector<16xf32> to vector<16x1xf32>
    %274 = arith.mulf %160, %273 : vector<16x1xf32>
    %275 = arith.mulf %270, %25 : vector<16x128xf32>
    %cst_30 = arith.constant dense<0.000000e+00> : vector<16xf32>
    %276 = vector.multi_reduction <add>, %275, %cst_30 [1] : vector<16x128xf32> to vector<16xf32>
    %277 = vector.shape_cast %276 : vector<16xf32> to vector<16x1xf32>
    %278 = arith.mulf %192, %277 : vector<16x1xf32>
    %279 = arith.mulf %270, %29 : vector<16x128xf32>
    %cst_31 = arith.constant dense<0.000000e+00> : vector<16xf32>
    %280 = vector.multi_reduction <add>, %279, %cst_31 [1] : vector<16x128xf32> to vector<16xf32>
    %281 = vector.shape_cast %280 : vector<16xf32> to vector<16x1xf32>
    %282 = arith.mulf %224, %281 : vector<16x1xf32>
    %283 = arith.mulf %270, %33 : vector<16x128xf32>
    %cst_32 = arith.constant dense<0.000000e+00> : vector<16xf32>
    %284 = vector.multi_reduction <add>, %283, %cst_32 [1] : vector<16x128xf32> to vector<16xf32>
    %285 = vector.shape_cast %284 : vector<16xf32> to vector<16x1xf32>
    %286 = arith.mulf %256, %285 : vector<16x1xf32>
    %287 = arith.mulf %274, %274 : vector<16x1xf32>
    %288 = arith.mulf %278, %278 : vector<16x1xf32>
    %289 = arith.addf %287, %288 : vector<16x1xf32>
    %290 = arith.mulf %282, %282 : vector<16x1xf32>
    %291 = arith.addf %289, %290 : vector<16x1xf32>
    %292 = arith.mulf %286, %286 : vector<16x1xf32>
    %293 = arith.addf %291, %292 : vector<16x1xf32>
    %cst_33 = arith.constant 1.000000e+00 : f32
    %294 = vector.broadcast %cst_33 : f32 to vector<16x1xf32>
    %295 = arith.cmpf olt, %293, %294 : vector<16x1xf32>
    %cst_34 = arith.constant 1.000000e-30 : f32
    %296 = vector.broadcast %cst_34 : f32 to vector<16x1xf32>
    %297 = arith.maximumf %293, %296 : vector<16x1xf32>
    %298 = math.rsqrt %297 : vector<16x1xf32>
    %cst_35 = arith.constant 1.000000e-03 : f32
    %299 = vector.broadcast %cst_35 : f32 to vector<16x1xf32>
    %300 = arith.mulf %299, %298 : vector<16x1xf32>
    %cst_36 = arith.constant 1.000000e-03 : f32
    %301 = vector.broadcast %cst_36 : f32 to vector<16x1xf32>
    %302 = arith.select %295, %301, %300 : vector<16x1xi1>, vector<16x1xf32>
    %303 = arith.mulf %274, %302 : vector<16x1xf32>
    %304 = arith.addf %8, %303 : vector<16x1xf32>
    %305 = arith.mulf %278, %302 : vector<16x1xf32>
    %306 = arith.addf %11, %305 : vector<16x1xf32>
    %307 = arith.mulf %282, %302 : vector<16x1xf32>
    %308 = arith.addf %14, %307 : vector<16x1xf32>
    %309 = arith.mulf %286, %302 : vector<16x1xf32>
    %310 = arith.addf %17, %309 : vector<16x1xf32>
    %c0_37 = arith.constant 0 : index
    %311 = memref.load %arg2[%c0_37] : memref<48xf32, #tpu.memory_space<smem>>
    %312 = vector.broadcast %311 : f32 to vector<16x1xf32>
    %313 = arith.mulf %312, %304 : vector<16x1xf32>
    %c1_38 = arith.constant 1 : index
    %314 = memref.load %arg2[%c1_38] : memref<48xf32, #tpu.memory_space<smem>>
    %315 = vector.broadcast %314 : f32 to vector<16x1xf32>
    %316 = arith.mulf %315, %306 : vector<16x1xf32>
    %317 = arith.addf %313, %316 : vector<16x1xf32>
    %c2_39 = arith.constant 2 : index
    %318 = memref.load %arg2[%c2_39] : memref<48xf32, #tpu.memory_space<smem>>
    %319 = vector.broadcast %318 : f32 to vector<16x1xf32>
    %320 = arith.mulf %319, %308 : vector<16x1xf32>
    %321 = arith.addf %317, %320 : vector<16x1xf32>
    %c3_40 = arith.constant 3 : index
    %322 = memref.load %arg2[%c3_40] : memref<48xf32, #tpu.memory_space<smem>>
    %323 = vector.broadcast %322 : f32 to vector<16x1xf32>
    %324 = arith.mulf %323, %310 : vector<16x1xf32>
    %325 = arith.addf %321, %324 : vector<16x1xf32>
    %c0_41 = arith.constant 0 : index
    %326 = memref.load %arg3[%c0_41] : memref<12xf32, #tpu.memory_space<smem>>
    %327 = vector.broadcast %326 : f32 to vector<16x1xf32>
    %328 = arith.addf %325, %327 : vector<16x1xf32>
    %cst_42 = arith.constant 0.000000e+00 : f32
    %329 = vector.broadcast %cst_42 : f32 to vector<16x1xf32>
    %330 = arith.maximumf %328, %329 : vector<16x1xf32>
    %c4 = arith.constant 4 : index
    %331 = memref.load %arg2[%c4] : memref<48xf32, #tpu.memory_space<smem>>
    %332 = vector.broadcast %331 : f32 to vector<16x1xf32>
    %333 = arith.mulf %332, %304 : vector<16x1xf32>
    %c5 = arith.constant 5 : index
    %334 = memref.load %arg2[%c5] : memref<48xf32, #tpu.memory_space<smem>>
    %335 = vector.broadcast %334 : f32 to vector<16x1xf32>
    %336 = arith.mulf %335, %306 : vector<16x1xf32>
    %337 = arith.addf %333, %336 : vector<16x1xf32>
    %c6 = arith.constant 6 : index
    %338 = memref.load %arg2[%c6] : memref<48xf32, #tpu.memory_space<smem>>
    %339 = vector.broadcast %338 : f32 to vector<16x1xf32>
    %340 = arith.mulf %339, %308 : vector<16x1xf32>
    %341 = arith.addf %337, %340 : vector<16x1xf32>
    %c7 = arith.constant 7 : index
    %342 = memref.load %arg2[%c7] : memref<48xf32, #tpu.memory_space<smem>>
    %343 = vector.broadcast %342 : f32 to vector<16x1xf32>
    %344 = arith.mulf %343, %310 : vector<16x1xf32>
    %345 = arith.addf %341, %344 : vector<16x1xf32>
    %c1_43 = arith.constant 1 : index
    %346 = memref.load %arg3[%c1_43] : memref<12xf32, #tpu.memory_space<smem>>
    %347 = vector.broadcast %346 : f32 to vector<16x1xf32>
    %348 = arith.addf %345, %347 : vector<16x1xf32>
    %cst_44 = arith.constant 0.000000e+00 : f32
    %349 = vector.broadcast %cst_44 : f32 to vector<16x1xf32>
    %350 = arith.maximumf %348, %349 : vector<16x1xf32>
    %c8 = arith.constant 8 : index
    %351 = memref.load %arg2[%c8] : memref<48xf32, #tpu.memory_space<smem>>
    %352 = vector.broadcast %351 : f32 to vector<16x1xf32>
    %353 = arith.mulf %352, %304 : vector<16x1xf32>
    %c9 = arith.constant 9 : index
    %354 = memref.load %arg2[%c9] : memref<48xf32, #tpu.memory_space<smem>>
    %355 = vector.broadcast %354 : f32 to vector<16x1xf32>
    %356 = arith.mulf %355, %306 : vector<16x1xf32>
    %357 = arith.addf %353, %356 : vector<16x1xf32>
    %c10 = arith.constant 10 : index
    %358 = memref.load %arg2[%c10] : memref<48xf32, #tpu.memory_space<smem>>
    %359 = vector.broadcast %358 : f32 to vector<16x1xf32>
    %360 = arith.mulf %359, %308 : vector<16x1xf32>
    %361 = arith.addf %357, %360 : vector<16x1xf32>
    %c11 = arith.constant 11 : index
    %362 = memref.load %arg2[%c11] : memref<48xf32, #tpu.memory_space<smem>>
    %363 = vector.broadcast %362 : f32 to vector<16x1xf32>
    %364 = arith.mulf %363, %310 : vector<16x1xf32>
    %365 = arith.addf %361, %364 : vector<16x1xf32>
    %c2_45 = arith.constant 2 : index
    %366 = memref.load %arg3[%c2_45] : memref<12xf32, #tpu.memory_space<smem>>
    %367 = vector.broadcast %366 : f32 to vector<16x1xf32>
    %368 = arith.addf %365, %367 : vector<16x1xf32>
    %cst_46 = arith.constant 0.000000e+00 : f32
    %369 = vector.broadcast %cst_46 : f32 to vector<16x1xf32>
    %370 = arith.maximumf %368, %369 : vector<16x1xf32>
    %c12 = arith.constant 12 : index
    %371 = memref.load %arg2[%c12] : memref<48xf32, #tpu.memory_space<smem>>
    %372 = vector.broadcast %371 : f32 to vector<16x1xf32>
    %373 = arith.mulf %372, %304 : vector<16x1xf32>
    %c13 = arith.constant 13 : index
    %374 = memref.load %arg2[%c13] : memref<48xf32, #tpu.memory_space<smem>>
    %375 = vector.broadcast %374 : f32 to vector<16x1xf32>
    %376 = arith.mulf %375, %306 : vector<16x1xf32>
    %377 = arith.addf %373, %376 : vector<16x1xf32>
    %c14 = arith.constant 14 : index
    %378 = memref.load %arg2[%c14] : memref<48xf32, #tpu.memory_space<smem>>
    %379 = vector.broadcast %378 : f32 to vector<16x1xf32>
    %380 = arith.mulf %379, %308 : vector<16x1xf32>
    %381 = arith.addf %377, %380 : vector<16x1xf32>
    %c15 = arith.constant 15 : index
    %382 = memref.load %arg2[%c15] : memref<48xf32, #tpu.memory_space<smem>>
    %383 = vector.broadcast %382 : f32 to vector<16x1xf32>
    %384 = arith.mulf %383, %310 : vector<16x1xf32>
    %385 = arith.addf %381, %384 : vector<16x1xf32>
    %c3_47 = arith.constant 3 : index
    %386 = memref.load %arg3[%c3_47] : memref<12xf32, #tpu.memory_space<smem>>
    %387 = vector.broadcast %386 : f32 to vector<16x1xf32>
    %388 = arith.addf %385, %387 : vector<16x1xf32>
    %cst_48 = arith.constant 0.000000e+00 : f32
    %389 = vector.broadcast %cst_48 : f32 to vector<16x1xf32>
    %390 = arith.maximumf %388, %389 : vector<16x1xf32>
    %391 = vector.broadcast %330 : vector<16x1xf32> to vector<16x128xf32>
    %392 = vector.broadcast %4 : vector<1x128xf32> to vector<16x128xf32>
    %393 = arith.mulf %391, %392 : vector<16x128xf32>
    %394 = math.exp %393 : vector<16x128xf32>
    %395 = vector.broadcast %350 : vector<16x1xf32> to vector<16x128xf32>
    %396 = vector.broadcast %4 : vector<1x128xf32> to vector<16x128xf32>
    %397 = arith.mulf %395, %396 : vector<16x128xf32>
    %398 = math.exp %397 : vector<16x128xf32>
    %399 = vector.broadcast %370 : vector<16x1xf32> to vector<16x128xf32>
    %400 = vector.broadcast %4 : vector<1x128xf32> to vector<16x128xf32>
    %401 = arith.mulf %399, %400 : vector<16x128xf32>
    %402 = math.exp %401 : vector<16x128xf32>
    %403 = vector.broadcast %390 : vector<16x1xf32> to vector<16x128xf32>
    %404 = vector.broadcast %4 : vector<1x128xf32> to vector<16x128xf32>
    %405 = arith.mulf %403, %404 : vector<16x128xf32>
    %406 = math.exp %405 : vector<16x128xf32>
    %407 = arith.mulf %394, %394 : vector<16x128xf32>
    %cst_49 = arith.constant dense<0.000000e+00> : vector<16xf32>
    %408 = vector.multi_reduction <add>, %407, %cst_49 [1] : vector<16x128xf32> to vector<16xf32>
    %409 = vector.shape_cast %408 : vector<16xf32> to vector<16x1xf32>
    %410 = arith.mulf %394, %398 : vector<16x128xf32>
    %cst_50 = arith.constant dense<0.000000e+00> : vector<16xf32>
    %411 = vector.multi_reduction <add>, %410, %cst_50 [1] : vector<16x128xf32> to vector<16xf32>
    %412 = vector.shape_cast %411 : vector<16xf32> to vector<16x1xf32>
    %413 = arith.mulf %394, %402 : vector<16x128xf32>
    %cst_51 = arith.constant dense<0.000000e+00> : vector<16xf32>
    %414 = vector.multi_reduction <add>, %413, %cst_51 [1] : vector<16x128xf32> to vector<16xf32>
    %415 = vector.shape_cast %414 : vector<16xf32> to vector<16x1xf32>
    %416 = arith.mulf %394, %406 : vector<16x128xf32>
    %cst_52 = arith.constant dense<0.000000e+00> : vector<16xf32>
    %417 = vector.multi_reduction <add>, %416, %cst_52 [1] : vector<16x128xf32> to vector<16xf32>
    %418 = vector.shape_cast %417 : vector<16xf32> to vector<16x1xf32>
    %419 = arith.mulf %398, %398 : vector<16x128xf32>
    %cst_53 = arith.constant dense<0.000000e+00> : vector<16xf32>
    %420 = vector.multi_reduction <add>, %419, %cst_53 [1] : vector<16x128xf32> to vector<16xf32>
    %421 = vector.shape_cast %420 : vector<16xf32> to vector<16x1xf32>
    %422 = arith.mulf %398, %402 : vector<16x128xf32>
    %cst_54 = arith.constant dense<0.000000e+00> : vector<16xf32>
    %423 = vector.multi_reduction <add>, %422, %cst_54 [1] : vector<16x128xf32> to vector<16xf32>
    %424 = vector.shape_cast %423 : vector<16xf32> to vector<16x1xf32>
    %425 = arith.mulf %398, %406 : vector<16x128xf32>
    %cst_55 = arith.constant dense<0.000000e+00> : vector<16xf32>
    %426 = vector.multi_reduction <add>, %425, %cst_55 [1] : vector<16x128xf32> to vector<16xf32>
    %427 = vector.shape_cast %426 : vector<16xf32> to vector<16x1xf32>
    %428 = arith.mulf %402, %402 : vector<16x128xf32>
    %cst_56 = arith.constant dense<0.000000e+00> : vector<16xf32>
    %429 = vector.multi_reduction <add>, %428, %cst_56 [1] : vector<16x128xf32> to vector<16xf32>
    %430 = vector.shape_cast %429 : vector<16xf32> to vector<16x1xf32>
    %431 = arith.mulf %402, %406 : vector<16x128xf32>
    %cst_57 = arith.constant dense<0.000000e+00> : vector<16xf32>
    %432 = vector.multi_reduction <add>, %431, %cst_57 [1] : vector<16x128xf32> to vector<16xf32>
    %433 = vector.shape_cast %432 : vector<16xf32> to vector<16x1xf32>
    %434 = arith.mulf %406, %406 : vector<16x128xf32>
    %cst_58 = arith.constant dense<0.000000e+00> : vector<16xf32>
    %435 = vector.multi_reduction <add>, %434, %cst_58 [1] : vector<16x128xf32> to vector<16xf32>
    %436 = vector.shape_cast %435 : vector<16xf32> to vector<16x1xf32>
    %437 = arith.mulf %394, %0 : vector<16x128xf32>
    %cst_59 = arith.constant dense<0.000000e+00> : vector<16xf32>
    %438 = vector.multi_reduction <add>, %437, %cst_59 [1] : vector<16x128xf32> to vector<16xf32>
    %439 = vector.shape_cast %438 : vector<16xf32> to vector<16x1xf32>
    %440 = arith.mulf %398, %0 : vector<16x128xf32>
    %cst_60 = arith.constant dense<0.000000e+00> : vector<16xf32>
    %441 = vector.multi_reduction <add>, %440, %cst_60 [1] : vector<16x128xf32> to vector<16xf32>
    %442 = vector.shape_cast %441 : vector<16xf32> to vector<16x1xf32>
    %443 = arith.mulf %402, %0 : vector<16x128xf32>
    %cst_61 = arith.constant dense<0.000000e+00> : vector<16xf32>
    %444 = vector.multi_reduction <add>, %443, %cst_61 [1] : vector<16x128xf32> to vector<16xf32>
    %445 = vector.shape_cast %444 : vector<16xf32> to vector<16x1xf32>
    %446 = arith.mulf %406, %0 : vector<16x128xf32>
    %cst_62 = arith.constant dense<0.000000e+00> : vector<16xf32>
    %447 = vector.multi_reduction <add>, %446, %cst_62 [1] : vector<16x128xf32> to vector<16xf32>
    %448 = vector.shape_cast %447 : vector<16xf32> to vector<16x1xf32>
    %cst_63 = arith.constant 1.000000e-03 : f32
    %449 = vector.broadcast %cst_63 : f32 to vector<16x1xf32>
    %450 = arith.addf %409, %449 : vector<16x1xf32>
    %cst_64 = arith.constant 1.000000e-03 : f32
    %451 = vector.broadcast %cst_64 : f32 to vector<16x1xf32>
    %452 = arith.addf %421, %451 : vector<16x1xf32>
    %cst_65 = arith.constant 1.000000e-03 : f32
    %453 = vector.broadcast %cst_65 : f32 to vector<16x1xf32>
    %454 = arith.addf %430, %453 : vector<16x1xf32>
    %cst_66 = arith.constant 1.000000e-03 : f32
    %455 = vector.broadcast %cst_66 : f32 to vector<16x1xf32>
    %456 = arith.addf %436, %455 : vector<16x1xf32>
    %457 = arith.mulf %450, %452 : vector<16x1xf32>
    %458 = arith.mulf %412, %412 : vector<16x1xf32>
    %459 = arith.subf %457, %458 : vector<16x1xf32>
    %460 = arith.mulf %450, %424 : vector<16x1xf32>
    %461 = arith.mulf %412, %415 : vector<16x1xf32>
    %462 = arith.subf %460, %461 : vector<16x1xf32>
    %463 = arith.mulf %450, %427 : vector<16x1xf32>
    %464 = arith.mulf %412, %418 : vector<16x1xf32>
    %465 = arith.subf %463, %464 : vector<16x1xf32>
    %466 = arith.mulf %412, %424 : vector<16x1xf32>
    %467 = arith.mulf %452, %415 : vector<16x1xf32>
    %468 = arith.subf %466, %467 : vector<16x1xf32>
    %469 = arith.mulf %412, %427 : vector<16x1xf32>
    %470 = arith.mulf %452, %418 : vector<16x1xf32>
    %471 = arith.subf %469, %470 : vector<16x1xf32>
    %472 = arith.mulf %415, %427 : vector<16x1xf32>
    %473 = arith.mulf %424, %418 : vector<16x1xf32>
    %474 = arith.subf %472, %473 : vector<16x1xf32>
    %475 = arith.mulf %454, %456 : vector<16x1xf32>
    %476 = arith.mulf %433, %433 : vector<16x1xf32>
    %477 = arith.subf %475, %476 : vector<16x1xf32>
    %478 = arith.mulf %424, %456 : vector<16x1xf32>
    %479 = arith.mulf %427, %433 : vector<16x1xf32>
    %480 = arith.subf %478, %479 : vector<16x1xf32>
    %481 = arith.mulf %424, %433 : vector<16x1xf32>
    %482 = arith.mulf %427, %454 : vector<16x1xf32>
    %483 = arith.subf %481, %482 : vector<16x1xf32>
    %484 = arith.mulf %415, %456 : vector<16x1xf32>
    %485 = arith.mulf %418, %433 : vector<16x1xf32>
    %486 = arith.subf %484, %485 : vector<16x1xf32>
    %487 = arith.mulf %415, %433 : vector<16x1xf32>
    %488 = arith.mulf %418, %454 : vector<16x1xf32>
    %489 = arith.subf %487, %488 : vector<16x1xf32>
    %490 = arith.mulf %459, %477 : vector<16x1xf32>
    %491 = arith.mulf %462, %480 : vector<16x1xf32>
    %492 = arith.subf %490, %491 : vector<16x1xf32>
    %493 = arith.mulf %465, %483 : vector<16x1xf32>
    %494 = arith.addf %492, %493 : vector<16x1xf32>
    %495 = arith.mulf %468, %486 : vector<16x1xf32>
    %496 = arith.addf %494, %495 : vector<16x1xf32>
    %497 = arith.mulf %471, %489 : vector<16x1xf32>
    %498 = arith.subf %496, %497 : vector<16x1xf32>
    %499 = arith.mulf %474, %474 : vector<16x1xf32>
    %500 = arith.addf %498, %499 : vector<16x1xf32>
    %501 = tpu.reciprocal %500 {approx = true} : vector<16x1xf32> -> vector<16x1xf32>
    %502 = arith.mulf %452, %477 : vector<16x1xf32>
    %503 = arith.mulf %424, %480 : vector<16x1xf32>
    %504 = arith.subf %502, %503 : vector<16x1xf32>
    %505 = arith.mulf %427, %483 : vector<16x1xf32>
    %506 = arith.addf %504, %505 : vector<16x1xf32>
    %507 = arith.mulf %506, %439 : vector<16x1xf32>
    %cst_67 = arith.constant 0.000000e+00 : f32
    %508 = vector.broadcast %cst_67 : f32 to vector<16x1xf32>
    %509 = arith.subf %508, %412 : vector<16x1xf32>
    %510 = arith.mulf %509, %477 : vector<16x1xf32>
    %511 = arith.mulf %415, %480 : vector<16x1xf32>
    %512 = arith.addf %510, %511 : vector<16x1xf32>
    %513 = arith.mulf %418, %483 : vector<16x1xf32>
    %514 = arith.subf %512, %513 : vector<16x1xf32>
    %515 = arith.mulf %514, %442 : vector<16x1xf32>
    %516 = arith.addf %507, %515 : vector<16x1xf32>
    %517 = arith.mulf %427, %474 : vector<16x1xf32>
    %518 = arith.mulf %433, %471 : vector<16x1xf32>
    %519 = arith.subf %517, %518 : vector<16x1xf32>
    %520 = arith.mulf %456, %468 : vector<16x1xf32>
    %521 = arith.addf %519, %520 : vector<16x1xf32>
    %522 = arith.mulf %521, %445 : vector<16x1xf32>
    %523 = arith.addf %516, %522 : vector<16x1xf32>
    %cst_68 = arith.constant 0.000000e+00 : f32
    %524 = vector.broadcast %cst_68 : f32 to vector<16x1xf32>
    %525 = arith.subf %524, %424 : vector<16x1xf32>
    %526 = arith.mulf %525, %474 : vector<16x1xf32>
    %527 = arith.mulf %454, %471 : vector<16x1xf32>
    %528 = arith.addf %526, %527 : vector<16x1xf32>
    %529 = arith.mulf %433, %468 : vector<16x1xf32>
    %530 = arith.subf %528, %529 : vector<16x1xf32>
    %531 = arith.mulf %530, %448 : vector<16x1xf32>
    %532 = arith.addf %523, %531 : vector<16x1xf32>
    %533 = arith.mulf %532, %501 : vector<16x1xf32>
    %cst_69 = arith.constant 0.000000e+00 : f32
    %534 = vector.broadcast %cst_69 : f32 to vector<16x1xf32>
    %535 = arith.subf %534, %412 : vector<16x1xf32>
    %536 = arith.mulf %535, %477 : vector<16x1xf32>
    %537 = arith.mulf %424, %486 : vector<16x1xf32>
    %538 = arith.addf %536, %537 : vector<16x1xf32>
    %539 = arith.mulf %427, %489 : vector<16x1xf32>
    %540 = arith.subf %538, %539 : vector<16x1xf32>
    %541 = arith.mulf %540, %439 : vector<16x1xf32>
    %542 = arith.mulf %450, %477 : vector<16x1xf32>
    %543 = arith.mulf %415, %486 : vector<16x1xf32>
    %544 = arith.subf %542, %543 : vector<16x1xf32>
    %545 = arith.mulf %418, %489 : vector<16x1xf32>
    %546 = arith.addf %544, %545 : vector<16x1xf32>
    %547 = arith.mulf %546, %442 : vector<16x1xf32>
    %548 = arith.addf %541, %547 : vector<16x1xf32>
    %cst_70 = arith.constant 0.000000e+00 : f32
    %549 = vector.broadcast %cst_70 : f32 to vector<16x1xf32>
    %550 = arith.subf %549, %418 : vector<16x1xf32>
    %551 = arith.mulf %550, %474 : vector<16x1xf32>
    %552 = arith.mulf %433, %465 : vector<16x1xf32>
    %553 = arith.addf %551, %552 : vector<16x1xf32>
    %554 = arith.mulf %456, %462 : vector<16x1xf32>
    %555 = arith.subf %553, %554 : vector<16x1xf32>
    %556 = arith.mulf %555, %445 : vector<16x1xf32>
    %557 = arith.addf %548, %556 : vector<16x1xf32>
    %558 = arith.mulf %415, %474 : vector<16x1xf32>
    %559 = arith.mulf %454, %465 : vector<16x1xf32>
    %560 = arith.subf %558, %559 : vector<16x1xf32>
    %561 = arith.mulf %433, %462 : vector<16x1xf32>
    %562 = arith.addf %560, %561 : vector<16x1xf32>
    %563 = arith.mulf %562, %448 : vector<16x1xf32>
    %564 = arith.addf %557, %563 : vector<16x1xf32>
    %565 = arith.mulf %564, %501 : vector<16x1xf32>
    %566 = arith.mulf %412, %480 : vector<16x1xf32>
    %567 = arith.mulf %452, %486 : vector<16x1xf32>
    %568 = arith.subf %566, %567 : vector<16x1xf32>
    %569 = arith.mulf %427, %474 : vector<16x1xf32>
    %570 = arith.addf %568, %569 : vector<16x1xf32>
    %571 = arith.mulf %570, %439 : vector<16x1xf32>
    %cst_71 = arith.constant 0.000000e+00 : f32
    %572 = vector.broadcast %cst_71 : f32 to vector<16x1xf32>
    %573 = arith.subf %572, %450 : vector<16x1xf32>
    %574 = arith.mulf %573, %480 : vector<16x1xf32>
    %575 = arith.mulf %412, %486 : vector<16x1xf32>
    %576 = arith.addf %574, %575 : vector<16x1xf32>
    %577 = arith.mulf %418, %474 : vector<16x1xf32>
    %578 = arith.subf %576, %577 : vector<16x1xf32>
    %579 = arith.mulf %578, %442 : vector<16x1xf32>
    %580 = arith.addf %571, %579 : vector<16x1xf32>
    %581 = arith.mulf %418, %471 : vector<16x1xf32>
    %582 = arith.mulf %427, %465 : vector<16x1xf32>
    %583 = arith.subf %581, %582 : vector<16x1xf32>
    %584 = arith.mulf %456, %459 : vector<16x1xf32>
    %585 = arith.addf %583, %584 : vector<16x1xf32>
    %586 = arith.mulf %585, %445 : vector<16x1xf32>
    %587 = arith.addf %580, %586 : vector<16x1xf32>
    %cst_72 = arith.constant 0.000000e+00 : f32
    %588 = vector.broadcast %cst_72 : f32 to vector<16x1xf32>
    %589 = arith.subf %588, %415 : vector<16x1xf32>
    %590 = arith.mulf %589, %471 : vector<16x1xf32>
    %591 = arith.mulf %424, %465 : vector<16x1xf32>
    %592 = arith.addf %590, %591 : vector<16x1xf32>
    %593 = arith.mulf %433, %459 : vector<16x1xf32>
    %594 = arith.subf %592, %593 : vector<16x1xf32>
    %595 = arith.mulf %594, %448 : vector<16x1xf32>
    %596 = arith.addf %587, %595 : vector<16x1xf32>
    %597 = arith.mulf %596, %501 : vector<16x1xf32>
    %cst_73 = arith.constant 0.000000e+00 : f32
    %598 = vector.broadcast %cst_73 : f32 to vector<16x1xf32>
    %599 = arith.subf %598, %412 : vector<16x1xf32>
    %600 = arith.mulf %599, %483 : vector<16x1xf32>
    %601 = arith.mulf %452, %489 : vector<16x1xf32>
    %602 = arith.addf %600, %601 : vector<16x1xf32>
    %603 = arith.mulf %424, %474 : vector<16x1xf32>
    %604 = arith.subf %602, %603 : vector<16x1xf32>
    %605 = arith.mulf %604, %439 : vector<16x1xf32>
    %606 = arith.mulf %450, %483 : vector<16x1xf32>
    %607 = arith.mulf %412, %489 : vector<16x1xf32>
    %608 = arith.subf %606, %607 : vector<16x1xf32>
    %609 = arith.mulf %415, %474 : vector<16x1xf32>
    %610 = arith.addf %608, %609 : vector<16x1xf32>
    %611 = arith.mulf %610, %442 : vector<16x1xf32>
    %612 = arith.addf %605, %611 : vector<16x1xf32>
    %cst_74 = arith.constant 0.000000e+00 : f32
    %613 = vector.broadcast %cst_74 : f32 to vector<16x1xf32>
    %614 = arith.subf %613, %418 : vector<16x1xf32>
    %615 = arith.mulf %614, %468 : vector<16x1xf32>
    %616 = arith.mulf %427, %462 : vector<16x1xf32>
    %617 = arith.addf %615, %616 : vector<16x1xf32>
    %618 = arith.mulf %433, %459 : vector<16x1xf32>
    %619 = arith.subf %617, %618 : vector<16x1xf32>
    %620 = arith.mulf %619, %445 : vector<16x1xf32>
    %621 = arith.addf %612, %620 : vector<16x1xf32>
    %622 = arith.mulf %415, %468 : vector<16x1xf32>
    %623 = arith.mulf %424, %462 : vector<16x1xf32>
    %624 = arith.subf %622, %623 : vector<16x1xf32>
    %625 = arith.mulf %454, %459 : vector<16x1xf32>
    %626 = arith.addf %624, %625 : vector<16x1xf32>
    %627 = arith.mulf %626, %448 : vector<16x1xf32>
    %628 = arith.addf %621, %627 : vector<16x1xf32>
    %629 = arith.mulf %628, %501 : vector<16x1xf32>
    %630 = vector.broadcast %533 : vector<16x1xf32> to vector<16x128xf32>
    %631 = arith.mulf %630, %394 : vector<16x128xf32>
    %632 = vector.broadcast %565 : vector<16x1xf32> to vector<16x128xf32>
    %633 = arith.mulf %632, %398 : vector<16x128xf32>
    %634 = arith.addf %631, %633 : vector<16x128xf32>
    %635 = vector.broadcast %597 : vector<16x1xf32> to vector<16x128xf32>
    %636 = arith.mulf %635, %402 : vector<16x128xf32>
    %637 = arith.addf %634, %636 : vector<16x128xf32>
    %638 = vector.broadcast %629 : vector<16x1xf32> to vector<16x128xf32>
    %639 = arith.mulf %638, %406 : vector<16x128xf32>
    %640 = arith.addf %637, %639 : vector<16x128xf32>
    %641 = arith.subf %640, %0 : vector<16x128xf32>
    %642 = vector.broadcast %4 : vector<1x128xf32> to vector<16x128xf32>
    %643 = arith.mulf %641, %642 : vector<16x128xf32>
    %644 = arith.mulf %643, %394 : vector<16x128xf32>
    %cst_75 = arith.constant dense<0.000000e+00> : vector<16xf32>
    %645 = vector.multi_reduction <add>, %644, %cst_75 [1] : vector<16x128xf32> to vector<16xf32>
    %646 = vector.shape_cast %645 : vector<16xf32> to vector<16x1xf32>
    %647 = arith.mulf %533, %646 : vector<16x1xf32>
    %648 = arith.mulf %643, %398 : vector<16x128xf32>
    %cst_76 = arith.constant dense<0.000000e+00> : vector<16xf32>
    %649 = vector.multi_reduction <add>, %648, %cst_76 [1] : vector<16x128xf32> to vector<16xf32>
    %650 = vector.shape_cast %649 : vector<16xf32> to vector<16x1xf32>
    %651 = arith.mulf %565, %650 : vector<16x1xf32>
    %652 = arith.mulf %643, %402 : vector<16x128xf32>
    %cst_77 = arith.constant dense<0.000000e+00> : vector<16xf32>
    %653 = vector.multi_reduction <add>, %652, %cst_77 [1] : vector<16x128xf32> to vector<16xf32>
    %654 = vector.shape_cast %653 : vector<16xf32> to vector<16x1xf32>
    %655 = arith.mulf %597, %654 : vector<16x1xf32>
    %656 = arith.mulf %643, %406 : vector<16x128xf32>
    %cst_78 = arith.constant dense<0.000000e+00> : vector<16xf32>
    %657 = vector.multi_reduction <add>, %656, %cst_78 [1] : vector<16x128xf32> to vector<16xf32>
    %658 = vector.shape_cast %657 : vector<16xf32> to vector<16x1xf32>
    %659 = arith.mulf %629, %658 : vector<16x1xf32>
    %660 = arith.mulf %647, %647 : vector<16x1xf32>
    %661 = arith.mulf %651, %651 : vector<16x1xf32>
    %662 = arith.addf %660, %661 : vector<16x1xf32>
    %663 = arith.mulf %655, %655 : vector<16x1xf32>
    %664 = arith.addf %662, %663 : vector<16x1xf32>
    %665 = arith.mulf %659, %659 : vector<16x1xf32>
    %666 = arith.addf %664, %665 : vector<16x1xf32>
    %cst_79 = arith.constant 1.000000e+00 : f32
    %667 = vector.broadcast %cst_79 : f32 to vector<16x1xf32>
    %668 = arith.cmpf olt, %666, %667 : vector<16x1xf32>
    %cst_80 = arith.constant 1.000000e-30 : f32
    %669 = vector.broadcast %cst_80 : f32 to vector<16x1xf32>
    %670 = arith.maximumf %666, %669 : vector<16x1xf32>
    %671 = math.rsqrt %670 : vector<16x1xf32>
    %cst_81 = arith.constant 1.000000e-03 : f32
    %672 = vector.broadcast %cst_81 : f32 to vector<16x1xf32>
    %673 = arith.mulf %672, %671 : vector<16x1xf32>
    %cst_82 = arith.constant 1.000000e-03 : f32
    %674 = vector.broadcast %cst_82 : f32 to vector<16x1xf32>
    %675 = arith.select %668, %674, %673 : vector<16x1xi1>, vector<16x1xf32>
    %676 = arith.mulf %647, %675 : vector<16x1xf32>
    %677 = arith.addf %330, %676 : vector<16x1xf32>
    %678 = arith.mulf %651, %675 : vector<16x1xf32>
    %679 = arith.addf %350, %678 : vector<16x1xf32>
    %680 = arith.mulf %655, %675 : vector<16x1xf32>
    %681 = arith.addf %370, %680 : vector<16x1xf32>
    %682 = arith.mulf %659, %675 : vector<16x1xf32>
    %683 = arith.addf %390, %682 : vector<16x1xf32>
    %c16 = arith.constant 16 : index
    %684 = memref.load %arg2[%c16] : memref<48xf32, #tpu.memory_space<smem>>
    %685 = vector.broadcast %684 : f32 to vector<16x1xf32>
    %686 = arith.mulf %685, %677 : vector<16x1xf32>
    %c17 = arith.constant 17 : index
    %687 = memref.load %arg2[%c17] : memref<48xf32, #tpu.memory_space<smem>>
    %688 = vector.broadcast %687 : f32 to vector<16x1xf32>
    %689 = arith.mulf %688, %679 : vector<16x1xf32>
    %690 = arith.addf %686, %689 : vector<16x1xf32>
    %c18 = arith.constant 18 : index
    %691 = memref.load %arg2[%c18] : memref<48xf32, #tpu.memory_space<smem>>
    %692 = vector.broadcast %691 : f32 to vector<16x1xf32>
    %693 = arith.mulf %692, %681 : vector<16x1xf32>
    %694 = arith.addf %690, %693 : vector<16x1xf32>
    %c19 = arith.constant 19 : index
    %695 = memref.load %arg2[%c19] : memref<48xf32, #tpu.memory_space<smem>>
    %696 = vector.broadcast %695 : f32 to vector<16x1xf32>
    %697 = arith.mulf %696, %683 : vector<16x1xf32>
    %698 = arith.addf %694, %697 : vector<16x1xf32>
    %c4_83 = arith.constant 4 : index
    %699 = memref.load %arg3[%c4_83] : memref<12xf32, #tpu.memory_space<smem>>
    %700 = vector.broadcast %699 : f32 to vector<16x1xf32>
    %701 = arith.addf %698, %700 : vector<16x1xf32>
    %cst_84 = arith.constant 0.000000e+00 : f32
    %702 = vector.broadcast %cst_84 : f32 to vector<16x1xf32>
    %703 = arith.maximumf %701, %702 : vector<16x1xf32>
    %c20 = arith.constant 20 : index
    %704 = memref.load %arg2[%c20] : memref<48xf32, #tpu.memory_space<smem>>
    %705 = vector.broadcast %704 : f32 to vector<16x1xf32>
    %706 = arith.mulf %705, %677 : vector<16x1xf32>
    %c21 = arith.constant 21 : index
    %707 = memref.load %arg2[%c21] : memref<48xf32, #tpu.memory_space<smem>>
    %708 = vector.broadcast %707 : f32 to vector<16x1xf32>
    %709 = arith.mulf %708, %679 : vector<16x1xf32>
    %710 = arith.addf %706, %709 : vector<16x1xf32>
    %c22 = arith.constant 22 : index
    %711 = memref.load %arg2[%c22] : memref<48xf32, #tpu.memory_space<smem>>
    %712 = vector.broadcast %711 : f32 to vector<16x1xf32>
    %713 = arith.mulf %712, %681 : vector<16x1xf32>
    %714 = arith.addf %710, %713 : vector<16x1xf32>
    %c23 = arith.constant 23 : index
    %715 = memref.load %arg2[%c23] : memref<48xf32, #tpu.memory_space<smem>>
    %716 = vector.broadcast %715 : f32 to vector<16x1xf32>
    %717 = arith.mulf %716, %683 : vector<16x1xf32>
    %718 = arith.addf %714, %717 : vector<16x1xf32>
    %c5_85 = arith.constant 5 : index
    %719 = memref.load %arg3[%c5_85] : memref<12xf32, #tpu.memory_space<smem>>
    %720 = vector.broadcast %719 : f32 to vector<16x1xf32>
    %721 = arith.addf %718, %720 : vector<16x1xf32>
    %cst_86 = arith.constant 0.000000e+00 : f32
    %722 = vector.broadcast %cst_86 : f32 to vector<16x1xf32>
    %723 = arith.maximumf %721, %722 : vector<16x1xf32>
    %c24 = arith.constant 24 : index
    %724 = memref.load %arg2[%c24] : memref<48xf32, #tpu.memory_space<smem>>
    %725 = vector.broadcast %724 : f32 to vector<16x1xf32>
    %726 = arith.mulf %725, %677 : vector<16x1xf32>
    %c25 = arith.constant 25 : index
    %727 = memref.load %arg2[%c25] : memref<48xf32, #tpu.memory_space<smem>>
    %728 = vector.broadcast %727 : f32 to vector<16x1xf32>
    %729 = arith.mulf %728, %679 : vector<16x1xf32>
    %730 = arith.addf %726, %729 : vector<16x1xf32>
    %c26 = arith.constant 26 : index
    %731 = memref.load %arg2[%c26] : memref<48xf32, #tpu.memory_space<smem>>
    %732 = vector.broadcast %731 : f32 to vector<16x1xf32>
    %733 = arith.mulf %732, %681 : vector<16x1xf32>
    %734 = arith.addf %730, %733 : vector<16x1xf32>
    %c27 = arith.constant 27 : index
    %735 = memref.load %arg2[%c27] : memref<48xf32, #tpu.memory_space<smem>>
    %736 = vector.broadcast %735 : f32 to vector<16x1xf32>
    %737 = arith.mulf %736, %683 : vector<16x1xf32>
    %738 = arith.addf %734, %737 : vector<16x1xf32>
    %c6_87 = arith.constant 6 : index
    %739 = memref.load %arg3[%c6_87] : memref<12xf32, #tpu.memory_space<smem>>
    %740 = vector.broadcast %739 : f32 to vector<16x1xf32>
    %741 = arith.addf %738, %740 : vector<16x1xf32>
    %cst_88 = arith.constant 0.000000e+00 : f32
    %742 = vector.broadcast %cst_88 : f32 to vector<16x1xf32>
    %743 = arith.maximumf %741, %742 : vector<16x1xf32>
    %c28 = arith.constant 28 : index
    %744 = memref.load %arg2[%c28] : memref<48xf32, #tpu.memory_space<smem>>
    %745 = vector.broadcast %744 : f32 to vector<16x1xf32>
    %746 = arith.mulf %745, %677 : vector<16x1xf32>
    %c29 = arith.constant 29 : index
    %747 = memref.load %arg2[%c29] : memref<48xf32, #tpu.memory_space<smem>>
    %748 = vector.broadcast %747 : f32 to vector<16x1xf32>
    %749 = arith.mulf %748, %679 : vector<16x1xf32>
    %750 = arith.addf %746, %749 : vector<16x1xf32>
    %c30 = arith.constant 30 : index
    %751 = memref.load %arg2[%c30] : memref<48xf32, #tpu.memory_space<smem>>
    %752 = vector.broadcast %751 : f32 to vector<16x1xf32>
    %753 = arith.mulf %752, %681 : vector<16x1xf32>
    %754 = arith.addf %750, %753 : vector<16x1xf32>
    %c31 = arith.constant 31 : index
    %755 = memref.load %arg2[%c31] : memref<48xf32, #tpu.memory_space<smem>>
    %756 = vector.broadcast %755 : f32 to vector<16x1xf32>
    %757 = arith.mulf %756, %683 : vector<16x1xf32>
    %758 = arith.addf %754, %757 : vector<16x1xf32>
    %c7_89 = arith.constant 7 : index
    %759 = memref.load %arg3[%c7_89] : memref<12xf32, #tpu.memory_space<smem>>
    %760 = vector.broadcast %759 : f32 to vector<16x1xf32>
    %761 = arith.addf %758, %760 : vector<16x1xf32>
    %cst_90 = arith.constant 0.000000e+00 : f32
    %762 = vector.broadcast %cst_90 : f32 to vector<16x1xf32>
    %763 = arith.maximumf %761, %762 : vector<16x1xf32>
    %764 = vector.broadcast %703 : vector<16x1xf32> to vector<16x128xf32>
    %765 = vector.broadcast %4 : vector<1x128xf32> to vector<16x128xf32>
    %766 = arith.mulf %764, %765 : vector<16x128xf32>
    %767 = math.exp %766 : vector<16x128xf32>
    %768 = vector.broadcast %723 : vector<16x1xf32> to vector<16x128xf32>
    %769 = vector.broadcast %4 : vector<1x128xf32> to vector<16x128xf32>
    %770 = arith.mulf %768, %769 : vector<16x128xf32>
    %771 = math.exp %770 : vector<16x128xf32>
    %772 = vector.broadcast %743 : vector<16x1xf32> to vector<16x128xf32>
    %773 = vector.broadcast %4 : vector<1x128xf32> to vector<16x128xf32>
    %774 = arith.mulf %772, %773 : vector<16x128xf32>
    %775 = math.exp %774 : vector<16x128xf32>
    %776 = vector.broadcast %763 : vector<16x1xf32> to vector<16x128xf32>
    %777 = vector.broadcast %4 : vector<1x128xf32> to vector<16x128xf32>
    %778 = arith.mulf %776, %777 : vector<16x128xf32>
    %779 = math.exp %778 : vector<16x128xf32>
    %780 = arith.mulf %767, %767 : vector<16x128xf32>
    %cst_91 = arith.constant dense<0.000000e+00> : vector<16xf32>
    %781 = vector.multi_reduction <add>, %780, %cst_91 [1] : vector<16x128xf32> to vector<16xf32>
    %782 = vector.shape_cast %781 : vector<16xf32> to vector<16x1xf32>
    %783 = arith.mulf %767, %771 : vector<16x128xf32>
    %cst_92 = arith.constant dense<0.000000e+00> : vector<16xf32>
    %784 = vector.multi_reduction <add>, %783, %cst_92 [1] : vector<16x128xf32> to vector<16xf32>
    %785 = vector.shape_cast %784 : vector<16xf32> to vector<16x1xf32>
    %786 = arith.mulf %767, %775 : vector<16x128xf32>
    %cst_93 = arith.constant dense<0.000000e+00> : vector<16xf32>
    %787 = vector.multi_reduction <add>, %786, %cst_93 [1] : vector<16x128xf32> to vector<16xf32>
    %788 = vector.shape_cast %787 : vector<16xf32> to vector<16x1xf32>
    %789 = arith.mulf %767, %779 : vector<16x128xf32>
    %cst_94 = arith.constant dense<0.000000e+00> : vector<16xf32>
    %790 = vector.multi_reduction <add>, %789, %cst_94 [1] : vector<16x128xf32> to vector<16xf32>
    %791 = vector.shape_cast %790 : vector<16xf32> to vector<16x1xf32>
    %792 = arith.mulf %771, %771 : vector<16x128xf32>
    %cst_95 = arith.constant dense<0.000000e+00> : vector<16xf32>
    %793 = vector.multi_reduction <add>, %792, %cst_95 [1] : vector<16x128xf32> to vector<16xf32>
    %794 = vector.shape_cast %793 : vector<16xf32> to vector<16x1xf32>
    %795 = arith.mulf %771, %775 : vector<16x128xf32>
    %cst_96 = arith.constant dense<0.000000e+00> : vector<16xf32>
    %796 = vector.multi_reduction <add>, %795, %cst_96 [1] : vector<16x128xf32> to vector<16xf32>
    %797 = vector.shape_cast %796 : vector<16xf32> to vector<16x1xf32>
    %798 = arith.mulf %771, %779 : vector<16x128xf32>
    %cst_97 = arith.constant dense<0.000000e+00> : vector<16xf32>
    %799 = vector.multi_reduction <add>, %798, %cst_97 [1] : vector<16x128xf32> to vector<16xf32>
    %800 = vector.shape_cast %799 : vector<16xf32> to vector<16x1xf32>
    %801 = arith.mulf %775, %775 : vector<16x128xf32>
    %cst_98 = arith.constant dense<0.000000e+00> : vector<16xf32>
    %802 = vector.multi_reduction <add>, %801, %cst_98 [1] : vector<16x128xf32> to vector<16xf32>
    %803 = vector.shape_cast %802 : vector<16xf32> to vector<16x1xf32>
    %804 = arith.mulf %775, %779 : vector<16x128xf32>
    %cst_99 = arith.constant dense<0.000000e+00> : vector<16xf32>
    %805 = vector.multi_reduction <add>, %804, %cst_99 [1] : vector<16x128xf32> to vector<16xf32>
    %806 = vector.shape_cast %805 : vector<16xf32> to vector<16x1xf32>
    %807 = arith.mulf %779, %779 : vector<16x128xf32>
    %cst_100 = arith.constant dense<0.000000e+00> : vector<16xf32>
    %808 = vector.multi_reduction <add>, %807, %cst_100 [1] : vector<16x128xf32> to vector<16xf32>
    %809 = vector.shape_cast %808 : vector<16xf32> to vector<16x1xf32>
    %810 = arith.mulf %767, %0 : vector<16x128xf32>
    %cst_101 = arith.constant dense<0.000000e+00> : vector<16xf32>
    %811 = vector.multi_reduction <add>, %810, %cst_101 [1] : vector<16x128xf32> to vector<16xf32>
    %812 = vector.shape_cast %811 : vector<16xf32> to vector<16x1xf32>
    %813 = arith.mulf %771, %0 : vector<16x128xf32>
    %cst_102 = arith.constant dense<0.000000e+00> : vector<16xf32>
    %814 = vector.multi_reduction <add>, %813, %cst_102 [1] : vector<16x128xf32> to vector<16xf32>
    %815 = vector.shape_cast %814 : vector<16xf32> to vector<16x1xf32>
    %816 = arith.mulf %775, %0 : vector<16x128xf32>
    %cst_103 = arith.constant dense<0.000000e+00> : vector<16xf32>
    %817 = vector.multi_reduction <add>, %816, %cst_103 [1] : vector<16x128xf32> to vector<16xf32>
    %818 = vector.shape_cast %817 : vector<16xf32> to vector<16x1xf32>
    %819 = arith.mulf %779, %0 : vector<16x128xf32>
    %cst_104 = arith.constant dense<0.000000e+00> : vector<16xf32>
    %820 = vector.multi_reduction <add>, %819, %cst_104 [1] : vector<16x128xf32> to vector<16xf32>
    %821 = vector.shape_cast %820 : vector<16xf32> to vector<16x1xf32>
    %cst_105 = arith.constant 1.000000e-03 : f32
    %822 = vector.broadcast %cst_105 : f32 to vector<16x1xf32>
    %823 = arith.addf %782, %822 : vector<16x1xf32>
    %cst_106 = arith.constant 1.000000e-03 : f32
    %824 = vector.broadcast %cst_106 : f32 to vector<16x1xf32>
    %825 = arith.addf %794, %824 : vector<16x1xf32>
    %cst_107 = arith.constant 1.000000e-03 : f32
    %826 = vector.broadcast %cst_107 : f32 to vector<16x1xf32>
    %827 = arith.addf %803, %826 : vector<16x1xf32>
    %cst_108 = arith.constant 1.000000e-03 : f32
    %828 = vector.broadcast %cst_108 : f32 to vector<16x1xf32>
    %829 = arith.addf %809, %828 : vector<16x1xf32>
    %830 = arith.mulf %823, %825 : vector<16x1xf32>
    %831 = arith.mulf %785, %785 : vector<16x1xf32>
    %832 = arith.subf %830, %831 : vector<16x1xf32>
    %833 = arith.mulf %823, %797 : vector<16x1xf32>
    %834 = arith.mulf %785, %788 : vector<16x1xf32>
    %835 = arith.subf %833, %834 : vector<16x1xf32>
    %836 = arith.mulf %823, %800 : vector<16x1xf32>
    %837 = arith.mulf %785, %791 : vector<16x1xf32>
    %838 = arith.subf %836, %837 : vector<16x1xf32>
    %839 = arith.mulf %785, %797 : vector<16x1xf32>
    %840 = arith.mulf %825, %788 : vector<16x1xf32>
    %841 = arith.subf %839, %840 : vector<16x1xf32>
    %842 = arith.mulf %785, %800 : vector<16x1xf32>
    %843 = arith.mulf %825, %791 : vector<16x1xf32>
    %844 = arith.subf %842, %843 : vector<16x1xf32>
    %845 = arith.mulf %788, %800 : vector<16x1xf32>
    %846 = arith.mulf %797, %791 : vector<16x1xf32>
    %847 = arith.subf %845, %846 : vector<16x1xf32>
    %848 = arith.mulf %827, %829 : vector<16x1xf32>
    %849 = arith.mulf %806, %806 : vector<16x1xf32>
    %850 = arith.subf %848, %849 : vector<16x1xf32>
    %851 = arith.mulf %797, %829 : vector<16x1xf32>
    %852 = arith.mulf %800, %806 : vector<16x1xf32>
    %853 = arith.subf %851, %852 : vector<16x1xf32>
    %854 = arith.mulf %797, %806 : vector<16x1xf32>
    %855 = arith.mulf %800, %827 : vector<16x1xf32>
    %856 = arith.subf %854, %855 : vector<16x1xf32>
    %857 = arith.mulf %788, %829 : vector<16x1xf32>
    %858 = arith.mulf %791, %806 : vector<16x1xf32>
    %859 = arith.subf %857, %858 : vector<16x1xf32>
    %860 = arith.mulf %788, %806 : vector<16x1xf32>
    %861 = arith.mulf %791, %827 : vector<16x1xf32>
    %862 = arith.subf %860, %861 : vector<16x1xf32>
    %863 = arith.mulf %832, %850 : vector<16x1xf32>
    %864 = arith.mulf %835, %853 : vector<16x1xf32>
    %865 = arith.subf %863, %864 : vector<16x1xf32>
    %866 = arith.mulf %838, %856 : vector<16x1xf32>
    %867 = arith.addf %865, %866 : vector<16x1xf32>
    %868 = arith.mulf %841, %859 : vector<16x1xf32>
    %869 = arith.addf %867, %868 : vector<16x1xf32>
    %870 = arith.mulf %844, %862 : vector<16x1xf32>
    %871 = arith.subf %869, %870 : vector<16x1xf32>
    %872 = arith.mulf %847, %847 : vector<16x1xf32>
    %873 = arith.addf %871, %872 : vector<16x1xf32>
    %874 = tpu.reciprocal %873 {approx = true} : vector<16x1xf32> -> vector<16x1xf32>
    %875 = arith.mulf %825, %850 : vector<16x1xf32>
    %876 = arith.mulf %797, %853 : vector<16x1xf32>
    %877 = arith.subf %875, %876 : vector<16x1xf32>
    %878 = arith.mulf %800, %856 : vector<16x1xf32>
    %879 = arith.addf %877, %878 : vector<16x1xf32>
    %880 = arith.mulf %879, %812 : vector<16x1xf32>
    %cst_109 = arith.constant 0.000000e+00 : f32
    %881 = vector.broadcast %cst_109 : f32 to vector<16x1xf32>
    %882 = arith.subf %881, %785 : vector<16x1xf32>
    %883 = arith.mulf %882, %850 : vector<16x1xf32>
    %884 = arith.mulf %788, %853 : vector<16x1xf32>
    %885 = arith.addf %883, %884 : vector<16x1xf32>
    %886 = arith.mulf %791, %856 : vector<16x1xf32>
    %887 = arith.subf %885, %886 : vector<16x1xf32>
    %888 = arith.mulf %887, %815 : vector<16x1xf32>
    %889 = arith.addf %880, %888 : vector<16x1xf32>
    %890 = arith.mulf %800, %847 : vector<16x1xf32>
    %891 = arith.mulf %806, %844 : vector<16x1xf32>
    %892 = arith.subf %890, %891 : vector<16x1xf32>
    %893 = arith.mulf %829, %841 : vector<16x1xf32>
    %894 = arith.addf %892, %893 : vector<16x1xf32>
    %895 = arith.mulf %894, %818 : vector<16x1xf32>
    %896 = arith.addf %889, %895 : vector<16x1xf32>
    %cst_110 = arith.constant 0.000000e+00 : f32
    %897 = vector.broadcast %cst_110 : f32 to vector<16x1xf32>
    %898 = arith.subf %897, %797 : vector<16x1xf32>
    %899 = arith.mulf %898, %847 : vector<16x1xf32>
    %900 = arith.mulf %827, %844 : vector<16x1xf32>
    %901 = arith.addf %899, %900 : vector<16x1xf32>
    %902 = arith.mulf %806, %841 : vector<16x1xf32>
    %903 = arith.subf %901, %902 : vector<16x1xf32>
    %904 = arith.mulf %903, %821 : vector<16x1xf32>
    %905 = arith.addf %896, %904 : vector<16x1xf32>
    %906 = arith.mulf %905, %874 : vector<16x1xf32>
    %cst_111 = arith.constant 0.000000e+00 : f32
    %907 = vector.broadcast %cst_111 : f32 to vector<16x1xf32>
    %908 = arith.subf %907, %785 : vector<16x1xf32>
    %909 = arith.mulf %908, %850 : vector<16x1xf32>
    %910 = arith.mulf %797, %859 : vector<16x1xf32>
    %911 = arith.addf %909, %910 : vector<16x1xf32>
    %912 = arith.mulf %800, %862 : vector<16x1xf32>
    %913 = arith.subf %911, %912 : vector<16x1xf32>
    %914 = arith.mulf %913, %812 : vector<16x1xf32>
    %915 = arith.mulf %823, %850 : vector<16x1xf32>
    %916 = arith.mulf %788, %859 : vector<16x1xf32>
    %917 = arith.subf %915, %916 : vector<16x1xf32>
    %918 = arith.mulf %791, %862 : vector<16x1xf32>
    %919 = arith.addf %917, %918 : vector<16x1xf32>
    %920 = arith.mulf %919, %815 : vector<16x1xf32>
    %921 = arith.addf %914, %920 : vector<16x1xf32>
    %cst_112 = arith.constant 0.000000e+00 : f32
    %922 = vector.broadcast %cst_112 : f32 to vector<16x1xf32>
    %923 = arith.subf %922, %791 : vector<16x1xf32>
    %924 = arith.mulf %923, %847 : vector<16x1xf32>
    %925 = arith.mulf %806, %838 : vector<16x1xf32>
    %926 = arith.addf %924, %925 : vector<16x1xf32>
    %927 = arith.mulf %829, %835 : vector<16x1xf32>
    %928 = arith.subf %926, %927 : vector<16x1xf32>
    %929 = arith.mulf %928, %818 : vector<16x1xf32>
    %930 = arith.addf %921, %929 : vector<16x1xf32>
    %931 = arith.mulf %788, %847 : vector<16x1xf32>
    %932 = arith.mulf %827, %838 : vector<16x1xf32>
    %933 = arith.subf %931, %932 : vector<16x1xf32>
    %934 = arith.mulf %806, %835 : vector<16x1xf32>
    %935 = arith.addf %933, %934 : vector<16x1xf32>
    %936 = arith.mulf %935, %821 : vector<16x1xf32>
    %937 = arith.addf %930, %936 : vector<16x1xf32>
    %938 = arith.mulf %937, %874 : vector<16x1xf32>
    %939 = arith.mulf %785, %853 : vector<16x1xf32>
    %940 = arith.mulf %825, %859 : vector<16x1xf32>
    %941 = arith.subf %939, %940 : vector<16x1xf32>
    %942 = arith.mulf %800, %847 : vector<16x1xf32>
    %943 = arith.addf %941, %942 : vector<16x1xf32>
    %944 = arith.mulf %943, %812 : vector<16x1xf32>
    %cst_113 = arith.constant 0.000000e+00 : f32
    %945 = vector.broadcast %cst_113 : f32 to vector<16x1xf32>
    %946 = arith.subf %945, %823 : vector<16x1xf32>
    %947 = arith.mulf %946, %853 : vector<16x1xf32>
    %948 = arith.mulf %785, %859 : vector<16x1xf32>
    %949 = arith.addf %947, %948 : vector<16x1xf32>
    %950 = arith.mulf %791, %847 : vector<16x1xf32>
    %951 = arith.subf %949, %950 : vector<16x1xf32>
    %952 = arith.mulf %951, %815 : vector<16x1xf32>
    %953 = arith.addf %944, %952 : vector<16x1xf32>
    %954 = arith.mulf %791, %844 : vector<16x1xf32>
    %955 = arith.mulf %800, %838 : vector<16x1xf32>
    %956 = arith.subf %954, %955 : vector<16x1xf32>
    %957 = arith.mulf %829, %832 : vector<16x1xf32>
    %958 = arith.addf %956, %957 : vector<16x1xf32>
    %959 = arith.mulf %958, %818 : vector<16x1xf32>
    %960 = arith.addf %953, %959 : vector<16x1xf32>
    %cst_114 = arith.constant 0.000000e+00 : f32
    %961 = vector.broadcast %cst_114 : f32 to vector<16x1xf32>
    %962 = arith.subf %961, %788 : vector<16x1xf32>
    %963 = arith.mulf %962, %844 : vector<16x1xf32>
    %964 = arith.mulf %797, %838 : vector<16x1xf32>
    %965 = arith.addf %963, %964 : vector<16x1xf32>
    %966 = arith.mulf %806, %832 : vector<16x1xf32>
    %967 = arith.subf %965, %966 : vector<16x1xf32>
    %968 = arith.mulf %967, %821 : vector<16x1xf32>
    %969 = arith.addf %960, %968 : vector<16x1xf32>
    %970 = arith.mulf %969, %874 : vector<16x1xf32>
    %cst_115 = arith.constant 0.000000e+00 : f32
    %971 = vector.broadcast %cst_115 : f32 to vector<16x1xf32>
    %972 = arith.subf %971, %785 : vector<16x1xf32>
    %973 = arith.mulf %972, %856 : vector<16x1xf32>
    %974 = arith.mulf %825, %862 : vector<16x1xf32>
    %975 = arith.addf %973, %974 : vector<16x1xf32>
    %976 = arith.mulf %797, %847 : vector<16x1xf32>
    %977 = arith.subf %975, %976 : vector<16x1xf32>
    %978 = arith.mulf %977, %812 : vector<16x1xf32>
    %979 = arith.mulf %823, %856 : vector<16x1xf32>
    %980 = arith.mulf %785, %862 : vector<16x1xf32>
    %981 = arith.subf %979, %980 : vector<16x1xf32>
    %982 = arith.mulf %788, %847 : vector<16x1xf32>
    %983 = arith.addf %981, %982 : vector<16x1xf32>
    %984 = arith.mulf %983, %815 : vector<16x1xf32>
    %985 = arith.addf %978, %984 : vector<16x1xf32>
    %cst_116 = arith.constant 0.000000e+00 : f32
    %986 = vector.broadcast %cst_116 : f32 to vector<16x1xf32>
    %987 = arith.subf %986, %791 : vector<16x1xf32>
    %988 = arith.mulf %987, %841 : vector<16x1xf32>
    %989 = arith.mulf %800, %835 : vector<16x1xf32>
    %990 = arith.addf %988, %989 : vector<16x1xf32>
    %991 = arith.mulf %806, %832 : vector<16x1xf32>
    %992 = arith.subf %990, %991 : vector<16x1xf32>
    %993 = arith.mulf %992, %818 : vector<16x1xf32>
    %994 = arith.addf %985, %993 : vector<16x1xf32>
    %995 = arith.mulf %788, %841 : vector<16x1xf32>
    %996 = arith.mulf %797, %835 : vector<16x1xf32>
    %997 = arith.subf %995, %996 : vector<16x1xf32>
    %998 = arith.mulf %827, %832 : vector<16x1xf32>
    %999 = arith.addf %997, %998 : vector<16x1xf32>
    %1000 = arith.mulf %999, %821 : vector<16x1xf32>
    %1001 = arith.addf %994, %1000 : vector<16x1xf32>
    %1002 = arith.mulf %1001, %874 : vector<16x1xf32>
    %1003 = vector.broadcast %906 : vector<16x1xf32> to vector<16x128xf32>
    %1004 = arith.mulf %1003, %767 : vector<16x128xf32>
    %1005 = vector.broadcast %938 : vector<16x1xf32> to vector<16x128xf32>
    %1006 = arith.mulf %1005, %771 : vector<16x128xf32>
    %1007 = arith.addf %1004, %1006 : vector<16x128xf32>
    %1008 = vector.broadcast %970 : vector<16x1xf32> to vector<16x128xf32>
    %1009 = arith.mulf %1008, %775 : vector<16x128xf32>
    %1010 = arith.addf %1007, %1009 : vector<16x128xf32>
    %1011 = vector.broadcast %1002 : vector<16x1xf32> to vector<16x128xf32>
    %1012 = arith.mulf %1011, %779 : vector<16x128xf32>
    %1013 = arith.addf %1010, %1012 : vector<16x128xf32>
    %1014 = arith.subf %1013, %0 : vector<16x128xf32>
    %1015 = vector.broadcast %4 : vector<1x128xf32> to vector<16x128xf32>
    %1016 = arith.mulf %1014, %1015 : vector<16x128xf32>
    %1017 = arith.mulf %1016, %767 : vector<16x128xf32>
    %cst_117 = arith.constant dense<0.000000e+00> : vector<16xf32>
    %1018 = vector.multi_reduction <add>, %1017, %cst_117 [1] : vector<16x128xf32> to vector<16xf32>
    %1019 = vector.shape_cast %1018 : vector<16xf32> to vector<16x1xf32>
    %1020 = arith.mulf %906, %1019 : vector<16x1xf32>
    %1021 = arith.mulf %1016, %771 : vector<16x128xf32>
    %cst_118 = arith.constant dense<0.000000e+00> : vector<16xf32>
    %1022 = vector.multi_reduction <add>, %1021, %cst_118 [1] : vector<16x128xf32> to vector<16xf32>
    %1023 = vector.shape_cast %1022 : vector<16xf32> to vector<16x1xf32>
    %1024 = arith.mulf %938, %1023 : vector<16x1xf32>
    %1025 = arith.mulf %1016, %775 : vector<16x128xf32>
    %cst_119 = arith.constant dense<0.000000e+00> : vector<16xf32>
    %1026 = vector.multi_reduction <add>, %1025, %cst_119 [1] : vector<16x128xf32> to vector<16xf32>
    %1027 = vector.shape_cast %1026 : vector<16xf32> to vector<16x1xf32>
    %1028 = arith.mulf %970, %1027 : vector<16x1xf32>
    %1029 = arith.mulf %1016, %779 : vector<16x128xf32>
    %cst_120 = arith.constant dense<0.000000e+00> : vector<16xf32>
    %1030 = vector.multi_reduction <add>, %1029, %cst_120 [1] : vector<16x128xf32> to vector<16xf32>
    %1031 = vector.shape_cast %1030 : vector<16xf32> to vector<16x1xf32>
    %1032 = arith.mulf %1002, %1031 : vector<16x1xf32>
    %1033 = arith.mulf %1020, %1020 : vector<16x1xf32>
    %1034 = arith.mulf %1024, %1024 : vector<16x1xf32>
    %1035 = arith.addf %1033, %1034 : vector<16x1xf32>
    %1036 = arith.mulf %1028, %1028 : vector<16x1xf32>
    %1037 = arith.addf %1035, %1036 : vector<16x1xf32>
    %1038 = arith.mulf %1032, %1032 : vector<16x1xf32>
    %1039 = arith.addf %1037, %1038 : vector<16x1xf32>
    %cst_121 = arith.constant 1.000000e+00 : f32
    %1040 = vector.broadcast %cst_121 : f32 to vector<16x1xf32>
    %1041 = arith.cmpf olt, %1039, %1040 : vector<16x1xf32>
    %cst_122 = arith.constant 1.000000e-30 : f32
    %1042 = vector.broadcast %cst_122 : f32 to vector<16x1xf32>
    %1043 = arith.maximumf %1039, %1042 : vector<16x1xf32>
    %1044 = math.rsqrt %1043 : vector<16x1xf32>
    %cst_123 = arith.constant 1.000000e-03 : f32
    %1045 = vector.broadcast %cst_123 : f32 to vector<16x1xf32>
    %1046 = arith.mulf %1045, %1044 : vector<16x1xf32>
    %cst_124 = arith.constant 1.000000e-03 : f32
    %1047 = vector.broadcast %cst_124 : f32 to vector<16x1xf32>
    %1048 = arith.select %1041, %1047, %1046 : vector<16x1xi1>, vector<16x1xf32>
    %1049 = arith.mulf %1020, %1048 : vector<16x1xf32>
    %1050 = arith.addf %703, %1049 : vector<16x1xf32>
    %1051 = arith.mulf %1024, %1048 : vector<16x1xf32>
    %1052 = arith.addf %723, %1051 : vector<16x1xf32>
    %1053 = arith.mulf %1028, %1048 : vector<16x1xf32>
    %1054 = arith.addf %743, %1053 : vector<16x1xf32>
    %1055 = arith.mulf %1032, %1048 : vector<16x1xf32>
    %1056 = arith.addf %763, %1055 : vector<16x1xf32>
    %c32 = arith.constant 32 : index
    %1057 = memref.load %arg2[%c32] : memref<48xf32, #tpu.memory_space<smem>>
    %1058 = vector.broadcast %1057 : f32 to vector<16x1xf32>
    %1059 = arith.mulf %1058, %1050 : vector<16x1xf32>
    %c33 = arith.constant 33 : index
    %1060 = memref.load %arg2[%c33] : memref<48xf32, #tpu.memory_space<smem>>
    %1061 = vector.broadcast %1060 : f32 to vector<16x1xf32>
    %1062 = arith.mulf %1061, %1052 : vector<16x1xf32>
    %1063 = arith.addf %1059, %1062 : vector<16x1xf32>
    %c34 = arith.constant 34 : index
    %1064 = memref.load %arg2[%c34] : memref<48xf32, #tpu.memory_space<smem>>
    %1065 = vector.broadcast %1064 : f32 to vector<16x1xf32>
    %1066 = arith.mulf %1065, %1054 : vector<16x1xf32>
    %1067 = arith.addf %1063, %1066 : vector<16x1xf32>
    %c35 = arith.constant 35 : index
    %1068 = memref.load %arg2[%c35] : memref<48xf32, #tpu.memory_space<smem>>
    %1069 = vector.broadcast %1068 : f32 to vector<16x1xf32>
    %1070 = arith.mulf %1069, %1056 : vector<16x1xf32>
    %1071 = arith.addf %1067, %1070 : vector<16x1xf32>
    %c8_125 = arith.constant 8 : index
    %1072 = memref.load %arg3[%c8_125] : memref<12xf32, #tpu.memory_space<smem>>
    %1073 = vector.broadcast %1072 : f32 to vector<16x1xf32>
    %1074 = arith.addf %1071, %1073 : vector<16x1xf32>
    %cst_126 = arith.constant 0.000000e+00 : f32
    %1075 = vector.broadcast %cst_126 : f32 to vector<16x1xf32>
    %1076 = arith.maximumf %1074, %1075 : vector<16x1xf32>
    %c36 = arith.constant 36 : index
    %1077 = memref.load %arg2[%c36] : memref<48xf32, #tpu.memory_space<smem>>
    %1078 = vector.broadcast %1077 : f32 to vector<16x1xf32>
    %1079 = arith.mulf %1078, %1050 : vector<16x1xf32>
    %c37 = arith.constant 37 : index
    %1080 = memref.load %arg2[%c37] : memref<48xf32, #tpu.memory_space<smem>>
    %1081 = vector.broadcast %1080 : f32 to vector<16x1xf32>
    %1082 = arith.mulf %1081, %1052 : vector<16x1xf32>
    %1083 = arith.addf %1079, %1082 : vector<16x1xf32>
    %c38 = arith.constant 38 : index
    %1084 = memref.load %arg2[%c38] : memref<48xf32, #tpu.memory_space<smem>>
    %1085 = vector.broadcast %1084 : f32 to vector<16x1xf32>
    %1086 = arith.mulf %1085, %1054 : vector<16x1xf32>
    %1087 = arith.addf %1083, %1086 : vector<16x1xf32>
    %c39 = arith.constant 39 : index
    %1088 = memref.load %arg2[%c39] : memref<48xf32, #tpu.memory_space<smem>>
    %1089 = vector.broadcast %1088 : f32 to vector<16x1xf32>
    %1090 = arith.mulf %1089, %1056 : vector<16x1xf32>
    %1091 = arith.addf %1087, %1090 : vector<16x1xf32>
    %c9_127 = arith.constant 9 : index
    %1092 = memref.load %arg3[%c9_127] : memref<12xf32, #tpu.memory_space<smem>>
    %1093 = vector.broadcast %1092 : f32 to vector<16x1xf32>
    %1094 = arith.addf %1091, %1093 : vector<16x1xf32>
    %cst_128 = arith.constant 0.000000e+00 : f32
    %1095 = vector.broadcast %cst_128 : f32 to vector<16x1xf32>
    %1096 = arith.maximumf %1094, %1095 : vector<16x1xf32>
    %c40 = arith.constant 40 : index
    %1097 = memref.load %arg2[%c40] : memref<48xf32, #tpu.memory_space<smem>>
    %1098 = vector.broadcast %1097 : f32 to vector<16x1xf32>
    %1099 = arith.mulf %1098, %1050 : vector<16x1xf32>
    %c41 = arith.constant 41 : index
    %1100 = memref.load %arg2[%c41] : memref<48xf32, #tpu.memory_space<smem>>
    %1101 = vector.broadcast %1100 : f32 to vector<16x1xf32>
    %1102 = arith.mulf %1101, %1052 : vector<16x1xf32>
    %1103 = arith.addf %1099, %1102 : vector<16x1xf32>
    %c42 = arith.constant 42 : index
    %1104 = memref.load %arg2[%c42] : memref<48xf32, #tpu.memory_space<smem>>
    %1105 = vector.broadcast %1104 : f32 to vector<16x1xf32>
    %1106 = arith.mulf %1105, %1054 : vector<16x1xf32>
    %1107 = arith.addf %1103, %1106 : vector<16x1xf32>
    %c43 = arith.constant 43 : index
    %1108 = memref.load %arg2[%c43] : memref<48xf32, #tpu.memory_space<smem>>
    %1109 = vector.broadcast %1108 : f32 to vector<16x1xf32>
    %1110 = arith.mulf %1109, %1056 : vector<16x1xf32>
    %1111 = arith.addf %1107, %1110 : vector<16x1xf32>
    %c10_129 = arith.constant 10 : index
    %1112 = memref.load %arg3[%c10_129] : memref<12xf32, #tpu.memory_space<smem>>
    %1113 = vector.broadcast %1112 : f32 to vector<16x1xf32>
    %1114 = arith.addf %1111, %1113 : vector<16x1xf32>
    %cst_130 = arith.constant 0.000000e+00 : f32
    %1115 = vector.broadcast %cst_130 : f32 to vector<16x1xf32>
    %1116 = arith.maximumf %1114, %1115 : vector<16x1xf32>
    %c44 = arith.constant 44 : index
    %1117 = memref.load %arg2[%c44] : memref<48xf32, #tpu.memory_space<smem>>
    %1118 = vector.broadcast %1117 : f32 to vector<16x1xf32>
    %1119 = arith.mulf %1118, %1050 : vector<16x1xf32>
    %c45 = arith.constant 45 : index
    %1120 = memref.load %arg2[%c45] : memref<48xf32, #tpu.memory_space<smem>>
    %1121 = vector.broadcast %1120 : f32 to vector<16x1xf32>
    %1122 = arith.mulf %1121, %1052 : vector<16x1xf32>
    %1123 = arith.addf %1119, %1122 : vector<16x1xf32>
    %c46 = arith.constant 46 : index
    %1124 = memref.load %arg2[%c46] : memref<48xf32, #tpu.memory_space<smem>>
    %1125 = vector.broadcast %1124 : f32 to vector<16x1xf32>
    %1126 = arith.mulf %1125, %1054 : vector<16x1xf32>
    %1127 = arith.addf %1123, %1126 : vector<16x1xf32>
    %c47 = arith.constant 47 : index
    %1128 = memref.load %arg2[%c47] : memref<48xf32, #tpu.memory_space<smem>>
    %1129 = vector.broadcast %1128 : f32 to vector<16x1xf32>
    %1130 = arith.mulf %1129, %1056 : vector<16x1xf32>
    %1131 = arith.addf %1127, %1130 : vector<16x1xf32>
    %c11_131 = arith.constant 11 : index
    %1132 = memref.load %arg3[%c11_131] : memref<12xf32, #tpu.memory_space<smem>>
    %1133 = vector.broadcast %1132 : f32 to vector<16x1xf32>
    %1134 = arith.addf %1131, %1133 : vector<16x1xf32>
    %cst_132 = arith.constant 0.000000e+00 : f32
    %1135 = vector.broadcast %cst_132 : f32 to vector<16x1xf32>
    %1136 = arith.maximumf %1134, %1135 : vector<16x1xf32>
    %1137 = vector.broadcast %1076 : vector<16x1xf32> to vector<16x128xf32>
    %1138 = vector.broadcast %4 : vector<1x128xf32> to vector<16x128xf32>
    %1139 = arith.mulf %1137, %1138 : vector<16x128xf32>
    %1140 = math.exp %1139 : vector<16x128xf32>
    %1141 = vector.broadcast %1096 : vector<16x1xf32> to vector<16x128xf32>
    %1142 = vector.broadcast %4 : vector<1x128xf32> to vector<16x128xf32>
    %1143 = arith.mulf %1141, %1142 : vector<16x128xf32>
    %1144 = math.exp %1143 : vector<16x128xf32>
    %1145 = vector.broadcast %1116 : vector<16x1xf32> to vector<16x128xf32>
    %1146 = vector.broadcast %4 : vector<1x128xf32> to vector<16x128xf32>
    %1147 = arith.mulf %1145, %1146 : vector<16x128xf32>
    %1148 = math.exp %1147 : vector<16x128xf32>
    %1149 = vector.broadcast %1136 : vector<16x1xf32> to vector<16x128xf32>
    %1150 = vector.broadcast %4 : vector<1x128xf32> to vector<16x128xf32>
    %1151 = arith.mulf %1149, %1150 : vector<16x128xf32>
    %1152 = math.exp %1151 : vector<16x128xf32>
    %1153 = arith.mulf %1140, %1140 : vector<16x128xf32>
    %cst_133 = arith.constant dense<0.000000e+00> : vector<16xf32>
    %1154 = vector.multi_reduction <add>, %1153, %cst_133 [1] : vector<16x128xf32> to vector<16xf32>
    %1155 = vector.shape_cast %1154 : vector<16xf32> to vector<16x1xf32>
    %1156 = arith.mulf %1140, %1144 : vector<16x128xf32>
    %cst_134 = arith.constant dense<0.000000e+00> : vector<16xf32>
    %1157 = vector.multi_reduction <add>, %1156, %cst_134 [1] : vector<16x128xf32> to vector<16xf32>
    %1158 = vector.shape_cast %1157 : vector<16xf32> to vector<16x1xf32>
    %1159 = arith.mulf %1140, %1148 : vector<16x128xf32>
    %cst_135 = arith.constant dense<0.000000e+00> : vector<16xf32>
    %1160 = vector.multi_reduction <add>, %1159, %cst_135 [1] : vector<16x128xf32> to vector<16xf32>
    %1161 = vector.shape_cast %1160 : vector<16xf32> to vector<16x1xf32>
    %1162 = arith.mulf %1140, %1152 : vector<16x128xf32>
    %cst_136 = arith.constant dense<0.000000e+00> : vector<16xf32>
    %1163 = vector.multi_reduction <add>, %1162, %cst_136 [1] : vector<16x128xf32> to vector<16xf32>
    %1164 = vector.shape_cast %1163 : vector<16xf32> to vector<16x1xf32>
    %1165 = arith.mulf %1144, %1144 : vector<16x128xf32>
    %cst_137 = arith.constant dense<0.000000e+00> : vector<16xf32>
    %1166 = vector.multi_reduction <add>, %1165, %cst_137 [1] : vector<16x128xf32> to vector<16xf32>
    %1167 = vector.shape_cast %1166 : vector<16xf32> to vector<16x1xf32>
    %1168 = arith.mulf %1144, %1148 : vector<16x128xf32>
    %cst_138 = arith.constant dense<0.000000e+00> : vector<16xf32>
    %1169 = vector.multi_reduction <add>, %1168, %cst_138 [1] : vector<16x128xf32> to vector<16xf32>
    %1170 = vector.shape_cast %1169 : vector<16xf32> to vector<16x1xf32>
    %1171 = arith.mulf %1144, %1152 : vector<16x128xf32>
    %cst_139 = arith.constant dense<0.000000e+00> : vector<16xf32>
    %1172 = vector.multi_reduction <add>, %1171, %cst_139 [1] : vector<16x128xf32> to vector<16xf32>
    %1173 = vector.shape_cast %1172 : vector<16xf32> to vector<16x1xf32>
    %1174 = arith.mulf %1148, %1148 : vector<16x128xf32>
    %cst_140 = arith.constant dense<0.000000e+00> : vector<16xf32>
    %1175 = vector.multi_reduction <add>, %1174, %cst_140 [1] : vector<16x128xf32> to vector<16xf32>
    %1176 = vector.shape_cast %1175 : vector<16xf32> to vector<16x1xf32>
    %1177 = arith.mulf %1148, %1152 : vector<16x128xf32>
    %cst_141 = arith.constant dense<0.000000e+00> : vector<16xf32>
    %1178 = vector.multi_reduction <add>, %1177, %cst_141 [1] : vector<16x128xf32> to vector<16xf32>
    %1179 = vector.shape_cast %1178 : vector<16xf32> to vector<16x1xf32>
    %1180 = arith.mulf %1152, %1152 : vector<16x128xf32>
    %cst_142 = arith.constant dense<0.000000e+00> : vector<16xf32>
    %1181 = vector.multi_reduction <add>, %1180, %cst_142 [1] : vector<16x128xf32> to vector<16xf32>
    %1182 = vector.shape_cast %1181 : vector<16xf32> to vector<16x1xf32>
    %1183 = arith.mulf %1140, %0 : vector<16x128xf32>
    %cst_143 = arith.constant dense<0.000000e+00> : vector<16xf32>
    %1184 = vector.multi_reduction <add>, %1183, %cst_143 [1] : vector<16x128xf32> to vector<16xf32>
    %1185 = vector.shape_cast %1184 : vector<16xf32> to vector<16x1xf32>
    %1186 = arith.mulf %1144, %0 : vector<16x128xf32>
    %cst_144 = arith.constant dense<0.000000e+00> : vector<16xf32>
    %1187 = vector.multi_reduction <add>, %1186, %cst_144 [1] : vector<16x128xf32> to vector<16xf32>
    %1188 = vector.shape_cast %1187 : vector<16xf32> to vector<16x1xf32>
    %1189 = arith.mulf %1148, %0 : vector<16x128xf32>
    %cst_145 = arith.constant dense<0.000000e+00> : vector<16xf32>
    %1190 = vector.multi_reduction <add>, %1189, %cst_145 [1] : vector<16x128xf32> to vector<16xf32>
    %1191 = vector.shape_cast %1190 : vector<16xf32> to vector<16x1xf32>
    %1192 = arith.mulf %1152, %0 : vector<16x128xf32>
    %cst_146 = arith.constant dense<0.000000e+00> : vector<16xf32>
    %1193 = vector.multi_reduction <add>, %1192, %cst_146 [1] : vector<16x128xf32> to vector<16xf32>
    %1194 = vector.shape_cast %1193 : vector<16xf32> to vector<16x1xf32>
    %1195 = arith.addf %1155, %1167 : vector<16x1xf32>
    %1196 = arith.addf %1195, %1176 : vector<16x1xf32>
    %1197 = arith.addf %1196, %1182 : vector<16x1xf32>
    %cst_147 = arith.constant 2.500000e-05 : f32
    %1198 = vector.broadcast %cst_147 : f32 to vector<16x1xf32>
    %1199 = arith.mulf %1198, %1197 : vector<16x1xf32>
    %1200 = arith.addf %1155, %1199 : vector<16x1xf32>
    %1201 = arith.addf %1167, %1199 : vector<16x1xf32>
    %1202 = arith.addf %1176, %1199 : vector<16x1xf32>
    %1203 = arith.addf %1182, %1199 : vector<16x1xf32>
    %1204 = arith.mulf %1200, %1201 : vector<16x1xf32>
    %1205 = arith.mulf %1158, %1158 : vector<16x1xf32>
    %1206 = arith.subf %1204, %1205 : vector<16x1xf32>
    %1207 = arith.mulf %1200, %1170 : vector<16x1xf32>
    %1208 = arith.mulf %1158, %1161 : vector<16x1xf32>
    %1209 = arith.subf %1207, %1208 : vector<16x1xf32>
    %1210 = arith.mulf %1200, %1173 : vector<16x1xf32>
    %1211 = arith.mulf %1158, %1164 : vector<16x1xf32>
    %1212 = arith.subf %1210, %1211 : vector<16x1xf32>
    %1213 = arith.mulf %1158, %1170 : vector<16x1xf32>
    %1214 = arith.mulf %1201, %1161 : vector<16x1xf32>
    %1215 = arith.subf %1213, %1214 : vector<16x1xf32>
    %1216 = arith.mulf %1158, %1173 : vector<16x1xf32>
    %1217 = arith.mulf %1201, %1164 : vector<16x1xf32>
    %1218 = arith.subf %1216, %1217 : vector<16x1xf32>
    %1219 = arith.mulf %1161, %1173 : vector<16x1xf32>
    %1220 = arith.mulf %1170, %1164 : vector<16x1xf32>
    %1221 = arith.subf %1219, %1220 : vector<16x1xf32>
    %1222 = arith.mulf %1202, %1203 : vector<16x1xf32>
    %1223 = arith.mulf %1179, %1179 : vector<16x1xf32>
    %1224 = arith.subf %1222, %1223 : vector<16x1xf32>
    %1225 = arith.mulf %1170, %1203 : vector<16x1xf32>
    %1226 = arith.mulf %1173, %1179 : vector<16x1xf32>
    %1227 = arith.subf %1225, %1226 : vector<16x1xf32>
    %1228 = arith.mulf %1170, %1179 : vector<16x1xf32>
    %1229 = arith.mulf %1173, %1202 : vector<16x1xf32>
    %1230 = arith.subf %1228, %1229 : vector<16x1xf32>
    %1231 = arith.mulf %1161, %1203 : vector<16x1xf32>
    %1232 = arith.mulf %1164, %1179 : vector<16x1xf32>
    %1233 = arith.subf %1231, %1232 : vector<16x1xf32>
    %1234 = arith.mulf %1161, %1179 : vector<16x1xf32>
    %1235 = arith.mulf %1164, %1202 : vector<16x1xf32>
    %1236 = arith.subf %1234, %1235 : vector<16x1xf32>
    %1237 = arith.mulf %1206, %1224 : vector<16x1xf32>
    %1238 = arith.mulf %1209, %1227 : vector<16x1xf32>
    %1239 = arith.subf %1237, %1238 : vector<16x1xf32>
    %1240 = arith.mulf %1212, %1230 : vector<16x1xf32>
    %1241 = arith.addf %1239, %1240 : vector<16x1xf32>
    %1242 = arith.mulf %1215, %1233 : vector<16x1xf32>
    %1243 = arith.addf %1241, %1242 : vector<16x1xf32>
    %1244 = arith.mulf %1218, %1236 : vector<16x1xf32>
    %1245 = arith.subf %1243, %1244 : vector<16x1xf32>
    %1246 = arith.mulf %1221, %1221 : vector<16x1xf32>
    %1247 = arith.addf %1245, %1246 : vector<16x1xf32>
    %cst_148 = arith.constant 1.000000e+00 : f32
    %1248 = vector.broadcast %cst_148 : f32 to vector<16x1xf32>
    %1249 = arith.divf %1248, %1247 : vector<16x1xf32>
    %1250 = arith.mulf %1201, %1224 : vector<16x1xf32>
    %1251 = arith.mulf %1170, %1227 : vector<16x1xf32>
    %1252 = arith.subf %1250, %1251 : vector<16x1xf32>
    %1253 = arith.mulf %1173, %1230 : vector<16x1xf32>
    %1254 = arith.addf %1252, %1253 : vector<16x1xf32>
    %1255 = arith.mulf %1254, %1185 : vector<16x1xf32>
    %cst_149 = arith.constant 0.000000e+00 : f32
    %1256 = vector.broadcast %cst_149 : f32 to vector<16x1xf32>
    %1257 = arith.subf %1256, %1158 : vector<16x1xf32>
    %1258 = arith.mulf %1257, %1224 : vector<16x1xf32>
    %1259 = arith.mulf %1161, %1227 : vector<16x1xf32>
    %1260 = arith.addf %1258, %1259 : vector<16x1xf32>
    %1261 = arith.mulf %1164, %1230 : vector<16x1xf32>
    %1262 = arith.subf %1260, %1261 : vector<16x1xf32>
    %1263 = arith.mulf %1262, %1188 : vector<16x1xf32>
    %1264 = arith.addf %1255, %1263 : vector<16x1xf32>
    %1265 = arith.mulf %1173, %1221 : vector<16x1xf32>
    %1266 = arith.mulf %1179, %1218 : vector<16x1xf32>
    %1267 = arith.subf %1265, %1266 : vector<16x1xf32>
    %1268 = arith.mulf %1203, %1215 : vector<16x1xf32>
    %1269 = arith.addf %1267, %1268 : vector<16x1xf32>
    %1270 = arith.mulf %1269, %1191 : vector<16x1xf32>
    %1271 = arith.addf %1264, %1270 : vector<16x1xf32>
    %cst_150 = arith.constant 0.000000e+00 : f32
    %1272 = vector.broadcast %cst_150 : f32 to vector<16x1xf32>
    %1273 = arith.subf %1272, %1170 : vector<16x1xf32>
    %1274 = arith.mulf %1273, %1221 : vector<16x1xf32>
    %1275 = arith.mulf %1202, %1218 : vector<16x1xf32>
    %1276 = arith.addf %1274, %1275 : vector<16x1xf32>
    %1277 = arith.mulf %1179, %1215 : vector<16x1xf32>
    %1278 = arith.subf %1276, %1277 : vector<16x1xf32>
    %1279 = arith.mulf %1278, %1194 : vector<16x1xf32>
    %1280 = arith.addf %1271, %1279 : vector<16x1xf32>
    %1281 = arith.mulf %1280, %1249 : vector<16x1xf32>
    %cst_151 = arith.constant 0.000000e+00 : f32
    %1282 = vector.broadcast %cst_151 : f32 to vector<16x1xf32>
    %1283 = arith.subf %1282, %1158 : vector<16x1xf32>
    %1284 = arith.mulf %1283, %1224 : vector<16x1xf32>
    %1285 = arith.mulf %1170, %1233 : vector<16x1xf32>
    %1286 = arith.addf %1284, %1285 : vector<16x1xf32>
    %1287 = arith.mulf %1173, %1236 : vector<16x1xf32>
    %1288 = arith.subf %1286, %1287 : vector<16x1xf32>
    %1289 = arith.mulf %1288, %1185 : vector<16x1xf32>
    %1290 = arith.mulf %1200, %1224 : vector<16x1xf32>
    %1291 = arith.mulf %1161, %1233 : vector<16x1xf32>
    %1292 = arith.subf %1290, %1291 : vector<16x1xf32>
    %1293 = arith.mulf %1164, %1236 : vector<16x1xf32>
    %1294 = arith.addf %1292, %1293 : vector<16x1xf32>
    %1295 = arith.mulf %1294, %1188 : vector<16x1xf32>
    %1296 = arith.addf %1289, %1295 : vector<16x1xf32>
    %cst_152 = arith.constant 0.000000e+00 : f32
    %1297 = vector.broadcast %cst_152 : f32 to vector<16x1xf32>
    %1298 = arith.subf %1297, %1164 : vector<16x1xf32>
    %1299 = arith.mulf %1298, %1221 : vector<16x1xf32>
    %1300 = arith.mulf %1179, %1212 : vector<16x1xf32>
    %1301 = arith.addf %1299, %1300 : vector<16x1xf32>
    %1302 = arith.mulf %1203, %1209 : vector<16x1xf32>
    %1303 = arith.subf %1301, %1302 : vector<16x1xf32>
    %1304 = arith.mulf %1303, %1191 : vector<16x1xf32>
    %1305 = arith.addf %1296, %1304 : vector<16x1xf32>
    %1306 = arith.mulf %1161, %1221 : vector<16x1xf32>
    %1307 = arith.mulf %1202, %1212 : vector<16x1xf32>
    %1308 = arith.subf %1306, %1307 : vector<16x1xf32>
    %1309 = arith.mulf %1179, %1209 : vector<16x1xf32>
    %1310 = arith.addf %1308, %1309 : vector<16x1xf32>
    %1311 = arith.mulf %1310, %1194 : vector<16x1xf32>
    %1312 = arith.addf %1305, %1311 : vector<16x1xf32>
    %1313 = arith.mulf %1312, %1249 : vector<16x1xf32>
    %1314 = arith.mulf %1158, %1227 : vector<16x1xf32>
    %1315 = arith.mulf %1201, %1233 : vector<16x1xf32>
    %1316 = arith.subf %1314, %1315 : vector<16x1xf32>
    %1317 = arith.mulf %1173, %1221 : vector<16x1xf32>
    %1318 = arith.addf %1316, %1317 : vector<16x1xf32>
    %1319 = arith.mulf %1318, %1185 : vector<16x1xf32>
    %cst_153 = arith.constant 0.000000e+00 : f32
    %1320 = vector.broadcast %cst_153 : f32 to vector<16x1xf32>
    %1321 = arith.subf %1320, %1200 : vector<16x1xf32>
    %1322 = arith.mulf %1321, %1227 : vector<16x1xf32>
    %1323 = arith.mulf %1158, %1233 : vector<16x1xf32>
    %1324 = arith.addf %1322, %1323 : vector<16x1xf32>
    %1325 = arith.mulf %1164, %1221 : vector<16x1xf32>
    %1326 = arith.subf %1324, %1325 : vector<16x1xf32>
    %1327 = arith.mulf %1326, %1188 : vector<16x1xf32>
    %1328 = arith.addf %1319, %1327 : vector<16x1xf32>
    %1329 = arith.mulf %1164, %1218 : vector<16x1xf32>
    %1330 = arith.mulf %1173, %1212 : vector<16x1xf32>
    %1331 = arith.subf %1329, %1330 : vector<16x1xf32>
    %1332 = arith.mulf %1203, %1206 : vector<16x1xf32>
    %1333 = arith.addf %1331, %1332 : vector<16x1xf32>
    %1334 = arith.mulf %1333, %1191 : vector<16x1xf32>
    %1335 = arith.addf %1328, %1334 : vector<16x1xf32>
    %cst_154 = arith.constant 0.000000e+00 : f32
    %1336 = vector.broadcast %cst_154 : f32 to vector<16x1xf32>
    %1337 = arith.subf %1336, %1161 : vector<16x1xf32>
    %1338 = arith.mulf %1337, %1218 : vector<16x1xf32>
    %1339 = arith.mulf %1170, %1212 : vector<16x1xf32>
    %1340 = arith.addf %1338, %1339 : vector<16x1xf32>
    %1341 = arith.mulf %1179, %1206 : vector<16x1xf32>
    %1342 = arith.subf %1340, %1341 : vector<16x1xf32>
    %1343 = arith.mulf %1342, %1194 : vector<16x1xf32>
    %1344 = arith.addf %1335, %1343 : vector<16x1xf32>
    %1345 = arith.mulf %1344, %1249 : vector<16x1xf32>
    %cst_155 = arith.constant 0.000000e+00 : f32
    %1346 = vector.broadcast %cst_155 : f32 to vector<16x1xf32>
    %1347 = arith.subf %1346, %1158 : vector<16x1xf32>
    %1348 = arith.mulf %1347, %1230 : vector<16x1xf32>
    %1349 = arith.mulf %1201, %1236 : vector<16x1xf32>
    %1350 = arith.addf %1348, %1349 : vector<16x1xf32>
    %1351 = arith.mulf %1170, %1221 : vector<16x1xf32>
    %1352 = arith.subf %1350, %1351 : vector<16x1xf32>
    %1353 = arith.mulf %1352, %1185 : vector<16x1xf32>
    %1354 = arith.mulf %1200, %1230 : vector<16x1xf32>
    %1355 = arith.mulf %1158, %1236 : vector<16x1xf32>
    %1356 = arith.subf %1354, %1355 : vector<16x1xf32>
    %1357 = arith.mulf %1161, %1221 : vector<16x1xf32>
    %1358 = arith.addf %1356, %1357 : vector<16x1xf32>
    %1359 = arith.mulf %1358, %1188 : vector<16x1xf32>
    %1360 = arith.addf %1353, %1359 : vector<16x1xf32>
    %cst_156 = arith.constant 0.000000e+00 : f32
    %1361 = vector.broadcast %cst_156 : f32 to vector<16x1xf32>
    %1362 = arith.subf %1361, %1164 : vector<16x1xf32>
    %1363 = arith.mulf %1362, %1215 : vector<16x1xf32>
    %1364 = arith.mulf %1173, %1209 : vector<16x1xf32>
    %1365 = arith.addf %1363, %1364 : vector<16x1xf32>
    %1366 = arith.mulf %1179, %1206 : vector<16x1xf32>
    %1367 = arith.subf %1365, %1366 : vector<16x1xf32>
    %1368 = arith.mulf %1367, %1191 : vector<16x1xf32>
    %1369 = arith.addf %1360, %1368 : vector<16x1xf32>
    %1370 = arith.mulf %1161, %1215 : vector<16x1xf32>
    %1371 = arith.mulf %1170, %1209 : vector<16x1xf32>
    %1372 = arith.subf %1370, %1371 : vector<16x1xf32>
    %1373 = arith.mulf %1202, %1206 : vector<16x1xf32>
    %1374 = arith.addf %1372, %1373 : vector<16x1xf32>
    %1375 = arith.mulf %1374, %1194 : vector<16x1xf32>
    %1376 = arith.addf %1369, %1375 : vector<16x1xf32>
    %1377 = arith.mulf %1376, %1249 : vector<16x1xf32>
    %1378 = vector.broadcast %1281 : vector<16x1xf32> to vector<16x128xf32>
    %1379 = arith.mulf %1378, %1140 : vector<16x128xf32>
    %1380 = vector.broadcast %1313 : vector<16x1xf32> to vector<16x128xf32>
    %1381 = arith.mulf %1380, %1144 : vector<16x128xf32>
    %1382 = arith.addf %1379, %1381 : vector<16x128xf32>
    %1383 = vector.broadcast %1345 : vector<16x1xf32> to vector<16x128xf32>
    %1384 = arith.mulf %1383, %1148 : vector<16x128xf32>
    %1385 = arith.addf %1382, %1384 : vector<16x128xf32>
    %1386 = vector.broadcast %1377 : vector<16x1xf32> to vector<16x128xf32>
    %1387 = arith.mulf %1386, %1152 : vector<16x128xf32>
    %1388 = arith.addf %1385, %1387 : vector<16x128xf32>
    %c0_157 = arith.constant 0 : index
    %c0_158 = arith.constant 0 : index
    %1389 = vector.load %arg5[%c0_157, %c0_158] : memref<16x128xf32, #tpu.memory_space<vmem>>, vector<16x128xf32>
    tpu.vector_store %arg5[%c0_157, %c0_158], %1388 {strides = array<i32>} : memref<16x128xf32, #tpu.memory_space<vmem>>, vector<16x128xf32>,
    %cst_159 = arith.constant 0.000000e+00 : f32
    %1390 = vector.broadcast %cst_159 : f32 to vector<16x128xf32>
    %c0_160 = arith.constant 0 : index
    %c0_161 = arith.constant 0 : index
    %1391 = vector.load %arg6[%c0_160, %c0_161] : memref<16x128xf32, #tpu.memory_space<vmem>>, vector<16x128xf32>
    tpu.vector_store %arg6[%c0_160, %c0_161], %1390 {strides = array<i32>} : memref<16x128xf32, #tpu.memory_space<vmem>>, vector<16x128xf32>,
    %c0_162 = arith.constant 0 : index
    %c0_163 = arith.constant 0 : index
    %1392 = vector.load %arg6[%c0_162, %c0_163] : memref<16x128xf32, #tpu.memory_space<vmem>>, vector<16x1xf32>
    tpu.vector_store %arg6[%c0_162, %c0_163], %1076 {strides = array<i32>} : memref<16x128xf32, #tpu.memory_space<vmem>>, vector<16x1xf32>,
    %c0_164 = arith.constant 0 : index
    %c1_165 = arith.constant 1 : index
    %1393 = vector.load %arg6[%c0_164, %c1_165] : memref<16x128xf32, #tpu.memory_space<vmem>>, vector<16x1xf32>
    tpu.vector_store %arg6[%c0_164, %c1_165], %1096 {strides = array<i32>} : memref<16x128xf32, #tpu.memory_space<vmem>>, vector<16x1xf32>,
    %c0_166 = arith.constant 0 : index
    %c2_167 = arith.constant 2 : index
    %1394 = vector.load %arg6[%c0_166, %c2_167] : memref<16x128xf32, #tpu.memory_space<vmem>>, vector<16x1xf32>
    tpu.vector_store %arg6[%c0_166, %c2_167], %1116 {strides = array<i32>} : memref<16x128xf32, #tpu.memory_space<vmem>>, vector<16x1xf32>,
    %c0_168 = arith.constant 0 : index
    %c3_169 = arith.constant 3 : index
    %1395 = vector.load %arg6[%c0_168, %c3_169] : memref<16x128xf32, #tpu.memory_space<vmem>>, vector<16x1xf32>
    tpu.vector_store %arg6[%c0_168, %c3_169], %1136 {strides = array<i32>} : memref<16x128xf32, #tpu.memory_space<vmem>>, vector<16x1xf32>,
    return
  }
  func.func @transform_0(%arg0: i32, %arg1: memref<4xf32, #tpu.memory_space<smem>>, %arg2: memref<48xf32, #tpu.memory_space<smem>>, %arg3: memref<12xf32, #tpu.memory_space<smem>>) -> (i32, i32) {
    %c0_i32 = arith.constant 0 : i32
    %c0_i32_0 = arith.constant 0 : i32
    return %arg0, %c0_i32 : i32, i32
  }
  func.func @transform_1(%arg0: i32, %arg1: memref<4xf32, #tpu.memory_space<smem>>, %arg2: memref<48xf32, #tpu.memory_space<smem>>, %arg3: memref<12xf32, #tpu.memory_space<smem>>) -> (i32, i32) {
    %c0_i32 = arith.constant 0 : i32
    %c0_i32_0 = arith.constant 0 : i32
    return %arg0, %c0_i32 : i32, i32
  }
  func.func @transform_2(%arg0: i32, %arg1: memref<4xf32, #tpu.memory_space<smem>>, %arg2: memref<48xf32, #tpu.memory_space<smem>>, %arg3: memref<12xf32, #tpu.memory_space<smem>>) -> (i32, i32) {
    %c0_i32 = arith.constant 0 : i32
    %c0_i32_0 = arith.constant 0 : i32
    return %arg0, %c0_i32 : i32, i32
  }
}

</mosaic_0001>

<llo_original>
// kernel: uvp_regressor.1
$region0: #{uvp_regressor.1}
  #allocation0 [shape = 'u32[]', space=smem, size = 0x4, offset = 0x4, fixed_abs, tag = 'smem constant byte address 0x4 - core index']
  #allocation1 [shape = 'u32[144,128]{1,0:T(1,128)}', space=vmem, size = 0x12000, scoped, tag = 'internal scratch']
  #allocation2 [shape = 's32[1]{0}', space=sflag, size = 0x4, scoped, tag = 'scoped memory for uvp_regressor.1']
  #allocation3 [shape = 'u8[512]{0}', space=smem, size = 0x200, scoped, tag = 'prefetched SMEM operand 0']
  #allocation4 [shape = 'u8[512]{0}', space=smem, size = 0x200, scoped, tag = 'prefetched SMEM operand 1']
  #allocation5 [shape = 'u8[512]{0}', space=smem, size = 0x200, scoped, tag = 'prefetched SMEM operand 2']
  %s0 = inlined_call_operand.vmem [shape: f32[4], index: 0, kind: input, shape index: {}]
  %s1 = inlined_call_operand.vmem [shape: f32[48], index: 1, kind: input, shape index: {}]
  %s2 = inlined_call_operand.vmem [shape: f32[12], index: 2, kind: input, shape index: {}]
  %s3 = inlined_call_operand.hbm [shape: f32[16,128], index: 3, kind: input, shape index: {}]
  %s4 = inlined_call_operand.hbm [shape: f32[16,128], index: 4, kind: output, shape index: {0}]
  %s5 = inlined_call_operand.vmem [shape: f32[16,128], index: 5, kind: output, shape index: {1}]
  %6 = xla_tuple %s4, %s5
  %s7 = sld [smem:[#allocation0]]
  $region26: #{uvp_regressor.1} parent=0
    _
  %s9 = ssub.s32 1, %s7
  %s10 = scalar_select 0, %s9, %s7
  %s11 = sshll.u32 %s0, 4
  %s12 = int_to_ptr.vmem [resolvable:$true] %s11
  %14 = dma.vmem_to_smem %s12, 16, [#allocation3], [#allocation2]
  %s15 = sshll.u32 %s1, 4
  %s16 = int_to_ptr.vmem [resolvable:$true] %s15
  %18 = dma.vmem_to_smem %s16, 16, [#allocation4], [#allocation2]
  %s19 = sshll.u32 %s2, 4
  %s20 = int_to_ptr.vmem [resolvable:$true] %s19
  %22 = dma.vmem_to_smem %s20, 16, [#allocation5], [#allocation2]
  %23 = dma.done [#allocation2], 48
  %24 = sfence
  $region1: #{uvp_regressor.1} parent=0
    #allocation6 [shape = 'u8[8192]{0}', space=vmem, size = 0x2000, scoped, tag = 'input window, operand 3, single buffered']
    #allocation7 [shape = 's32[1]{0}', space=sflag, size = 0x4, scoped, tag = 'scoped memory for uvp_regressor.1']
    #allocation8 [shape = 's32[1]{0}', space=sflag, size = 0x4, scoped, tag = 'scoped memory for uvp_regressor.1']
    #allocation9 [shape = 'u8[8192]{0}', space=vmem, size = 0x2000, scoped, tag = 'output window, operand 0, single buffered']
    %25 = vsyncpa [#allocation7], 0
    %26 = vsyncpa [#allocation8], 0
    // Predicated region
    $region2: #{uvp_regressor.1} parent=1 // pred_check
      _
    $region3: #{uvp_regressor.1} parent=1 // pred_check_branch
      %28 = sbr.rel (0) target = $region5
    $region4: #{uvp_regressor.1} parent=1 // pred_region
      %s30 = ssub.s32 256, 256
      %31 = vsyncadd [#allocation7], %s30
      %s32 = sshll.u32 [#allocation6], 4
      %s33 = int_to_ptr.vmem [resolvable:$true] %s32
      %38 = dma.hbm_to_vmem [thread:$0]  %s3, 256, %s33, [#allocation7], 128, 128, 8
    $region5: #{uvp_regressor.1} parent=1 // pred_fallthru
      _
    // Predicated region
    $region6: #{uvp_regressor.1} parent=1 // pred_check
      _
    $region7: #{uvp_regressor.1} parent=1 // pred_check_branch
      %40 = sbr.rel (0) target = $region9
    $region8: #{uvp_regressor.1} parent=1 // pred_region
      %41 = dma.done [#allocation7], 256
    $region9: #{uvp_regressor.1} parent=1 // pred_fallthru
      _
    %v42 = vld [vmem:[#allocation6] sm:$0xff]
    %v43 = vld [vmem:[#allocation6 + $0x8] sm:$0xff]
    %v44 = vlaneseq
    %v45 = vand.u32 %v44, 127
    %v46 = vcvt.s32.f32 %v45
    %v47 = vmul.f32 %v46, -0.007874016
    %s48 = sld [smem:[#allocation3]]
    %v49 = vstv %s48
    %s50 = sld [smem:[#allocation3 + $0x1]]
    %v51 = vstv %s50
    %s52 = sld [smem:[#allocation3 + $0x2]]
    %v53 = vstv %s52
    %s54 = sld [smem:[#allocation3 + $0x3]]
    %v55 = vstv %s54
    %v56 = vmul.f32 %v49, %v47
    %v57 = vmul.f32 %v56, 1.442695
    %v58 = vpow.pop %v57
    %v59 = vmul.f32 %v51, %v47
    %v60 = vmul.f32 %v59, 1.442695
    %v61 = vpow.pop %v60
    %v62 = vmul.f32 %v53, %v47
    %v63 = vmul.f32 %v62, 1.442695
    %v64 = vpow.pop %v63
    %v65 = vmul.f32 %v55, %v47
    %v66 = vmul.f32 %v65, 1.442695
    %v67 = vpow.pop %v66
    %v68 = vmul.f32 %v58, %v58
    %69 = vadd.xlane.f32.xlu0 %v68
    %v70 = vpop.xlane.xlu0 %69
    %v71 = vmul.f32 %v58, %v61
    %72 = vadd.xlane.f32.xlu0 %v71
    %v73 = vpop.xlane.xlu0 %72
    %v74 = vmul.f32 %v58, %v64
    %75 = vadd.xlane.f32.xlu0 %v74
    %v76 = vpop.xlane.xlu0 %75
    %v77 = vmul.f32 %v58, %v67
    %78 = vadd.xlane.f32.xlu0 %v77
    %v79 = vpop.xlane.xlu0 %78
    %v80 = vmul.f32 %v61, %v61
    %81 = vadd.xlane.f32.xlu0 %v80
    %v82 = vpop.xlane.xlu0 %81
    %v83 = vmul.f32 %v61, %v64
    %84 = vadd.xlane.f32.xlu0 %v83
    %v85 = vpop.xlane.xlu0 %84
    %v86 = vmul.f32 %v61, %v67
    %87 = vadd.xlane.f32.xlu0 %v86
    %v88 = vpop.xlane.xlu0 %87
    %v89 = vmul.f32 %v64, %v64
    %90 = vadd.xlane.f32.xlu0 %v89
    %v91 = vpop.xlane.xlu0 %90
    %v92 = vmul.f32 %v64, %v67
    %93 = vadd.xlane.f32.xlu0 %v92
    %v94 = vpop.xlane.xlu0 %93
    %v95 = vmul.f32 %v67, %v67
    %96 = vadd.xlane.f32.xlu0 %v95
    %v97 = vpop.xlane.xlu0 %96
    %v98 = vmul.f32 %v58, %v42
    %v99 = vmul.f32 %v58, %v43
    %100 = vadd.xlane.f32.xlu0 %v98
    %v101 = vpop.xlane.xlu0 %100
    %102 = vadd.xlane.f32.xlu0 %v99
    %v103 = vpop.xlane.xlu0 %102
    %v104 = vmul.f32 %v61, %v42
    %v105 = vmul.f32 %v61, %v43
    %106 = vadd.xlane.f32.xlu0 %v104
    %v107 = vpop.xlane.xlu0 %106
    %108 = vadd.xlane.f32.xlu0 %v105
    %v109 = vpop.xlane.xlu0 %108
    %v110 = vmul.f32 %v64, %v42
    %v111 = vmul.f32 %v64, %v43
    %112 = vadd.xlane.f32.xlu0 %v110
    %v113 = vpop.xlane.xlu0 %112
    %114 = vadd.xlane.f32.xlu0 %v111
    %v115 = vpop.xlane.xlu0 %114
    %v116 = vmul.f32 %v67, %v42
    %v117 = vmul.f32 %v67, %v43
    %118 = vadd.xlane.f32.xlu0 %v116
    %v119 = vpop.xlane.xlu0 %118
    %120 = vadd.xlane.f32.xlu0 %v117
    %v121 = vpop.xlane.xlu0 %120
    %v122 = vadd.f32 %v70, 0.001
    %v123 = vadd.f32 %v82, 0.001
    %v124 = vadd.f32 %v91, 0.001
    %v125 = vadd.f32 %v97, 0.001
    %v126 = vmul.f32 %v122, %v123
    %v127 = vmul.f32 %v73, %v73
    %v128 = vsub.f32 %v126, %v127
    %v129 = vmul.f32 %v122, %v85
    %v130 = vmul.f32 %v73, %v76
    %v131 = vsub.f32 %v129, %v130
    %v132 = vmul.f32 %v122, %v88
    %v133 = vmul.f32 %v73, %v79
    %v134 = vsub.f32 %v132, %v133
    %v135 = vmul.f32 %v73, %v85
    %v136 = vmul.f32 %v123, %v76
    %v137 = vsub.f32 %v135, %v136
    %v138 = vmul.f32 %v73, %v88
    %v139 = vmul.f32 %v123, %v79
    %v140 = vsub.f32 %v138, %v139
    %v141 = vmul.f32 %v76, %v88
    %v142 = vmul.f32 %v85, %v79
    %v143 = vsub.f32 %v141, %v142
    %v144 = vmul.f32 %v124, %v125
    %v145 = vmul.f32 %v94, %v94
    %v146 = vsub.f32 %v144, %v145
    %v147 = vmul.f32 %v85, %v125
    %v148 = vmul.f32 %v88, %v94
    %v149 = vsub.f32 %v147, %v148
    %v150 = vmul.f32 %v85, %v94
    %v151 = vmul.f32 %v88, %v124
    %v152 = vsub.f32 %v150, %v151
    %v153 = vmul.f32 %v76, %v125
    %v154 = vmul.f32 %v79, %v94
    %v155 = vsub.f32 %v153, %v154
    %v156 = vmul.f32 %v76, %v94
    %v157 = vmul.f32 %v79, %v124
    %v158 = vsub.f32 %v156, %v157
    %v159 = vmul.f32 %v128, %v146
    %v160 = vmul.f32 %v131, %v149
    %v161 = vsub.f32 %v159, %v160
    %v162 = vmul.f32 %v134, %v152
    %v163 = vadd.f32 %v161, %v162
    %v164 = vmul.f32 %v137, %v155
    %v165 = vadd.f32 %v163, %v164
    %v166 = vmul.f32 %v140, %v158
    %v167 = vsub.f32 %v165, %v166
    %v168 = vmul.f32 %v143, %v143
    %v169 = vadd.f32 %v167, %v168
    %v170 = vrcp.pop %v169
    %v171 = vmul.f32 %v123, %v146
    %v172 = vmul.f32 %v85, %v149
    %v173 = vsub.f32 %v171, %v172
    %v174 = vmul.f32 %v88, %v152
    %v175 = vadd.f32 %v173, %v174
    %v176 = vmul.f32 %v175, %v101
    %v177 = vmul.f32 %v175, %v103
    %v178 = vsub.f32 0.0, %v73
    %v179 = vmul.f32 %v178, %v146
    %v180 = vmul.f32 %v76, %v149
    %v181 = vadd.f32 %v179, %v180
    %v182 = vmul.f32 %v79, %v152
    %v183 = vsub.f32 %v181, %v182
    %v184 = vmul.f32 %v183, %v107
    %v185 = vmul.f32 %v183, %v109
    %v186 = vadd.f32 %v176, %v184
    %v187 = vadd.f32 %v177, %v185
    %v188 = vmul.f32 %v88, %v143
    %v189 = vmul.f32 %v94, %v140
    %v190 = vsub.f32 %v188, %v189
    %v191 = vmul.f32 %v125, %v137
    %v192 = vadd.f32 %v190, %v191
    %v193 = vmul.f32 %v192, %v113
    %v194 = vmul.f32 %v192, %v115
    %v195 = vadd.f32 %v186, %v193
    %v196 = vadd.f32 %v187, %v194
    %v197 = vsub.f32 0.0, %v85
    %v198 = vmul.f32 %v197, %v143
    %v199 = vmul.f32 %v124, %v140
    %v200 = vadd.f32 %v198, %v199
    %v201 = vmul.f32 %v94, %v137
    %v202 = vsub.f32 %v200, %v201
    %v203 = vmul.f32 %v202, %v119
    %v204 = vmul.f32 %v202, %v121
    %v205 = vadd.f32 %v195, %v203
    %v206 = vadd.f32 %v196, %v204
    %v207 = vmul.f32 %v205, %v170
    %v208 = vmul.f32 %v206, %v170
    %v209 = vmul.f32 %v85, %v155
    %v210 = vadd.f32 %v179, %v209
    %v211 = vmul.f32 %v88, %v158
    %v212 = vsub.f32 %v210, %v211
    %v213 = vmul.f32 %v212, %v101
    %v214 = vmul.f32 %v212, %v103
    %v215 = vmul.f32 %v122, %v146
    %v216 = vmul.f32 %v76, %v155
    %v217 = vsub.f32 %v215, %v216
    %v218 = vmul.f32 %v79, %v158
    %v219 = vadd.f32 %v217, %v218
    %v220 = vmul.f32 %v219, %v107
    %v221 = vmul.f32 %v219, %v109
    %v222 = vadd.f32 %v213, %v220
    %v223 = vadd.f32 %v214, %v221
    %v224 = vsub.f32 0.0, %v79
    %v225 = vmul.f32 %v224, %v143
    %v226 = vmul.f32 %v94, %v134
    %v227 = vadd.f32 %v225, %v226
    %v228 = vmul.f32 %v125, %v131
    %v229 = vsub.f32 %v227, %v228
    %v230 = vmul.f32 %v229, %v113
    %v231 = vmul.f32 %v229, %v115
    %v232 = vadd.f32 %v222, %v230
    %v233 = vadd.f32 %v223, %v231
    %v234 = vmul.f32 %v76, %v143
    %v235 = vmul.f32 %v124, %v134
    %v236 = vsub.f32 %v234, %v235
    %v237 = vmul.f32 %v94, %v131
    %v238 = vadd.f32 %v236, %v237
    %v239 = vmul.f32 %v238, %v119
    %v240 = vmul.f32 %v238, %v121
    %v241 = vadd.f32 %v232, %v239
    %v242 = vadd.f32 %v233, %v240
    %v243 = vmul.f32 %v241, %v170
    %v244 = vmul.f32 %v242, %v170
    %v245 = vmul.f32 %v73, %v149
    %v246 = vmul.f32 %v123, %v155
    %v247 = vsub.f32 %v245, %v246
    %v248 = vadd.f32 %v247, %v188
    %v249 = vmul.f32 %v248, %v101
    %v250 = vmul.f32 %v248, %v103
    %v251 = vsub.f32 0.0, %v122
    %v252 = vmul.f32 %v251, %v149
    %v253 = vmul.f32 %v73, %v155
    %v254 = vadd.f32 %v252, %v253
    %v255 = vmul.f32 %v79, %v143
    %v256 = vsub.f32 %v254, %v255
    %v257 = vmul.f32 %v256, %v107
    %v258 = vmul.f32 %v256, %v109
    %v259 = vadd.f32 %v249, %v257
    %v260 = vadd.f32 %v250, %v258
    %v261 = vmul.f32 %v79, %v140
    %v262 = vmul.f32 %v88, %v134
    %v263 = vsub.f32 %v261, %v262
    %v264 = vmul.f32 %v125, %v128
    %v265 = vadd.f32 %v263, %v264
    %v266 = vmul.f32 %v265, %v113
    %v267 = vmul.f32 %v265, %v115
    %v268 = vadd.f32 %v259, %v266
    %v269 = vadd.f32 %v260, %v267
    %v270 = vsub.f32 0.0, %v76
    %v271 = vmul.f32 %v270, %v140
    %v272 = vmul.f32 %v85, %v134
    %v273 = vadd.f32 %v271, %v272
    %v274 = vmul.f32 %v94, %v128
    %v275 = vsub.f32 %v273, %v274
    %v276 = vmul.f32 %v275, %v119
    %v277 = vmul.f32 %v275, %v121
    %v278 = vadd.f32 %v268, %v276
    %v279 = vadd.f32 %v269, %v277
    %v280 = vmul.f32 %v278, %v170
    %v281 = vmul.f32 %v279, %v170
    %v282 = vmul.f32 %v178, %v152
    %v283 = vmul.f32 %v123, %v158
    %v284 = vadd.f32 %v282, %v283
    %v285 = vmul.f32 %v85, %v143
    %v286 = vsub.f32 %v284, %v285
    %v287 = vmul.f32 %v286, %v101
    %v288 = vmul.f32 %v286, %v103
    %v289 = vmul.f32 %v122, %v152
    %v290 = vmul.f32 %v73, %v158
    %v291 = vsub.f32 %v289, %v290
    %v292 = vadd.f32 %v291, %v234
    %v293 = vmul.f32 %v292, %v107
    %v294 = vmul.f32 %v292, %v109
    %v295 = vadd.f32 %v287, %v293
    %v296 = vadd.f32 %v288, %v294
    %v297 = vmul.f32 %v224, %v137
    %v298 = vmul.f32 %v88, %v131
    %v299 = vadd.f32 %v297, %v298
    %v300 = vsub.f32 %v299, %v274
    %v301 = vmul.f32 %v300, %v113
    %v302 = vmul.f32 %v300, %v115
    %v303 = vadd.f32 %v295, %v301
    %v304 = vadd.f32 %v296, %v302
    %v305 = vmul.f32 %v76, %v137
    %v306 = vmul.f32 %v85, %v131
    %v307 = vsub.f32 %v305, %v306
    %v308 = vmul.f32 %v124, %v128
    %v309 = vadd.f32 %v307, %v308
    %v310 = vmul.f32 %v309, %v119
    %v311 = vmul.f32 %v309, %v121
    %v312 = vadd.f32 %v303, %v310
    %v313 = vadd.f32 %v304, %v311
    %v314 = vmul.f32 %v312, %v170
    %v315 = vmul.f32 %v313, %v170
    %v316 = vmul.f32 %v207, %v58
    %v317 = vmul.f32 %v208, %v58
    %v318 = vmul.f32 %v243, %v61
    %v319 = vmul.f32 %v244, %v61
    %v320 = vadd.f32 %v316, %v318
    %v321 = vadd.f32 %v317, %v319
    %v322 = vmul.f32 %v280, %v64
    %v323 = vmul.f32 %v281, %v64
    %v324 = vadd.f32 %v320, %v322
    %v325 = vadd.f32 %v321, %v323
    %v326 = vmul.f32 %v314, %v67
    %v327 = vmul.f32 %v315, %v67
    %v328 = vadd.f32 %v324, %v326
    %v329 = vadd.f32 %v325, %v327
    %v330 = vsub.f32 %v328, %v42
    %v331 = vsub.f32 %v329, %v43
    %v332 = vmul.f32 %v330, %v47
    %v333 = vmul.f32 %v331, %v47
    %v334 = vmul.f32 %v332, %v58
    %v335 = vmul.f32 %v333, %v58
    %336 = vadd.xlane.f32.xlu0 %v334
    %v337 = vpop.xlane.xlu0 %336
    %338 = vadd.xlane.f32.xlu0 %v335
    %v339 = vpop.xlane.xlu0 %338
    %v340 = vmul.f32 %v207, %v337
    %v341 = vmul.f32 %v208, %v339
    %v342 = vmul.f32 %v332, %v61
    %v343 = vmul.f32 %v333, %v61
    %344 = vadd.xlane.f32.xlu0 %v342
    %v345 = vpop.xlane.xlu0 %344
    %346 = vadd.xlane.f32.xlu0 %v343
    %v347 = vpop.xlane.xlu0 %346
    %v348 = vmul.f32 %v243, %v345
    %v349 = vmul.f32 %v244, %v347
    %v350 = vmul.f32 %v332, %v64
    %v351 = vmul.f32 %v333, %v64
    %352 = vadd.xlane.f32.xlu0 %v350
    %v353 = vpop.xlane.xlu0 %352
    %354 = vadd.xlane.f32.xlu0 %v351
    %v355 = vpop.xlane.xlu0 %354
    %v356 = vmul.f32 %v280, %v353
    %v357 = vmul.f32 %v281, %v355
    %v358 = vmul.f32 %v332, %v67
    %v359 = vmul.f32 %v333, %v67
    %360 = vadd.xlane.f32.xlu0 %v358
    %v361 = vpop.xlane.xlu0 %360
    %362 = vadd.xlane.f32.xlu0 %v359
    %v363 = vpop.xlane.xlu0 %362
    %v364 = vmul.f32 %v314, %v361
    %v365 = vmul.f32 %v315, %v363
    %v366 = vmul.f32 %v340, %v340
    %v367 = vmul.f32 %v341, %v341
    %v368 = vmul.f32 %v348, %v348
    %v369 = vmul.f32 %v349, %v349
    %v370 = vadd.f32 %v366, %v368
    %v371 = vadd.f32 %v367, %v369
    %v372 = vmul.f32 %v356, %v356
    %v373 = vmul.f32 %v357, %v357
    %v374 = vadd.f32 %v370, %v372
    %v375 = vadd.f32 %v371, %v373
    %v376 = vmul.f32 %v364, %v364
    %v377 = vmul.f32 %v365, %v365
    %v378 = vadd.f32 %v374, %v376
    %v379 = vadd.f32 %v375, %v377
    %vm380 = vcmp.lt.f32.partialorder %v378, 1.0
    %vm381 = vcmp.lt.f32.partialorder %v379, 1.0
    %v382 = vmax.f32 %v378, 1e-30
    %v383 = vmax.f32 %v379, 1e-30
    %v384 = vrsqrt.pop %v382
    %v385 = vrsqrt.pop %v383
    %v386 = vmul.f32 %v384, 0.001
    %v387 = vmul.f32 %v385, 0.001
    %v388 = vsel %vm380, 0.001, %v386
    %v389 = vsel %vm381, 0.001, %v387
    %v390 = vmul.f32 %v340, %v388
    %v391 = vmul.f32 %v341, %v389
    %v392 = vadd.f32 %v49, %v390
    %v393 = vadd.f32 %v49, %v391
    %v394 = vmul.f32 %v348, %v388
    %v395 = vmul.f32 %v349, %v389
    %v396 = vadd.f32 %v51, %v394
    %v397 = vadd.f32 %v51, %v395
    %v398 = vmul.f32 %v356, %v388
    %v399 = vmul.f32 %v357, %v389
    %v400 = vadd.f32 %v53, %v398
    %v401 = vadd.f32 %v53, %v399
    %v402 = vmul.f32 %v364, %v388
    %v403 = vmul.f32 %v365, %v389
    %v404 = vadd.f32 %v55, %v402
    %v405 = vadd.f32 %v55, %v403
    %s406 = sld [smem:[#allocation4]]
    %v407 = vstv %s406
    %v408 = vmul.f32 %v407, %v392
    %v409 = vmul.f32 %v407, %v393
    %s410 = sld [smem:[#allocation4 + $0x1]]
    %v411 = vstv %s410
    %v412 = vmul.f32 %v411, %v396
    %v413 = vmul.f32 %v411, %v397
    %v414 = vadd.f32 %v408, %v412
    %v415 = vadd.f32 %v409, %v413
    %s416 = sld [smem:[#allocation4 + $0x2]]
    %v417 = vstv %s416
    %v418 = vmul.f32 %v417, %v400
    %v419 = vmul.f32 %v417, %v401
    %v420 = vadd.f32 %v414, %v418
    %v421 = vadd.f32 %v415, %v419
    %s422 = sld [smem:[#allocation4 + $0x3]]
    %v423 = vstv %s422
    %v424 = vmul.f32 %v423, %v404
    %v425 = vmul.f32 %v423, %v405
    %v426 = vadd.f32 %v420, %v424
    %v427 = vadd.f32 %v421, %v425
    %s428 = sld [smem:[#allocation5]]
    %v429 = vstv %s428
    %v430 = vadd.f32 %v426, %v429
    %v431 = vadd.f32 %v427, %v429
    %v432 = vmax.f32 %v430, 0.0
    %v433 = vmax.f32 %v431, 0.0
    %s434 = sld [smem:[#allocation4 + $0x4]]
    %v435 = vstv %s434
    %v436 = vmul.f32 %v435, %v392
    %v437 = vmul.f32 %v435, %v393
    %s438 = sld [smem:[#allocation4 + $0x5]]
    %v439 = vstv %s438
    %v440 = vmul.f32 %v439, %v396
    %v441 = vmul.f32 %v439, %v397
    %v442 = vadd.f32 %v436, %v440
    %v443 = vadd.f32 %v437, %v441
    %s444 = sld [smem:[#allocation4 + $0x6]]
    %v445 = vstv %s444
    %v446 = vmul.f32 %v445, %v400
    %v447 = vmul.f32 %v445, %v401
    %v448 = vadd.f32 %v442, %v446
    %v449 = vadd.f32 %v443, %v447
    %s450 = sld [smem:[#allocation4 + $0x7]]
    %v451 = vstv %s450
    %v452 = vmul.f32 %v451, %v404
    %v453 = vmul.f32 %v451, %v405
    %v454 = vadd.f32 %v448, %v452
    %v455 = vadd.f32 %v449, %v453
    %s456 = sld [smem:[#allocation5 + $0x1]]
    %v457 = vstv %s456
    %v458 = vadd.f32 %v454, %v457
    %v459 = vadd.f32 %v455, %v457
    %v460 = vmax.f32 %v458, 0.0
    %v461 = vmax.f32 %v459, 0.0
    %s462 = sld [smem:[#allocation4 + $0x8]]
    %v463 = vstv %s462
    %v464 = vmul.f32 %v463, %v392
    %v465 = vmul.f32 %v463, %v393
    %s466 = sld [smem:[#allocation4 + $0x9]]
    %v467 = vstv %s466
    %v468 = vmul.f32 %v467, %v396
    %v469 = vmul.f32 %v467, %v397
    %v470 = vadd.f32 %v464, %v468
    %v471 = vadd.f32 %v465, %v469
    %s472 = sld [smem:[#allocation4 + $0xa]]
    %v473 = vstv %s472
    %v474 = vmul.f32 %v473, %v400
    %v475 = vmul.f32 %v473, %v401
    %v476 = vadd.f32 %v470, %v474
    %v477 = vadd.f32 %v471, %v475
    %s478 = sld [smem:[#allocation4 + $0xb]]
    %v479 = vstv %s478
    %v480 = vmul.f32 %v479, %v404
    %v481 = vmul.f32 %v479, %v405
    %v482 = vadd.f32 %v476, %v480
    %v483 = vadd.f32 %v477, %v481
    %s484 = sld [smem:[#allocation5 + $0x2]]
    %v485 = vstv %s484
    %v486 = vadd.f32 %v482, %v485
    %v487 = vadd.f32 %v483, %v485
    %v488 = vmax.f32 %v486, 0.0
    %v489 = vmax.f32 %v487, 0.0
    %s490 = sld [smem:[#allocation4 + $0xc]]
    %v491 = vstv %s490
    %v492 = vmul.f32 %v491, %v392
    %v493 = vmul.f32 %v491, %v393
    %s494 = sld [smem:[#allocation4 + $0xd]]
    %v495 = vstv %s494
    %v496 = vmul.f32 %v495, %v396
    %v497 = vmul.f32 %v495, %v397
    %v498 = vadd.f32 %v492, %v496
    %v499 = vadd.f32 %v493, %v497
    %s500 = sld [smem:[#allocation4 + $0xe]]
    %v501 = vstv %s500
    %v502 = vmul.f32 %v501, %v400
    %v503 = vmul.f32 %v501, %v401
    %v504 = vadd.f32 %v498, %v502
    %v505 = vadd.f32 %v499, %v503
    %s506 = sld [smem:[#allocation4 + $0xf]]
    %v507 = vstv %s506
    %v508 = vmul.f32 %v507, %v404
    %v509 = vmul.f32 %v507, %v405
    %v510 = vadd.f32 %v504, %v508
    %v511 = vadd.f32 %v505, %v509
    %s512 = sld [smem:[#allocation5 + $0x3]]
    %v513 = vstv %s512
    %v514 = vadd.f32 %v510, %v513
    %v515 = vadd.f32 %v511, %v513
    %v516 = vmax.f32 %v514, 0.0
    %v517 = vmax.f32 %v515, 0.0
    %v518 = vmul.f32 %v432, %v47
    %v519 = vmul.f32 %v433, %v47
    %v520 = vmul.f32 %v518, 1.442695
    %v521 = vpow.pop %v520
    %v522 = vmul.f32 %v519, 1.442695
    %v523 = vpow.pop %v522
    %v524 = vmul.f32 %v460, %v47
    %v525 = vmul.f32 %v461, %v47
    %v526 = vmul.f32 %v524, 1.442695
    %v527 = vpow.pop %v526
    %v528 = vmul.f32 %v525, 1.442695
    %v529 = vpow.pop %v528
    %v530 = vmul.f32 %v488, %v47
    %v531 = vmul.f32 %v489, %v47
    %v532 = vmul.f32 %v530, 1.442695
    %v533 = vpow.pop %v532
    %v534 = vmul.f32 %v531, 1.442695
    %v535 = vpow.pop %v534
    %v536 = vmul.f32 %v516, %v47
    %v537 = vmul.f32 %v517, %v47
    %v538 = vmul.f32 %v536, 1.442695
    %v539 = vpow.pop %v538
    %v540 = vmul.f32 %v537, 1.442695
    %v541 = vpow.pop %v540
    %v542 = vmul.f32 %v521, %v521
    %v543 = vmul.f32 %v523, %v523
    %544 = vadd.xlane.f32.xlu0 %v542
    %v545 = vpop.xlane.xlu0 %544
    %546 = vadd.xlane.f32.xlu0 %v543
    %v547 = vpop.xlane.xlu0 %546
    %v548 = vmul.f32 %v521, %v527
    %v549 = vmul.f32 %v523, %v529
    %550 = vadd.xlane.f32.xlu0 %v548
    %v551 = vpop.xlane.xlu0 %550
    %552 = vadd.xlane.f32.xlu0 %v549
    %v553 = vpop.xlane.xlu0 %552
    %v554 = vmul.f32 %v521, %v533
    %v555 = vmul.f32 %v523, %v535
    %556 = vadd.xlane.f32.xlu0 %v554
    %v557 = vpop.xlane.xlu0 %556
    %558 = vadd.xlane.f32.xlu0 %v555
    %v559 = vpop.xlane.xlu0 %558
    %v560 = vmul.f32 %v521, %v539
    %v561 = vmul.f32 %v523, %v541
    %562 = vadd.xlane.f32.xlu0 %v560
    %v563 = vpop.xlane.xlu0 %562
    %564 = vadd.xlane.f32.xlu0 %v561
    %v565 = vpop.xlane.xlu0 %564
    %v566 = vmul.f32 %v527, %v527
    %v567 = vmul.f32 %v529, %v529
    %568 = vadd.xlane.f32.xlu0 %v566
    %v569 = vpop.xlane.xlu0 %568
    %570 = vadd.xlane.f32.xlu0 %v567
    %v571 = vpop.xlane.xlu0 %570
    %v572 = vmul.f32 %v527, %v533
    %v573 = vmul.f32 %v529, %v535
    %574 = vadd.xlane.f32.xlu0 %v572
    %v575 = vpop.xlane.xlu0 %574
    %576 = vadd.xlane.f32.xlu0 %v573
    %v577 = vpop.xlane.xlu0 %576
    %v578 = vmul.f32 %v527, %v539
    %v579 = vmul.f32 %v529, %v541
    %580 = vadd.xlane.f32.xlu0 %v578
    %v581 = vpop.xlane.xlu0 %580
    %582 = vadd.xlane.f32.xlu0 %v579
    %v583 = vpop.xlane.xlu0 %582
    %v584 = vmul.f32 %v533, %v533
    %v585 = vmul.f32 %v535, %v535
    %586 = vadd.xlane.f32.xlu0 %v584
    %v587 = vpop.xlane.xlu0 %586
    %588 = vadd.xlane.f32.xlu0 %v585
    %v589 = vpop.xlane.xlu0 %588
    %v590 = vmul.f32 %v533, %v539
    %v591 = vmul.f32 %v535, %v541
    %592 = vadd.xlane.f32.xlu0 %v590
    %v593 = vpop.xlane.xlu0 %592
    %594 = vadd.xlane.f32.xlu0 %v591
    %v595 = vpop.xlane.xlu0 %594
    %v596 = vmul.f32 %v539, %v539
    %v597 = vmul.f32 %v541, %v541
    %598 = vadd.xlane.f32.xlu0 %v596
    %v599 = vpop.xlane.xlu0 %598
    %600 = vadd.xlane.f32.xlu0 %v597
    %v601 = vpop.xlane.xlu0 %600
    %v602 = vmul.f32 %v521, %v42
    %v603 = vmul.f32 %v523, %v43
    %604 = vadd.xlane.f32.xlu0 %v602
    %v605 = vpop.xlane.xlu0 %604
    %606 = vadd.xlane.f32.xlu0 %v603
    %v607 = vpop.xlane.xlu0 %606
    %v608 = vmul.f32 %v527, %v42
    %v609 = vmul.f32 %v529, %v43
    %610 = vadd.xlane.f32.xlu0 %v608
    %v611 = vpop.xlane.xlu0 %610
    %612 = vadd.xlane.f32.xlu0 %v609
    %v613 = vpop.xlane.xlu0 %612
    %v614 = vmul.f32 %v533, %v42
    %v615 = vmul.f32 %v535, %v43
    %616 = vadd.xlane.f32.xlu0 %v614
    %v617 = vpop.xlane.xlu0 %616
    %618 = vadd.xlane.f32.xlu0 %v615
    %v619 = vpop.xlane.xlu0 %618
    %v620 = vmul.f32 %v539, %v42
    %v621 = vmul.f32 %v541, %v43
    %622 = vadd.xlane.f32.xlu0 %v620
    %v623 = vpop.xlane.xlu0 %622
    %624 = vadd.xlane.f32.xlu0 %v621
    %v625 = vpop.xlane.xlu0 %624
    %v626 = vadd.f32 %v545, 0.001
    %v627 = vadd.f32 %v547, 0.001
    %v628 = vadd.f32 %v569, 0.001
    %v629 = vadd.f32 %v571, 0.001
    %v630 = vadd.f32 %v587, 0.001
    %v631 = vadd.f32 %v589, 0.001
    %v632 = vadd.f32 %v599, 0.001
    %v633 = vadd.f32 %v601, 0.001
    %v634 = vmul.f32 %v626, %v628
    %v635 = vmul.f32 %v627, %v629
    %v636 = vmul.f32 %v551, %v551
    %v637 = vmul.f32 %v553, %v553
    %v638 = vsub.f32 %v634, %v636
    %v639 = vsub.f32 %v635, %v637
    %v640 = vmul.f32 %v626, %v575
    %v641 = vmul.f32 %v627, %v577
    %v642 = vmul.f32 %v551, %v557
    %v643 = vmul.f32 %v553, %v559
    %v644 = vsub.f32 %v640, %v642
    %v645 = vsub.f32 %v641, %v643
    %v646 = vmul.f32 %v626, %v581
    %v647 = vmul.f32 %v627, %v583
    %v648 = vmul.f32 %v551, %v563
    %v649 = vmul.f32 %v553, %v565
    %v650 = vsub.f32 %v646, %v648
    %v651 = vsub.f32 %v647, %v649
    %v652 = vmul.f32 %v551, %v575
    %v653 = vmul.f32 %v553, %v577
    %v654 = vmul.f32 %v628, %v557
    %v655 = vmul.f32 %v629, %v559
    %v656 = vsub.f32 %v652, %v654
    %v657 = vsub.f32 %v653, %v655
    %v658 = vmul.f32 %v551, %v581
    %v659 = vmul.f32 %v553, %v583
    %v660 = vmul.f32 %v628, %v563
    %v661 = vmul.f32 %v629, %v565
    %v662 = vsub.f32 %v658, %v660
    %v663 = vsub.f32 %v659, %v661
    %v664 = vmul.f32 %v557, %v581
    %v665 = vmul.f32 %v559, %v583
    %v666 = vmul.f32 %v575, %v563
    %v667 = vmul.f32 %v577, %v565
    %v668 = vsub.f32 %v664, %v666
    %v669 = vsub.f32 %v665, %v667
    %v670 = vmul.f32 %v630, %v632
    %v671 = vmul.f32 %v631, %v633
    %v672 = vmul.f32 %v593, %v593
    %v673 = vmul.f32 %v595, %v595
    %v674 = vsub.f32 %v670, %v672
    %v675 = vsub.f32 %v671, %v673
    %v676 = vmul.f32 %v575, %v632
    %v677 = vmul.f32 %v577, %v633
    %v678 = vmul.f32 %v581, %v593
    %v679 = vmul.f32 %v583, %v595
    %v680 = vsub.f32 %v676, %v678
    %v681 = vsub.f32 %v677, %v679
    %v682 = vmul.f32 %v575, %v593
    %v683 = vmul.f32 %v577, %v595
    %v684 = vmul.f32 %v581, %v630
    %v685 = vmul.f32 %v583, %v631
    %v686 = vsub.f32 %v682, %v684
    %v687 = vsub.f32 %v683, %v685
    %v688 = vmul.f32 %v557, %v632
    %v689 = vmul.f32 %v559, %v633
    %v690 = vmul.f32 %v563, %v593
    %v691 = vmul.f32 %v565, %v595
    %v692 = vsub.f32 %v688, %v690
    %v693 = vsub.f32 %v689, %v691
    %v694 = vmul.f32 %v557, %v593
    %v695 = vmul.f32 %v559, %v595
    %v696 = vmul.f32 %v563, %v630
    %v697 = vmul.f32 %v565, %v631
    %v698 = vsub.f32 %v694, %v696
    %v699 = vsub.f32 %v695, %v697
    %v700 = vmul.f32 %v638, %v674
    %v701 = vmul.f32 %v639, %v675
    %v702 = vmul.f32 %v644, %v680
    %v703 = vmul.f32 %v645, %v681
    %v704 = vsub.f32 %v700, %v702
    %v705 = vsub.f32 %v701, %v703
    %v706 = vmul.f32 %v650, %v686
    %v707 = vmul.f32 %v651, %v687
    %v708 = vadd.f32 %v704, %v706
    %v709 = vadd.f32 %v705, %v707
    %v710 = vmul.f32 %v656, %v692
    %v711 = vmul.f32 %v657, %v693
    %v712 = vadd.f32 %v708, %v710
    %v713 = vadd.f32 %v709, %v711
    %v714 = vmul.f32 %v662, %v698
    %v715 = vmul.f32 %v663, %v699
    %v716 = vsub.f32 %v712, %v714
    %v717 = vsub.f32 %v713, %v715
    %v718 = vmul.f32 %v668, %v668
    %v719 = vmul.f32 %v669, %v669
    %v720 = vadd.f32 %v716, %v718
    %v721 = vadd.f32 %v717, %v719
    %v722 = vrcp.pop %v720
    %v723 = vrcp.pop %v721
    %v724 = vmul.f32 %v628, %v674
    %v725 = vmul.f32 %v629, %v675
    %v726 = vmul.f32 %v575, %v680
    %v727 = vmul.f32 %v577, %v681
    %v728 = vsub.f32 %v724, %v726
    %v729 = vsub.f32 %v725, %v727
    %v730 = vmul.f32 %v581, %v686
    %v731 = vmul.f32 %v583, %v687
    %v732 = vadd.f32 %v728, %v730
    %v733 = vadd.f32 %v729, %v731
    %v734 = vmul.f32 %v732, %v605
    %v735 = vmul.f32 %v733, %v607
    %v736 = vsub.f32 0.0, %v551
    %v737 = vsub.f32 0.0, %v553
    %v738 = vmul.f32 %v736, %v674
    %v739 = vmul.f32 %v737, %v675
    %v740 = vmul.f32 %v557, %v680
    %v741 = vmul.f32 %v559, %v681
    %v742 = vadd.f32 %v738, %v740
    %v743 = vadd.f32 %v739, %v741
    %v744 = vmul.f32 %v563, %v686
    %v745 = vmul.f32 %v565, %v687
    %v746 = vsub.f32 %v742, %v744
    %v747 = vsub.f32 %v743, %v745
    %v748 = vmul.f32 %v746, %v611
    %v749 = vmul.f32 %v747, %v613
    %v750 = vadd.f32 %v734, %v748
    %v751 = vadd.f32 %v735, %v749
    %v752 = vmul.f32 %v581, %v668
    %v753 = vmul.f32 %v583, %v669
    %v754 = vmul.f32 %v593, %v662
    %v755 = vmul.f32 %v595, %v663
    %v756 = vsub.f32 %v752, %v754
    %v757 = vsub.f32 %v753, %v755
    %v758 = vmul.f32 %v632, %v656
    %v759 = vmul.f32 %v633, %v657
    %v760 = vadd.f32 %v756, %v758
    %v761 = vadd.f32 %v757, %v759
    %v762 = vmul.f32 %v760, %v617
    %v763 = vmul.f32 %v761, %v619
    %v764 = vadd.f32 %v750, %v762
    %v765 = vadd.f32 %v751, %v763
    %v766 = vsub.f32 0.0, %v575
    %v767 = vsub.f32 0.0, %v577
    %v768 = vmul.f32 %v766, %v668
    %v769 = vmul.f32 %v767, %v669
    %v770 = vmul.f32 %v630, %v662
    %v771 = vmul.f32 %v631, %v663
    %v772 = vadd.f32 %v768, %v770
    %v773 = vadd.f32 %v769, %v771
    %v774 = vmul.f32 %v593, %v656
    %v775 = vmul.f32 %v595, %v657
    %v776 = vsub.f32 %v772, %v774
    %v777 = vsub.f32 %v773, %v775
    %v778 = vmul.f32 %v776, %v623
    %v779 = vmul.f32 %v777, %v625
    %v780 = vadd.f32 %v764, %v778
    %v781 = vadd.f32 %v765, %v779
    %v782 = vmul.f32 %v780, %v722
    %v783 = vmul.f32 %v781, %v723
    %v784 = vmul.f32 %v575, %v692
    %v785 = vmul.f32 %v577, %v693
    %v786 = vadd.f32 %v738, %v784
    %v787 = vadd.f32 %v739, %v785
    %v788 = vmul.f32 %v581, %v698
    %v789 = vmul.f32 %v583, %v699
    %v790 = vsub.f32 %v786, %v788
    %v791 = vsub.f32 %v787, %v789
    %v792 = vmul.f32 %v790, %v605
    %v793 = vmul.f32 %v791, %v607
    %v794 = vmul.f32 %v626, %v674
    %v795 = vmul.f32 %v627, %v675
    %v796 = vmul.f32 %v557, %v692
    %v797 = vmul.f32 %v559, %v693
    %v798 = vsub.f32 %v794, %v796
    %v799 = vsub.f32 %v795, %v797
    %v800 = vmul.f32 %v563, %v698
    %v801 = vmul.f32 %v565, %v699
    %v802 = vadd.f32 %v798, %v800
    %v803 = vadd.f32 %v799, %v801
    %v804 = vmul.f32 %v802, %v611
    %v805 = vmul.f32 %v803, %v613
    %v806 = vadd.f32 %v792, %v804
    %v807 = vadd.f32 %v793, %v805
    %v808 = vsub.f32 0.0, %v563
    %v809 = vsub.f32 0.0, %v565
    %v810 = vmul.f32 %v808, %v668
    %v811 = vmul.f32 %v809, %v669
    %v812 = vmul.f32 %v593, %v650
    %v813 = vmul.f32 %v595, %v651
    %v814 = vadd.f32 %v810, %v812
    %v815 = vadd.f32 %v811, %v813
    %v816 = vmul.f32 %v632, %v644
    %v817 = vmul.f32 %v633, %v645
    %v818 = vsub.f32 %v814, %v816
    %v819 = vsub.f32 %v815, %v817
    %v820 = vmul.f32 %v818, %v617
    %v821 = vmul.f32 %v819, %v619
    %v822 = vadd.f32 %v806, %v820
    %v823 = vadd.f32 %v807, %v821
    %v824 = vmul.f32 %v557, %v668
    %v825 = vmul.f32 %v559, %v669
    %v826 = vmul.f32 %v630, %v650
    %v827 = vmul.f32 %v631, %v651
    %v828 = vsub.f32 %v824, %v826
    %v829 = vsub.f32 %v825, %v827
    %v830 = vmul.f32 %v593, %v644
    %v831 = vmul.f32 %v595, %v645
    %v832 = vadd.f32 %v828, %v830
    %v833 = vadd.f32 %v829, %v831
    %v834 = vmul.f32 %v832, %v623
    %v835 = vmul.f32 %v833, %v625
    %v836 = vadd.f32 %v822, %v834
    %v837 = vadd.f32 %v823, %v835
    %v838 = vmul.f32 %v836, %v722
    %v839 = vmul.f32 %v837, %v723
    %v840 = vmul.f32 %v551, %v680
    %v841 = vmul.f32 %v553, %v681
    %v842 = vmul.f32 %v628, %v692
    %v843 = vmul.f32 %v629, %v693
    %v844 = vsub.f32 %v840, %v842
    %v845 = vsub.f32 %v841, %v843
    %v846 = vadd.f32 %v844, %v752
    %v847 = vadd.f32 %v845, %v753
    %v848 = vmul.f32 %v846, %v605
    %v849 = vmul.f32 %v847, %v607
    %v850 = vsub.f32 0.0, %v626
    %v851 = vsub.f32 0.0, %v627
    %v852 = vmul.f32 %v850, %v680
    %v853 = vmul.f32 %v851, %v681
    %v854 = vmul.f32 %v551, %v692
    %v855 = vmul.f32 %v553, %v693
    %v856 = vadd.f32 %v852, %v854
    %v857 = vadd.f32 %v853, %v855
    %v858 = vmul.f32 %v563, %v668
    %v859 = vmul.f32 %v565, %v669
    %v860 = vsub.f32 %v856, %v858
    %v861 = vsub.f32 %v857, %v859
    %v862 = vmul.f32 %v860, %v611
    %v863 = vmul.f32 %v861, %v613
    %v864 = vadd.f32 %v848, %v862
    %v865 = vadd.f32 %v849, %v863
    %v866 = vmul.f32 %v563, %v662
    %v867 = vmul.f32 %v565, %v663
    %v868 = vmul.f32 %v581, %v650
    %v869 = vmul.f32 %v583, %v651
    %v870 = vsub.f32 %v866, %v868
    %v871 = vsub.f32 %v867, %v869
    %v872 = vmul.f32 %v632, %v638
    %v873 = vmul.f32 %v633, %v639
    %v874 = vadd.f32 %v870, %v872
    %v875 = vadd.f32 %v871, %v873
    %v876 = vmul.f32 %v874, %v617
    %v877 = vmul.f32 %v875, %v619
    %v878 = vadd.f32 %v864, %v876
    %v879 = vadd.f32 %v865, %v877
    %v880 = vsub.f32 0.0, %v557
    %v881 = vsub.f32 0.0, %v559
    %v882 = vmul.f32 %v880, %v662
    %v883 = vmul.f32 %v881, %v663
    %v884 = vmul.f32 %v575, %v650
    %v885 = vmul.f32 %v577, %v651
    %v886 = vadd.f32 %v882, %v884
    %v887 = vadd.f32 %v883, %v885
    %v888 = vmul.f32 %v593, %v638
    %v889 = vmul.f32 %v595, %v639
    %v890 = vsub.f32 %v886, %v888
    %v891 = vsub.f32 %v887, %v889
    %v892 = vmul.f32 %v890, %v623
    %v893 = vmul.f32 %v891, %v625
    %v894 = vadd.f32 %v878, %v892
    %v895 = vadd.f32 %v879, %v893
    %v896 = vmul.f32 %v894, %v722
    %v897 = vmul.f32 %v895, %v723
    %v898 = vmul.f32 %v736, %v686
    %v899 = vmul.f32 %v737, %v687
    %v900 = vmul.f32 %v628, %v698
    %v901 = vmul.f32 %v629, %v699
    %v902 = vadd.f32 %v898, %v900
    %v903 = vadd.f32 %v899, %v901
    %v904 = vmul.f32 %v575, %v668
    %v905 = vmul.f32 %v577, %v669
    %v906 = vsub.f32 %v902, %v904
    %v907 = vsub.f32 %v903, %v905
    %v908 = vmul.f32 %v906, %v605
    %v909 = vmul.f32 %v907, %v607
    %v910 = vmul.f32 %v626, %v686
    %v911 = vmul.f32 %v627, %v687
    %v912 = vmul.f32 %v551, %v698
    %v913 = vmul.f32 %v553, %v699
    %v914 = vsub.f32 %v910, %v912
    %v915 = vsub.f32 %v911, %v913
    %v916 = vadd.f32 %v914, %v824
    %v917 = vadd.f32 %v915, %v825
    %v918 = vmul.f32 %v916, %v611
    %v919 = vmul.f32 %v917, %v613
    %v920 = vadd.f32 %v908, %v918
    %v921 = vadd.f32 %v909, %v919
    %v922 = vmul.f32 %v808, %v656
    %v923 = vmul.f32 %v809, %v657
    %v924 = vmul.f32 %v581, %v644
    %v925 = vmul.f32 %v583, %v645
    %v926 = vadd.f32 %v922, %v924
    %v927 = vadd.f32 %v923, %v925
    %v928 = vsub.f32 %v926, %v888
    %v929 = vsub.f32 %v927, %v889
    %v930 = vmul.f32 %v928, %v617
    %v931 = vmul.f32 %v929, %v619
    %v932 = vadd.f32 %v920, %v930
    %v933 = vadd.f32 %v921, %v931
    %v934 = vmul.f32 %v557, %v656
    %v935 = vmul.f32 %v559, %v657
    %v936 = vmul.f32 %v575, %v644
    %v937 = vmul.f32 %v577, %v645
    %v938 = vsub.f32 %v934, %v936
    %v939 = vsub.f32 %v935, %v937
    %v940 = vmul.f32 %v630, %v638
    %v941 = vmul.f32 %v631, %v639
    %v942 = vadd.f32 %v938, %v940
    %v943 = vadd.f32 %v939, %v941
    %v944 = vmul.f32 %v942, %v623
    %v945 = vmul.f32 %v943, %v625
    %v946 = vadd.f32 %v932, %v944
    %v947 = vadd.f32 %v933, %v945
    %v948 = vmul.f32 %v946, %v722
    %v949 = vmul.f32 %v947, %v723
    %v950 = vmul.f32 %v782, %v521
    %v951 = vmul.f32 %v783, %v523
    %v952 = vmul.f32 %v838, %v527
    %v953 = vmul.f32 %v839, %v529
    %v954 = vadd.f32 %v950, %v952
    %v955 = vadd.f32 %v951, %v953
    %v956 = vmul.f32 %v896, %v533
    %v957 = vmul.f32 %v897, %v535
    %v958 = vadd.f32 %v954, %v956
    %v959 = vadd.f32 %v955, %v957
    %v960 = vmul.f32 %v948, %v539
    %v961 = vmul.f32 %v949, %v541
    %v962 = vadd.f32 %v958, %v960
    %v963 = vadd.f32 %v959, %v961
    %v964 = vsub.f32 %v962, %v42
    %v965 = vsub.f32 %v963, %v43
    %v966 = vmul.f32 %v964, %v47
    %v967 = vmul.f32 %v965, %v47
    %v968 = vmul.f32 %v966, %v521
    %v969 = vmul.f32 %v967, %v523
    %970 = vadd.xlane.f32.xlu0 %v968
    %v971 = vpop.xlane.xlu0 %970
    %972 = vadd.xlane.f32.xlu0 %v969
    %v973 = vpop.xlane.xlu0 %972
    %v974 = vmul.f32 %v782, %v971
    %v975 = vmul.f32 %v783, %v973
    %v976 = vmul.f32 %v966, %v527
    %v977 = vmul.f32 %v967, %v529
    %978 = vadd.xlane.f32.xlu0 %v976
    %v979 = vpop.xlane.xlu0 %978
    %980 = vadd.xlane.f32.xlu0 %v977
    %v981 = vpop.xlane.xlu0 %980
    %v982 = vmul.f32 %v838, %v979
    %v983 = vmul.f32 %v839, %v981
    %v984 = vmul.f32 %v966, %v533
    %v985 = vmul.f32 %v967, %v535
    %986 = vadd.xlane.f32.xlu0 %v984
    %v987 = vpop.xlane.xlu0 %986
    %988 = vadd.xlane.f32.xlu0 %v985
    %v989 = vpop.xlane.xlu0 %988
    %v990 = vmul.f32 %v896, %v987
    %v991 = vmul.f32 %v897, %v989
    %v992 = vmul.f32 %v966, %v539
    %v993 = vmul.f32 %v967, %v541
    %994 = vadd.xlane.f32.xlu0 %v992
    %v995 = vpop.xlane.xlu0 %994
    %996 = vadd.xlane.f32.xlu0 %v993
    %v997 = vpop.xlane.xlu0 %996
    %v998 = vmul.f32 %v948, %v995
    %v999 = vmul.f32 %v949, %v997
    %v1000 = vmul.f32 %v974, %v974
    %v1001 = vmul.f32 %v975, %v975
    %v1002 = vmul.f32 %v982, %v982
    %v1003 = vmul.f32 %v983, %v983
    %v1004 = vadd.f32 %v1000, %v1002
    %v1005 = vadd.f32 %v1001, %v1003
    %v1006 = vmul.f32 %v990, %v990
    %v1007 = vmul.f32 %v991, %v991
    %v1008 = vadd.f32 %v1004, %v1006
    %v1009 = vadd.f32 %v1005, %v1007
    %v1010 = vmul.f32 %v998, %v998
    %v1011 = vmul.f32 %v999, %v999
    %v1012 = vadd.f32 %v1008, %v1010
    %v1013 = vadd.f32 %v1009, %v1011
    %vm1014 = vcmp.lt.f32.partialorder %v1012, 1.0
    %vm1015 = vcmp.lt.f32.partialorder %v1013, 1.0
    %v1016 = vmax.f32 %v1012, 1e-30
    %v1017 = vmax.f32 %v1013, 1e-30
    %v1018 = vrsqrt.pop %v1016
    %v1019 = vrsqrt.pop %v1017
    %v1020 = vmul.f32 %v1018, 0.001
    %v1021 = vmul.f32 %v1019, 0.001
    %v1022 = vsel %vm1014, 0.001, %v1020
    %v1023 = vsel %vm1015, 0.001, %v1021
    %v1024 = vmul.f32 %v974, %v1022
    %v1025 = vmul.f32 %v975, %v1023
    %v1026 = vadd.f32 %v432, %v1024
    %v1027 = vadd.f32 %v433, %v1025
    %v1028 = vmul.f32 %v982, %v1022
    %v1029 = vmul.f32 %v983, %v1023
    %v1030 = vadd.f32 %v460, %v1028
    %v1031 = vadd.f32 %v461, %v1029
    %v1032 = vmul.f32 %v990, %v1022
    %v1033 = vmul.f32 %v991, %v1023
    %v1034 = vadd.f32 %v488, %v1032
    %v1035 = vadd.f32 %v489, %v1033
    %v1036 = vmul.f32 %v998, %v1022
    %v1037 = vmul.f32 %v999, %v1023
    %v1038 = vadd.f32 %v516, %v1036
    %v1039 = vadd.f32 %v517, %v1037
    %s1040 = sld [smem:[#allocation4 + $0x10]]
    %v1041 = vstv %s1040
    %v1042 = vmul.f32 %v1041, %v1026
    %v1043 = vmul.f32 %v1041, %v1027
    %s1044 = sld [smem:[#allocation4 + $0x11]]
    %v1045 = vstv %s1044
    %v1046 = vmul.f32 %v1045, %v1030
    %v1047 = vmul.f32 %v1045, %v1031
    %v1048 = vadd.f32 %v1042, %v1046
    %v1049 = vadd.f32 %v1043, %v1047
    %s1050 = sld [smem:[#allocation4 + $0x12]]
    %v1051 = vstv %s1050
    %v1052 = vmul.f32 %v1051, %v1034
    %v1053 = vmul.f32 %v1051, %v1035
    %v1054 = vadd.f32 %v1048, %v1052
    %v1055 = vadd.f32 %v1049, %v1053
    %s1056 = sld [smem:[#allocation4 + $0x13]]
    %v1057 = vstv %s1056
    %v1058 = vmul.f32 %v1057, %v1038
    %v1059 = vmul.f32 %v1057, %v1039
    %v1060 = vadd.f32 %v1054, %v1058
    %v1061 = vadd.f32 %v1055, %v1059
    %s1062 = sld [smem:[#allocation5 + $0x4]]
    %v1063 = vstv %s1062
    %v1064 = vadd.f32 %v1060, %v1063
    %v1065 = vadd.f32 %v1061, %v1063
    %v1066 = vmax.f32 %v1064, 0.0
    %v1067 = vmax.f32 %v1065, 0.0
    %s1068 = sld [smem:[#allocation4 + $0x14]]
    %v1069 = vstv %s1068
    %v1070 = vmul.f32 %v1069, %v1026
    %v1071 = vmul.f32 %v1069, %v1027
    %s1072 = sld [smem:[#allocation4 + $0x15]]
    %v1073 = vstv %s1072
    %v1074 = vmul.f32 %v1073, %v1030
    %v1075 = vmul.f32 %v1073, %v1031
    %v1076 = vadd.f32 %v1070, %v1074
    %v1077 = vadd.f32 %v1071, %v1075
    %s1078 = sld [smem:[#allocation4 + $0x16]]
    %v1079 = vstv %s1078
    %v1080 = vmul.f32 %v1079, %v1034
    %v1081 = vmul.f32 %v1079, %v1035
    %v1082 = vadd.f32 %v1076, %v1080
    %v1083 = vadd.f32 %v1077, %v1081
    %s1084 = sld [smem:[#allocation4 + $0x17]]
    %v1085 = vstv %s1084
    %v1086 = vmul.f32 %v1085, %v1038
    %v1087 = vmul.f32 %v1085, %v1039
    %v1088 = vadd.f32 %v1082, %v1086
    %v1089 = vadd.f32 %v1083, %v1087
    %s1090 = sld [smem:[#allocation5 + $0x5]]
    %v1091 = vstv %s1090
    %v1092 = vadd.f32 %v1088, %v1091
    %v1093 = vadd.f32 %v1089, %v1091
    %v1094 = vmax.f32 %v1092, 0.0
    %v1095 = vmax.f32 %v1093, 0.0
    %s1096 = sld [smem:[#allocation4 + $0x18]]
    %v1097 = vstv %s1096
    %v1098 = vmul.f32 %v1097, %v1026
    %v1099 = vmul.f32 %v1097, %v1027
    %s1100 = sld [smem:[#allocation4 + $0x19]]
    %v1101 = vstv %s1100
    %v1102 = vmul.f32 %v1101, %v1030
    %v1103 = vmul.f32 %v1101, %v1031
    %v1104 = vadd.f32 %v1098, %v1102
    %v1105 = vadd.f32 %v1099, %v1103
    %s1106 = sld [smem:[#allocation4 + $0x1a]]
    %v1107 = vstv %s1106
    %v1108 = vmul.f32 %v1107, %v1034
    %v1109 = vmul.f32 %v1107, %v1035
    %v1110 = vadd.f32 %v1104, %v1108
    %v1111 = vadd.f32 %v1105, %v1109
    %s1112 = sld [smem:[#allocation4 + $0x1b]]
    %v1113 = vstv %s1112
    %v1114 = vmul.f32 %v1113, %v1038
    %v1115 = vmul.f32 %v1113, %v1039
    %v1116 = vadd.f32 %v1110, %v1114
    %v1117 = vadd.f32 %v1111, %v1115
    %s1118 = sld [smem:[#allocation5 + $0x6]]
    %v1119 = vstv %s1118
    %v1120 = vadd.f32 %v1116, %v1119
    %v1121 = vadd.f32 %v1117, %v1119
    %v1122 = vmax.f32 %v1120, 0.0
    %v1123 = vmax.f32 %v1121, 0.0
    %s1124 = sld [smem:[#allocation4 + $0x1c]]
    %v1125 = vstv %s1124
    %v1126 = vmul.f32 %v1125, %v1026
    %v1127 = vmul.f32 %v1125, %v1027
    %s1128 = sld [smem:[#allocation4 + $0x1d]]
    %v1129 = vstv %s1128
    %v1130 = vmul.f32 %v1129, %v1030
    %v1131 = vmul.f32 %v1129, %v1031
    %v1132 = vadd.f32 %v1126, %v1130
    %v1133 = vadd.f32 %v1127, %v1131
    %s1134 = sld [smem:[#allocation4 + $0x1e]]
    %v1135 = vstv %s1134
    %v1136 = vmul.f32 %v1135, %v1034
    %v1137 = vmul.f32 %v1135, %v1035
    %v1138 = vadd.f32 %v1132, %v1136
    %v1139 = vadd.f32 %v1133, %v1137
    %s1140 = sld [smem:[#allocation4 + $0x1f]]
    %v1141 = vstv %s1140
    %v1142 = vmul.f32 %v1141, %v1038
    %v1143 = vmul.f32 %v1141, %v1039
    %v1144 = vadd.f32 %v1138, %v1142
    %v1145 = vadd.f32 %v1139, %v1143
    %s1146 = sld [smem:[#allocation5 + $0x7]]
    %v1147 = vstv %s1146
    %v1148 = vadd.f32 %v1144, %v1147
    %v1149 = vadd.f32 %v1145, %v1147
    %v1150 = vmax.f32 %v1148, 0.0
    %v1151 = vmax.f32 %v1149, 0.0
    %v1152 = vmul.f32 %v1066, %v47
    %v1153 = vmul.f32 %v1067, %v47
    %v1154 = vmul.f32 %v1152, 1.442695
    %v1155 = vpow.pop %v1154
    %v1156 = vmul.f32 %v1153, 1.442695
    %v1157 = vpow.pop %v1156
    %v1158 = vmul.f32 %v1094, %v47
    %v1159 = vmul.f32 %v1095, %v47
    %v1160 = vmul.f32 %v1158, 1.442695
    %v1161 = vpow.pop %v1160
    %v1162 = vmul.f32 %v1159, 1.442695
    %v1163 = vpow.pop %v1162
    %v1164 = vmul.f32 %v1122, %v47
    %v1165 = vmul.f32 %v1123, %v47
    %v1166 = vmul.f32 %v1164, 1.442695
    %v1167 = vpow.pop %v1166
    %v1168 = vmul.f32 %v1165, 1.442695
    %v1169 = vpow.pop %v1168
    %v1170 = vmul.f32 %v1150, %v47
    %v1171 = vmul.f32 %v1151, %v47
    %v1172 = vmul.f32 %v1170, 1.442695
    %v1173 = vpow.pop %v1172
    %v1174 = vmul.f32 %v1171, 1.442695
    %v1175 = vpow.pop %v1174
    %v1176 = vmul.f32 %v1155, %v1155
    %v1177 = vmul.f32 %v1157, %v1157
    %1178 = vadd.xlane.f32.xlu0 %v1176
    %v1179 = vpop.xlane.xlu0 %1178
    %1180 = vadd.xlane.f32.xlu0 %v1177
    %v1181 = vpop.xlane.xlu0 %1180
    %v1182 = vmul.f32 %v1155, %v1161
    %v1183 = vmul.f32 %v1157, %v1163
    %1184 = vadd.xlane.f32.xlu0 %v1182
    %v1185 = vpop.xlane.xlu0 %1184
    %1186 = vadd.xlane.f32.xlu0 %v1183
    %v1187 = vpop.xlane.xlu0 %1186
    %v1188 = vmul.f32 %v1155, %v1167
    %v1189 = vmul.f32 %v1157, %v1169
    %1190 = vadd.xlane.f32.xlu0 %v1188
    %v1191 = vpop.xlane.xlu0 %1190
    %1192 = vadd.xlane.f32.xlu0 %v1189
    %v1193 = vpop.xlane.xlu0 %1192
    %v1194 = vmul.f32 %v1155, %v1173
    %v1195 = vmul.f32 %v1157, %v1175
    %1196 = vadd.xlane.f32.xlu0 %v1194
    %v1197 = vpop.xlane.xlu0 %1196
    %1198 = vadd.xlane.f32.xlu0 %v1195
    %v1199 = vpop.xlane.xlu0 %1198
    %v1200 = vmul.f32 %v1161, %v1161
    %v1201 = vmul.f32 %v1163, %v1163
    %1202 = vadd.xlane.f32.xlu0 %v1200
    %v1203 = vpop.xlane.xlu0 %1202
    %1204 = vadd.xlane.f32.xlu0 %v1201
    %v1205 = vpop.xlane.xlu0 %1204
    %v1206 = vmul.f32 %v1161, %v1167
    %v1207 = vmul.f32 %v1163, %v1169
    %1208 = vadd.xlane.f32.xlu0 %v1206
    %v1209 = vpop.xlane.xlu0 %1208
    %1210 = vadd.xlane.f32.xlu0 %v1207
    %v1211 = vpop.xlane.xlu0 %1210
    %v1212 = vmul.f32 %v1161, %v1173
    %v1213 = vmul.f32 %v1163, %v1175
    %1214 = vadd.xlane.f32.xlu0 %v1212
    %v1215 = vpop.xlane.xlu0 %1214
    %1216 = vadd.xlane.f32.xlu0 %v1213
    %v1217 = vpop.xlane.xlu0 %1216
    %v1218 = vmul.f32 %v1167, %v1167
    %v1219 = vmul.f32 %v1169, %v1169
    %1220 = vadd.xlane.f32.xlu0 %v1218
    %v1221 = vpop.xlane.xlu0 %1220
    %1222 = vadd.xlane.f32.xlu0 %v1219
    %v1223 = vpop.xlane.xlu0 %1222
    %v1224 = vmul.f32 %v1167, %v1173
    %v1225 = vmul.f32 %v1169, %v1175
    %1226 = vadd.xlane.f32.xlu0 %v1224
    %v1227 = vpop.xlane.xlu0 %1226
    %1228 = vadd.xlane.f32.xlu0 %v1225
    %v1229 = vpop.xlane.xlu0 %1228
    %v1230 = vmul.f32 %v1173, %v1173
    %v1231 = vmul.f32 %v1175, %v1175
    %1232 = vadd.xlane.f32.xlu0 %v1230
    %v1233 = vpop.xlane.xlu0 %1232
    %1234 = vadd.xlane.f32.xlu0 %v1231
    %v1235 = vpop.xlane.xlu0 %1234
    %v1236 = vmul.f32 %v1155, %v42
    %v1237 = vmul.f32 %v1157, %v43
    %1238 = vadd.xlane.f32.xlu0 %v1236
    %v1239 = vpop.xlane.xlu0 %1238
    %1240 = vadd.xlane.f32.xlu0 %v1237
    %v1241 = vpop.xlane.xlu0 %1240
    %v1242 = vmul.f32 %v1161, %v42
    %v1243 = vmul.f32 %v1163, %v43
    %1244 = vadd.xlane.f32.xlu0 %v1242
    %v1245 = vpop.xlane.xlu0 %1244
    %1246 = vadd.xlane.f32.xlu0 %v1243
    %v1247 = vpop.xlane.xlu0 %1246
    %v1248 = vmul.f32 %v1167, %v42
    %v1249 = vmul.f32 %v1169, %v43
    %1250 = vadd.xlane.f32.xlu0 %v1248
    %v1251 = vpop.xlane.xlu0 %1250
    %1252 = vadd.xlane.f32.xlu0 %v1249
    %v1253 = vpop.xlane.xlu0 %1252
    %v1254 = vmul.f32 %v1173, %v42
    %v1255 = vmul.f32 %v1175, %v43
    %1256 = vadd.xlane.f32.xlu0 %v1254
    %v1257 = vpop.xlane.xlu0 %1256
    %1258 = vadd.xlane.f32.xlu0 %v1255
    %v1259 = vpop.xlane.xlu0 %1258
    %v1260 = vadd.f32 %v1179, 0.001
    %v1261 = vadd.f32 %v1181, 0.001
    %v1262 = vadd.f32 %v1203, 0.001
    %v1263 = vadd.f32 %v1205, 0.001
    %v1264 = vadd.f32 %v1221, 0.001
    %v1265 = vadd.f32 %v1223, 0.001
    %v1266 = vadd.f32 %v1233, 0.001
    %v1267 = vadd.f32 %v1235, 0.001
    %v1268 = vmul.f32 %v1260, %v1262
    %v1269 = vmul.f32 %v1261, %v1263
    %v1270 = vmul.f32 %v1185, %v1185
    %v1271 = vmul.f32 %v1187, %v1187
    %v1272 = vsub.f32 %v1268, %v1270
    %v1273 = vsub.f32 %v1269, %v1271
    %v1274 = vmul.f32 %v1260, %v1209
    %v1275 = vmul.f32 %v1261, %v1211
    %v1276 = vmul.f32 %v1185, %v1191
    %v1277 = vmul.f32 %v1187, %v1193
    %v1278 = vsub.f32 %v1274, %v1276
    %v1279 = vsub.f32 %v1275, %v1277
    %v1280 = vmul.f32 %v1260, %v1215
    %v1281 = vmul.f32 %v1261, %v1217
    %v1282 = vmul.f32 %v1185, %v1197
    %v1283 = vmul.f32 %v1187, %v1199
    %v1284 = vsub.f32 %v1280, %v1282
    %v1285 = vsub.f32 %v1281, %v1283
    %v1286 = vmul.f32 %v1185, %v1209
    %v1287 = vmul.f32 %v1187, %v1211
    %v1288 = vmul.f32 %v1262, %v1191
    %v1289 = vmul.f32 %v1263, %v1193
    %v1290 = vsub.f32 %v1286, %v1288
    %v1291 = vsub.f32 %v1287, %v1289
    %v1292 = vmul.f32 %v1185, %v1215
    %v1293 = vmul.f32 %v1187, %v1217
    %v1294 = vmul.f32 %v1262, %v1197
    %v1295 = vmul.f32 %v1263, %v1199
    %v1296 = vsub.f32 %v1292, %v1294
    %v1297 = vsub.f32 %v1293, %v1295
    %v1298 = vmul.f32 %v1191, %v1215
    %v1299 = vmul.f32 %v1193, %v1217
    %v1300 = vmul.f32 %v1209, %v1197
    %v1301 = vmul.f32 %v1211, %v1199
    %v1302 = vsub.f32 %v1298, %v1300
    %v1303 = vsub.f32 %v1299, %v1301
    %v1304 = vmul.f32 %v1264, %v1266
    %v1305 = vmul.f32 %v1265, %v1267
    %v1306 = vmul.f32 %v1227, %v1227
    %v1307 = vmul.f32 %v1229, %v1229
    %v1308 = vsub.f32 %v1304, %v1306
    %v1309 = vsub.f32 %v1305, %v1307
    %v1310 = vmul.f32 %v1209, %v1266
    %v1311 = vmul.f32 %v1211, %v1267
    %v1312 = vmul.f32 %v1215, %v1227
    %v1313 = vmul.f32 %v1217, %v1229
    %v1314 = vsub.f32 %v1310, %v1312
    %v1315 = vsub.f32 %v1311, %v1313
    %v1316 = vmul.f32 %v1209, %v1227
    %v1317 = vmul.f32 %v1211, %v1229
    %v1318 = vmul.f32 %v1215, %v1264
    %v1319 = vmul.f32 %v1217, %v1265
    %v1320 = vsub.f32 %v1316, %v1318
    %v1321 = vsub.f32 %v1317, %v1319
    %v1322 = vmul.f32 %v1191, %v1266
    %v1323 = vmul.f32 %v1193, %v1267
    %v1324 = vmul.f32 %v1197, %v1227
    %v1325 = vmul.f32 %v1199, %v1229
    %v1326 = vsub.f32 %v1322, %v1324
    %v1327 = vsub.f32 %v1323, %v1325
    %v1328 = vmul.f32 %v1191, %v1227
    %v1329 = vmul.f32 %v1193, %v1229
    %v1330 = vmul.f32 %v1197, %v1264
    %v1331 = vmul.f32 %v1199, %v1265
    %v1332 = vsub.f32 %v1328, %v1330
    %v1333 = vsub.f32 %v1329, %v1331
    %v1334 = vmul.f32 %v1272, %v1308
    %v1335 = vmul.f32 %v1273, %v1309
    %v1336 = vmul.f32 %v1278, %v1314
    %v1337 = vmul.f32 %v1279, %v1315
    %v1338 = vsub.f32 %v1334, %v1336
    %v1339 = vsub.f32 %v1335, %v1337
    %v1340 = vmul.f32 %v1284, %v1320
    %v1341 = vmul.f32 %v1285, %v1321
    %v1342 = vadd.f32 %v1338, %v1340
    %v1343 = vadd.f32 %v1339, %v1341
    %v1344 = vmul.f32 %v1290, %v1326
    %v1345 = vmul.f32 %v1291, %v1327
    %v1346 = vadd.f32 %v1342, %v1344
    %v1347 = vadd.f32 %v1343, %v1345
    %v1348 = vmul.f32 %v1296, %v1332
    %v1349 = vmul.f32 %v1297, %v1333
    %v1350 = vsub.f32 %v1346, %v1348
    %v1351 = vsub.f32 %v1347, %v1349
    %v1352 = vmul.f32 %v1302, %v1302
    %v1353 = vmul.f32 %v1303, %v1303
    %v1354 = vadd.f32 %v1350, %v1352
    %v1355 = vadd.f32 %v1351, %v1353
    %v1356 = vrcp.pop %v1354
    %v1357 = vrcp.pop %v1355
    %v1358 = vmul.f32 %v1262, %v1308
    %v1359 = vmul.f32 %v1263, %v1309
    %v1360 = vmul.f32 %v1209, %v1314
    %v1361 = vmul.f32 %v1211, %v1315
    %v1362 = vsub.f32 %v1358, %v1360
    %v1363 = vsub.f32 %v1359, %v1361
    %v1364 = vmul.f32 %v1215, %v1320
    %v1365 = vmul.f32 %v1217, %v1321
    %v1366 = vadd.f32 %v1362, %v1364
    %v1367 = vadd.f32 %v1363, %v1365
    %v1368 = vmul.f32 %v1366, %v1239
    %v1369 = vmul.f32 %v1367, %v1241
    %v1370 = vsub.f32 0.0, %v1185
    %v1371 = vsub.f32 0.0, %v1187
    %v1372 = vmul.f32 %v1370, %v1308
    %v1373 = vmul.f32 %v1371, %v1309
    %v1374 = vmul.f32 %v1191, %v1314
    %v1375 = vmul.f32 %v1193, %v1315
    %v1376 = vadd.f32 %v1372, %v1374
    %v1377 = vadd.f32 %v1373, %v1375
    %v1378 = vmul.f32 %v1197, %v1320
    %v1379 = vmul.f32 %v1199, %v1321
    %v1380 = vsub.f32 %v1376, %v1378
    %v1381 = vsub.f32 %v1377, %v1379
    %v1382 = vmul.f32 %v1380, %v1245
    %v1383 = vmul.f32 %v1381, %v1247
    %v1384 = vadd.f32 %v1368, %v1382
    %v1385 = vadd.f32 %v1369, %v1383
    %v1386 = vmul.f32 %v1215, %v1302
    %v1387 = vmul.f32 %v1217, %v1303
    %v1388 = vmul.f32 %v1227, %v1296
    %v1389 = vmul.f32 %v1229, %v1297
    %v1390 = vsub.f32 %v1386, %v1388
    %v1391 = vsub.f32 %v1387, %v1389
    %v1392 = vmul.f32 %v1266, %v1290
    %v1393 = vmul.f32 %v1267, %v1291
    %v1394 = vadd.f32 %v1390, %v1392
    %v1395 = vadd.f32 %v1391, %v1393
    %v1396 = vmul.f32 %v1394, %v1251
    %v1397 = vmul.f32 %v1395, %v1253
    %v1398 = vadd.f32 %v1384, %v1396
    %v1399 = vadd.f32 %v1385, %v1397
    %v1400 = vsub.f32 0.0, %v1209
    %v1401 = vsub.f32 0.0, %v1211
    %v1402 = vmul.f32 %v1400, %v1302
    %v1403 = vmul.f32 %v1401, %v1303
    %v1404 = vmul.f32 %v1264, %v1296
    %v1405 = vmul.f32 %v1265, %v1297
    %v1406 = vadd.f32 %v1402, %v1404
    %v1407 = vadd.f32 %v1403, %v1405
    %v1408 = vmul.f32 %v1227, %v1290
    %v1409 = vmul.f32 %v1229, %v1291
    %v1410 = vsub.f32 %v1406, %v1408
    %v1411 = vsub.f32 %v1407, %v1409
    %v1412 = vmul.f32 %v1410, %v1257
    %v1413 = vmul.f32 %v1411, %v1259
    %v1414 = vadd.f32 %v1398, %v1412
    %v1415 = vadd.f32 %v1399, %v1413
    %v1416 = vmul.f32 %v1414, %v1356
    %v1417 = vmul.f32 %v1415, %v1357
    %v1418 = vmul.f32 %v1209, %v1326
    %v1419 = vmul.f32 %v1211, %v1327
    %v1420 = vadd.f32 %v1372, %v1418
    %v1421 = vadd.f32 %v1373, %v1419
    %v1422 = vmul.f32 %v1215, %v1332
    %v1423 = vmul.f32 %v1217, %v1333
    %v1424 = vsub.f32 %v1420, %v1422
    %v1425 = vsub.f32 %v1421, %v1423
    %v1426 = vmul.f32 %v1424, %v1239
    %v1427 = vmul.f32 %v1425, %v1241
    %v1428 = vmul.f32 %v1260, %v1308
    %v1429 = vmul.f32 %v1261, %v1309
    %v1430 = vmul.f32 %v1191, %v1326
    %v1431 = vmul.f32 %v1193, %v1327
    %v1432 = vsub.f32 %v1428, %v1430
    %v1433 = vsub.f32 %v1429, %v1431
    %v1434 = vmul.f32 %v1197, %v1332
    %v1435 = vmul.f32 %v1199, %v1333
    %v1436 = vadd.f32 %v1432, %v1434
    %v1437 = vadd.f32 %v1433, %v1435
    %v1438 = vmul.f32 %v1436, %v1245
    %v1439 = vmul.f32 %v1437, %v1247
    %v1440 = vadd.f32 %v1426, %v1438
    %v1441 = vadd.f32 %v1427, %v1439
    %v1442 = vsub.f32 0.0, %v1197
    %v1443 = vsub.f32 0.0, %v1199
    %v1444 = vmul.f32 %v1442, %v1302
    %v1445 = vmul.f32 %v1443, %v1303
    %v1446 = vmul.f32 %v1227, %v1284
    %v1447 = vmul.f32 %v1229, %v1285
    %v1448 = vadd.f32 %v1444, %v1446
    %v1449 = vadd.f32 %v1445, %v1447
    %v1450 = vmul.f32 %v1266, %v1278
    %v1451 = vmul.f32 %v1267, %v1279
    %v1452 = vsub.f32 %v1448, %v1450
    %v1453 = vsub.f32 %v1449, %v1451
    %v1454 = vmul.f32 %v1452, %v1251
    %v1455 = vmul.f32 %v1453, %v1253
    %v1456 = vadd.f32 %v1440, %v1454
    %v1457 = vadd.f32 %v1441, %v1455
    %v1458 = vmul.f32 %v1191, %v1302
    %v1459 = vmul.f32 %v1193, %v1303
    %v1460 = vmul.f32 %v1264, %v1284
    %v1461 = vmul.f32 %v1265, %v1285
    %v1462 = vsub.f32 %v1458, %v1460
    %v1463 = vsub.f32 %v1459, %v1461
    %v1464 = vmul.f32 %v1227, %v1278
    %v1465 = vmul.f32 %v1229, %v1279
    %v1466 = vadd.f32 %v1462, %v1464
    %v1467 = vadd.f32 %v1463, %v1465
    %v1468 = vmul.f32 %v1466, %v1257
    %v1469 = vmul.f32 %v1467, %v1259
    %v1470 = vadd.f32 %v1456, %v1468
    %v1471 = vadd.f32 %v1457, %v1469
    %v1472 = vmul.f32 %v1470, %v1356
    %v1473 = vmul.f32 %v1471, %v1357
    %v1474 = vmul.f32 %v1185, %v1314
    %v1475 = vmul.f32 %v1187, %v1315
    %v1476 = vmul.f32 %v1262, %v1326
    %v1477 = vmul.f32 %v1263, %v1327
    %v1478 = vsub.f32 %v1474, %v1476
    %v1479 = vsub.f32 %v1475, %v1477
    %v1480 = vadd.f32 %v1478, %v1386
    %v1481 = vadd.f32 %v1479, %v1387
    %v1482 = vmul.f32 %v1480, %v1239
    %v1483 = vmul.f32 %v1481, %v1241
    %v1484 = vsub.f32 0.0, %v1260
    %v1485 = vsub.f32 0.0, %v1261
    %v1486 = vmul.f32 %v1484, %v1314
    %v1487 = vmul.f32 %v1485, %v1315
    %v1488 = vmul.f32 %v1185, %v1326
    %v1489 = vmul.f32 %v1187, %v1327
    %v1490 = vadd.f32 %v1486, %v1488
    %v1491 = vadd.f32 %v1487, %v1489
    %v1492 = vmul.f32 %v1197, %v1302
    %v1493 = vmul.f32 %v1199, %v1303
    %v1494 = vsub.f32 %v1490, %v1492
    %v1495 = vsub.f32 %v1491, %v1493
    %v1496 = vmul.f32 %v1494, %v1245
    %v1497 = vmul.f32 %v1495, %v1247
    %v1498 = vadd.f32 %v1482, %v1496
    %v1499 = vadd.f32 %v1483, %v1497
    %v1500 = vmul.f32 %v1197, %v1296
    %v1501 = vmul.f32 %v1199, %v1297
    %v1502 = vmul.f32 %v1215, %v1284
    %v1503 = vmul.f32 %v1217, %v1285
    %v1504 = vsub.f32 %v1500, %v1502
    %v1505 = vsub.f32 %v1501, %v1503
    %v1506 = vmul.f32 %v1266, %v1272
    %v1507 = vmul.f32 %v1267, %v1273
    %v1508 = vadd.f32 %v1504, %v1506
    %v1509 = vadd.f32 %v1505, %v1507
    %v1510 = vmul.f32 %v1508, %v1251
    %v1511 = vmul.f32 %v1509, %v1253
    %v1512 = vadd.f32 %v1498, %v1510
    %v1513 = vadd.f32 %v1499, %v1511
    %v1514 = vsub.f32 0.0, %v1191
    %v1515 = vsub.f32 0.0, %v1193
    %v1516 = vmul.f32 %v1514, %v1296
    %v1517 = vmul.f32 %v1515, %v1297
    %v1518 = vmul.f32 %v1209, %v1284
    %v1519 = vmul.f32 %v1211, %v1285
    %v1520 = vadd.f32 %v1516, %v1518
    %v1521 = vadd.f32 %v1517, %v1519
    %v1522 = vmul.f32 %v1227, %v1272
    %v1523 = vmul.f32 %v1229, %v1273
    %v1524 = vsub.f32 %v1520, %v1522
    %v1525 = vsub.f32 %v1521, %v1523
    %v1526 = vmul.f32 %v1524, %v1257
    %v1527 = vmul.f32 %v1525, %v1259
    %v1528 = vadd.f32 %v1512, %v1526
    %v1529 = vadd.f32 %v1513, %v1527
    %v1530 = vmul.f32 %v1528, %v1356
    %v1531 = vmul.f32 %v1529, %v1357
    %v1532 = vmul.f32 %v1370, %v1320
    %v1533 = vmul.f32 %v1371, %v1321
    %v1534 = vmul.f32 %v1262, %v1332
    %v1535 = vmul.f32 %v1263, %v1333
    %v1536 = vadd.f32 %v1532, %v1534
    %v1537 = vadd.f32 %v1533, %v1535
    %v1538 = vmul.f32 %v1209, %v1302
    %v1539 = vmul.f32 %v1211, %v1303
    %v1540 = vsub.f32 %v1536, %v1538
    %v1541 = vsub.f32 %v1537, %v1539
    %v1542 = vmul.f32 %v1540, %v1239
    %v1543 = vmul.f32 %v1541, %v1241
    %v1544 = vmul.f32 %v1260, %v1320
    %v1545 = vmul.f32 %v1261, %v1321
    %v1546 = vmul.f32 %v1185, %v1332
    %v1547 = vmul.f32 %v1187, %v1333
    %v1548 = vsub.f32 %v1544, %v1546
    %v1549 = vsub.f32 %v1545, %v1547
    %v1550 = vadd.f32 %v1548, %v1458
    %v1551 = vadd.f32 %v1549, %v1459
    %v1552 = vmul.f32 %v1550, %v1245
    %v1553 = vmul.f32 %v1551, %v1247
    %v1554 = vadd.f32 %v1542, %v1552
    %v1555 = vadd.f32 %v1543, %v1553
    %v1556 = vmul.f32 %v1442, %v1290
    %v1557 = vmul.f32 %v1443, %v1291
    %v1558 = vmul.f32 %v1215, %v1278
    %v1559 = vmul.f32 %v1217, %v1279
    %v1560 = vadd.f32 %v1556, %v1558
    %v1561 = vadd.f32 %v1557, %v1559
    %v1562 = vsub.f32 %v1560, %v1522
    %v1563 = vsub.f32 %v1561, %v1523
    %v1564 = vmul.f32 %v1562, %v1251
    %v1565 = vmul.f32 %v1563, %v1253
    %v1566 = vadd.f32 %v1554, %v1564
    %v1567 = vadd.f32 %v1555, %v1565
    %v1568 = vmul.f32 %v1191, %v1290
    %v1569 = vmul.f32 %v1193, %v1291
    %v1570 = vmul.f32 %v1209, %v1278
    %v1571 = vmul.f32 %v1211, %v1279
    %v1572 = vsub.f32 %v1568, %v1570
    %v1573 = vsub.f32 %v1569, %v1571
    %v1574 = vmul.f32 %v1264, %v1272
    %v1575 = vmul.f32 %v1265, %v1273
    %v1576 = vadd.f32 %v1572, %v1574
    %v1577 = vadd.f32 %v1573, %v1575
    %v1578 = vmul.f32 %v1576, %v1257
    %v1579 = vmul.f32 %v1577, %v1259
    %v1580 = vadd.f32 %v1566, %v1578
    %v1581 = vadd.f32 %v1567, %v1579
    %v1582 = vmul.f32 %v1580, %v1356
    %v1583 = vmul.f32 %v1581, %v1357
    %v1584 = vmul.f32 %v1416, %v1155
    %v1585 = vmul.f32 %v1417, %v1157
    %v1586 = vmul.f32 %v1472, %v1161
    %v1587 = vmul.f32 %v1473, %v1163
    %v1588 = vadd.f32 %v1584, %v1586
    %v1589 = vadd.f32 %v1585, %v1587
    %v1590 = vmul.f32 %v1530, %v1167
    %v1591 = vmul.f32 %v1531, %v1169
    %v1592 = vadd.f32 %v1588, %v1590
    %v1593 = vadd.f32 %v1589, %v1591
    %v1594 = vmul.f32 %v1582, %v1173
    %v1595 = vmul.f32 %v1583, %v1175
    %v1596 = vadd.f32 %v1592, %v1594
    %v1597 = vadd.f32 %v1593, %v1595
    %v1598 = vsub.f32 %v1596, %v42
    %v1599 = vsub.f32 %v1597, %v43
    %v1600 = vmul.f32 %v1598, %v47
    %v1601 = vmul.f32 %v1599, %v47
    %v1602 = vmul.f32 %v1600, %v1155
    %v1603 = vmul.f32 %v1601, %v1157
    %1604 = vadd.xlane.f32.xlu0 %v1602
    %v1605 = vpop.xlane.xlu0 %1604
    %1606 = vadd.xlane.f32.xlu0 %v1603
    %v1607 = vpop.xlane.xlu0 %1606
    %v1608 = vmul.f32 %v1416, %v1605
    %v1609 = vmul.f32 %v1417, %v1607
    %v1610 = vmul.f32 %v1600, %v1161
    %v1611 = vmul.f32 %v1601, %v1163
    %1612 = vadd.xlane.f32.xlu0 %v1610
    %v1613 = vpop.xlane.xlu0 %1612
    %1614 = vadd.xlane.f32.xlu0 %v1611
    %v1615 = vpop.xlane.xlu0 %1614
    %v1616 = vmul.f32 %v1472, %v1613
    %v1617 = vmul.f32 %v1473, %v1615
    %v1618 = vmul.f32 %v1600, %v1167
    %v1619 = vmul.f32 %v1601, %v1169
    %1620 = vadd.xlane.f32.xlu0 %v1618
    %v1621 = vpop.xlane.xlu0 %1620
    %1622 = vadd.xlane.f32.xlu0 %v1619
    %v1623 = vpop.xlane.xlu0 %1622
    %v1624 = vmul.f32 %v1530, %v1621
    %v1625 = vmul.f32 %v1531, %v1623
    %v1626 = vmul.f32 %v1600, %v1173
    %v1627 = vmul.f32 %v1601, %v1175
    %1628 = vadd.xlane.f32.xlu0 %v1626
    %v1629 = vpop.xlane.xlu0 %1628
    %1630 = vadd.xlane.f32.xlu0 %v1627
    %v1631 = vpop.xlane.xlu0 %1630
    %v1632 = vmul.f32 %v1582, %v1629
    %v1633 = vmul.f32 %v1583, %v1631
    %v1634 = vmul.f32 %v1608, %v1608
    %v1635 = vmul.f32 %v1609, %v1609
    %v1636 = vmul.f32 %v1616, %v1616
    %v1637 = vmul.f32 %v1617, %v1617
    %v1638 = vadd.f32 %v1634, %v1636
    %v1639 = vadd.f32 %v1635, %v1637
    %v1640 = vmul.f32 %v1624, %v1624
    %v1641 = vmul.f32 %v1625, %v1625
    %v1642 = vadd.f32 %v1638, %v1640
    %v1643 = vadd.f32 %v1639, %v1641
    %v1644 = vmul.f32 %v1632, %v1632
    %v1645 = vmul.f32 %v1633, %v1633
    %v1646 = vadd.f32 %v1642, %v1644
    %v1647 = vadd.f32 %v1643, %v1645
    %vm1648 = vcmp.lt.f32.partialorder %v1646, 1.0
    %vm1649 = vcmp.lt.f32.partialorder %v1647, 1.0
    %v1650 = vmax.f32 %v1646, 1e-30
    %v1651 = vmax.f32 %v1647, 1e-30
    %v1652 = vrsqrt.pop %v1650
    %v1653 = vrsqrt.pop %v1651
    %v1654 = vmul.f32 %v1652, 0.001
    %v1655 = vmul.f32 %v1653, 0.001
    %v1656 = vsel %vm1648, 0.001, %v1654
    %v1657 = vsel %vm1649, 0.001, %v1655
    %v1658 = vmul.f32 %v1608, %v1656
    %v1659 = vmul.f32 %v1609, %v1657
    %v1660 = vadd.f32 %v1066, %v1658
    %v1661 = vadd.f32 %v1067, %v1659
    %v1662 = vmul.f32 %v1616, %v1656
    %v1663 = vmul.f32 %v1617, %v1657
    %v1664 = vadd.f32 %v1094, %v1662
    %v1665 = vadd.f32 %v1095, %v1663
    %v1666 = vmul.f32 %v1624, %v1656
    %v1667 = vmul.f32 %v1625, %v1657
    %v1668 = vadd.f32 %v1122, %v1666
    %v1669 = vadd.f32 %v1123, %v1667
    %v1670 = vmul.f32 %v1632, %v1656
    %v1671 = vmul.f32 %v1633, %v1657
    %v1672 = vadd.f32 %v1150, %v1670
    %v1673 = vadd.f32 %v1151, %v1671
    %s1674 = sld [smem:[#allocation4 + $0x20]]
    %v1675 = vstv %s1674
    %v1676 = vmul.f32 %v1675, %v1660
    %v1677 = vmul.f32 %v1675, %v1661
    %s1678 = sld [smem:[#allocation4 + $0x21]]
    %v1679 = vstv %s1678
    %v1680 = vmul.f32 %v1679, %v1664
    %v1681 = vmul.f32 %v1679, %v1665
    %v1682 = vadd.f32 %v1676, %v1680
    %v1683 = vadd.f32 %v1677, %v1681
    %s1684 = sld [smem:[#allocation4 + $0x22]]
    %v1685 = vstv %s1684
    %v1686 = vmul.f32 %v1685, %v1668
    %v1687 = vmul.f32 %v1685, %v1669
    %v1688 = vadd.f32 %v1682, %v1686
    %v1689 = vadd.f32 %v1683, %v1687
    %s1690 = sld [smem:[#allocation4 + $0x23]]
    %v1691 = vstv %s1690
    %v1692 = vmul.f32 %v1691, %v1672
    %v1693 = vmul.f32 %v1691, %v1673
    %v1694 = vadd.f32 %v1688, %v1692
    %v1695 = vadd.f32 %v1689, %v1693
    %s1696 = sld [smem:[#allocation5 + $0x8]]
    %v1697 = vstv %s1696
    %v1698 = vadd.f32 %v1694, %v1697
    %v1699 = vadd.f32 %v1695, %v1697
    %v1700 = vmax.f32 %v1698, 0.0
    %v1701 = vmax.f32 %v1699, 0.0
    %s1702 = sld [smem:[#allocation4 + $0x24]]
    %v1703 = vstv %s1702
    %v1704 = vmul.f32 %v1703, %v1660
    %v1705 = vmul.f32 %v1703, %v1661
    %s1706 = sld [smem:[#allocation4 + $0x25]]
    %v1707 = vstv %s1706
    %v1708 = vmul.f32 %v1707, %v1664
    %v1709 = vmul.f32 %v1707, %v1665
    %v1710 = vadd.f32 %v1704, %v1708
    %v1711 = vadd.f32 %v1705, %v1709
    %s1712 = sld [smem:[#allocation4 + $0x26]]
    %v1713 = vstv %s1712
    %v1714 = vmul.f32 %v1713, %v1668
    %v1715 = vmul.f32 %v1713, %v1669
    %v1716 = vadd.f32 %v1710, %v1714
    %v1717 = vadd.f32 %v1711, %v1715
    %s1718 = sld [smem:[#allocation4 + $0x27]]
    %v1719 = vstv %s1718
    %v1720 = vmul.f32 %v1719, %v1672
    %v1721 = vmul.f32 %v1719, %v1673
    %v1722 = vadd.f32 %v1716, %v1720
    %v1723 = vadd.f32 %v1717, %v1721
    %s1724 = sld [smem:[#allocation5 + $0x9]]
    %v1725 = vstv %s1724
    %v1726 = vadd.f32 %v1722, %v1725
    %v1727 = vadd.f32 %v1723, %v1725
    %v1728 = vmax.f32 %v1726, 0.0
    %v1729 = vmax.f32 %v1727, 0.0
    %s1730 = sld [smem:[#allocation4 + $0x28]]
    %v1731 = vstv %s1730
    %v1732 = vmul.f32 %v1731, %v1660
    %v1733 = vmul.f32 %v1731, %v1661
    %s1734 = sld [smem:[#allocation4 + $0x29]]
    %v1735 = vstv %s1734
    %v1736 = vmul.f32 %v1735, %v1664
    %v1737 = vmul.f32 %v1735, %v1665
    %v1738 = vadd.f32 %v1732, %v1736
    %v1739 = vadd.f32 %v1733, %v1737
    %s1740 = sld [smem:[#allocation4 + $0x2a]]
    %v1741 = vstv %s1740
    %v1742 = vmul.f32 %v1741, %v1668
    %v1743 = vmul.f32 %v1741, %v1669
    %v1744 = vadd.f32 %v1738, %v1742
    %v1745 = vadd.f32 %v1739, %v1743
    %s1746 = sld [smem:[#allocation4 + $0x2b]]
    %v1747 = vstv %s1746
    %v1748 = vmul.f32 %v1747, %v1672
    %v1749 = vmul.f32 %v1747, %v1673
    %v1750 = vadd.f32 %v1744, %v1748
    %v1751 = vadd.f32 %v1745, %v1749
    %s1752 = sld [smem:[#allocation5 + $0xa]]
    %v1753 = vstv %s1752
    %v1754 = vadd.f32 %v1750, %v1753
    %v1755 = vadd.f32 %v1751, %v1753
    %v1756 = vmax.f32 %v1754, 0.0
    %v1757 = vmax.f32 %v1755, 0.0
    %s1758 = sld [smem:[#allocation4 + $0x2c]]
    %v1759 = vstv %s1758
    %v1760 = vmul.f32 %v1759, %v1660
    %v1761 = vmul.f32 %v1759, %v1661
    %s1762 = sld [smem:[#allocation4 + $0x2d]]
    %v1763 = vstv %s1762
    %v1764 = vmul.f32 %v1763, %v1664
    %v1765 = vmul.f32 %v1763, %v1665
    %v1766 = vadd.f32 %v1760, %v1764
    %v1767 = vadd.f32 %v1761, %v1765
    %s1768 = sld [smem:[#allocation4 + $0x2e]]
    %v1769 = vstv %s1768
    %v1770 = vmul.f32 %v1769, %v1668
    %v1771 = vmul.f32 %v1769, %v1669
    %v1772 = vadd.f32 %v1766, %v1770
    %v1773 = vadd.f32 %v1767, %v1771
    %s1774 = sld [smem:[#allocation4 + $0x2f]]
    %v1775 = vstv %s1774
    %v1776 = vmul.f32 %v1775, %v1672
    %v1777 = vmul.f32 %v1775, %v1673
    %v1778 = vadd.f32 %v1772, %v1776
    %v1779 = vadd.f32 %v1773, %v1777
    %s1780 = sld [smem:[#allocation5 + $0xb]]
    %v1781 = vstv %s1780
    %v1782 = vadd.f32 %v1778, %v1781
    %v1783 = vadd.f32 %v1779, %v1781
    %v1784 = vmax.f32 %v1782, 0.0
    %v1785 = vmax.f32 %v1783, 0.0
    %v1786 = vmul.f32 %v1700, %v47
    %v1787 = vmul.f32 %v1701, %v47
    %v1788 = vmul.f32 %v1786, 1.442695
    %v1789 = vpow.pop %v1788
    %v1790 = vmul.f32 %v1787, 1.442695
    %v1791 = vpow.pop %v1790
    %v1792 = vmul.f32 %v1728, %v47
    %v1793 = vmul.f32 %v1729, %v47
    %v1794 = vmul.f32 %v1792, 1.442695
    %v1795 = vpow.pop %v1794
    %v1796 = vmul.f32 %v1793, 1.442695
    %v1797 = vpow.pop %v1796
    %v1798 = vmul.f32 %v1756, %v47
    %v1799 = vmul.f32 %v1757, %v47
    %v1800 = vmul.f32 %v1798, 1.442695
    %v1801 = vpow.pop %v1800
    %v1802 = vmul.f32 %v1799, 1.442695
    %v1803 = vpow.pop %v1802
    %v1804 = vmul.f32 %v1784, %v47
    %v1805 = vmul.f32 %v1785, %v47
    %v1806 = vmul.f32 %v1804, 1.442695
    %v1807 = vpow.pop %v1806
    %v1808 = vmul.f32 %v1805, 1.442695
    %v1809 = vpow.pop %v1808
    %v1810 = vmul.f32 %v1789, %v1789
    %v1811 = vmul.f32 %v1791, %v1791
    %1812 = vadd.xlane.f32.xlu0 %v1810
    %v1813 = vpop.xlane.xlu0 %1812
    %1814 = vadd.xlane.f32.xlu0 %v1811
    %v1815 = vpop.xlane.xlu0 %1814
    %v1816 = vmul.f32 %v1789, %v1795
    %v1817 = vmul.f32 %v1791, %v1797
    %1818 = vadd.xlane.f32.xlu0 %v1816
    %v1819 = vpop.xlane.xlu0 %1818
    %1820 = vadd.xlane.f32.xlu0 %v1817
    %v1821 = vpop.xlane.xlu0 %1820
    %v1822 = vmul.f32 %v1789, %v1801
    %v1823 = vmul.f32 %v1791, %v1803
    %1824 = vadd.xlane.f32.xlu0 %v1822
    %v1825 = vpop.xlane.xlu0 %1824
    %1826 = vadd.xlane.f32.xlu0 %v1823
    %v1827 = vpop.xlane.xlu0 %1826
    %v1828 = vmul.f32 %v1789, %v1807
    %v1829 = vmul.f32 %v1791, %v1809
    %1830 = vadd.xlane.f32.xlu0 %v1828
    %v1831 = vpop.xlane.xlu0 %1830
    %1832 = vadd.xlane.f32.xlu0 %v1829
    %v1833 = vpop.xlane.xlu0 %1832
    %v1834 = vmul.f32 %v1795, %v1795
    %v1835 = vmul.f32 %v1797, %v1797
    %1836 = vadd.xlane.f32.xlu0 %v1834
    %v1837 = vpop.xlane.xlu0 %1836
    %1838 = vadd.xlane.f32.xlu0 %v1835
    %v1839 = vpop.xlane.xlu0 %1838
    %v1840 = vmul.f32 %v1795, %v1801
    %v1841 = vmul.f32 %v1797, %v1803
    %1842 = vadd.xlane.f32.xlu0 %v1840
    %v1843 = vpop.xlane.xlu0 %1842
    %1844 = vadd.xlane.f32.xlu0 %v1841
    %v1845 = vpop.xlane.xlu0 %1844
    %v1846 = vmul.f32 %v1795, %v1807
    %v1847 = vmul.f32 %v1797, %v1809
    %1848 = vadd.xlane.f32.xlu0 %v1846
    %v1849 = vpop.xlane.xlu0 %1848
    %1850 = vadd.xlane.f32.xlu0 %v1847
    %v1851 = vpop.xlane.xlu0 %1850
    %v1852 = vmul.f32 %v1801, %v1801
    %v1853 = vmul.f32 %v1803, %v1803
    %1854 = vadd.xlane.f32.xlu0 %v1852
    %v1855 = vpop.xlane.xlu0 %1854
    %1856 = vadd.xlane.f32.xlu0 %v1853
    %v1857 = vpop.xlane.xlu0 %1856
    %v1858 = vmul.f32 %v1801, %v1807
    %v1859 = vmul.f32 %v1803, %v1809
    %1860 = vadd.xlane.f32.xlu0 %v1858
    %v1861 = vpop.xlane.xlu0 %1860
    %1862 = vadd.xlane.f32.xlu0 %v1859
    %v1863 = vpop.xlane.xlu0 %1862
    %v1864 = vmul.f32 %v1807, %v1807
    %v1865 = vmul.f32 %v1809, %v1809
    %1866 = vadd.xlane.f32.xlu0 %v1864
    %v1867 = vpop.xlane.xlu0 %1866
    %1868 = vadd.xlane.f32.xlu0 %v1865
    %v1869 = vpop.xlane.xlu0 %1868
    %v1870 = vmul.f32 %v1789, %v42
    %v1871 = vmul.f32 %v1791, %v43
    %1872 = vadd.xlane.f32.xlu0 %v1870
    %v1873 = vpop.xlane.xlu0 %1872
    %1874 = vadd.xlane.f32.xlu0 %v1871
    %v1875 = vpop.xlane.xlu0 %1874
    %v1876 = vmul.f32 %v1795, %v42
    %v1877 = vmul.f32 %v1797, %v43
    %1878 = vadd.xlane.f32.xlu0 %v1876
    %v1879 = vpop.xlane.xlu0 %1878
    %1880 = vadd.xlane.f32.xlu0 %v1877
    %v1881 = vpop.xlane.xlu0 %1880
    %v1882 = vmul.f32 %v1801, %v42
    %v1883 = vmul.f32 %v1803, %v43
    %1884 = vadd.xlane.f32.xlu0 %v1882
    %v1885 = vpop.xlane.xlu0 %1884
    %1886 = vadd.xlane.f32.xlu0 %v1883
    %v1887 = vpop.xlane.xlu0 %1886
    %v1888 = vmul.f32 %v1807, %v42
    %v1889 = vmul.f32 %v1809, %v43
    %1890 = vadd.xlane.f32.xlu0 %v1888
    %v1891 = vpop.xlane.xlu0 %1890
    %1892 = vadd.xlane.f32.xlu0 %v1889
    %v1893 = vpop.xlane.xlu0 %1892
    %v1894 = vadd.f32 %v1813, %v1837
    %v1895 = vadd.f32 %v1815, %v1839
    %v1896 = vadd.f32 %v1894, %v1855
    %v1897 = vadd.f32 %v1895, %v1857
    %v1898 = vadd.f32 %v1896, %v1867
    %v1899 = vadd.f32 %v1897, %v1869
    %v1900 = vmul.f32 %v1898, 2.5e-05
    %v1901 = vmul.f32 %v1899, 2.5e-05
    %v1902 = vadd.f32 %v1813, %v1900
    %v1903 = vadd.f32 %v1815, %v1901
    %v1904 = vadd.f32 %v1837, %v1900
    %v1905 = vadd.f32 %v1839, %v1901
    %v1906 = vadd.f32 %v1855, %v1900
    %v1907 = vadd.f32 %v1857, %v1901
    %v1908 = vadd.f32 %v1867, %v1900
    %v1909 = vadd.f32 %v1869, %v1901
    %v1910 = vmul.f32 %v1902, %v1904
    %v1911 = vmul.f32 %v1903, %v1905
    %v1912 = vmul.f32 %v1819, %v1819
    %v1913 = vmul.f32 %v1821, %v1821
    %v1914 = vsub.f32 %v1910, %v1912
    %v1915 = vsub.f32 %v1911, %v1913
    %v1916 = vmul.f32 %v1902, %v1843
    %v1917 = vmul.f32 %v1903, %v1845
    %v1918 = vmul.f32 %v1819, %v1825
    %v1919 = vmul.f32 %v1821, %v1827
    %v1920 = vsub.f32 %v1916, %v1918
    %v1921 = vsub.f32 %v1917, %v1919
    %v1922 = vmul.f32 %v1902, %v1849
    %v1923 = vmul.f32 %v1903, %v1851
    %v1924 = vmul.f32 %v1819, %v1831
    %v1925 = vmul.f32 %v1821, %v1833
    %v1926 = vsub.f32 %v1922, %v1924
    %v1927 = vsub.f32 %v1923, %v1925
    %v1928 = vmul.f32 %v1819, %v1843
    %v1929 = vmul.f32 %v1821, %v1845
    %v1930 = vmul.f32 %v1904, %v1825
    %v1931 = vmul.f32 %v1905, %v1827
    %v1932 = vsub.f32 %v1928, %v1930
    %v1933 = vsub.f32 %v1929, %v1931
    %v1934 = vmul.f32 %v1819, %v1849
    %v1935 = vmul.f32 %v1821, %v1851
    %v1936 = vmul.f32 %v1904, %v1831
    %v1937 = vmul.f32 %v1905, %v1833
    %v1938 = vsub.f32 %v1934, %v1936
    %v1939 = vsub.f32 %v1935, %v1937
    %v1940 = vmul.f32 %v1825, %v1849
    %v1941 = vmul.f32 %v1827, %v1851
    %v1942 = vmul.f32 %v1843, %v1831
    %v1943 = vmul.f32 %v1845, %v1833
    %v1944 = vsub.f32 %v1940, %v1942
    %v1945 = vsub.f32 %v1941, %v1943
    %v1946 = vmul.f32 %v1906, %v1908
    %v1947 = vmul.f32 %v1907, %v1909
    %v1948 = vmul.f32 %v1861, %v1861
    %v1949 = vmul.f32 %v1863, %v1863
    %v1950 = vsub.f32 %v1946, %v1948
    %v1951 = vsub.f32 %v1947, %v1949
    %v1952 = vmul.f32 %v1843, %v1908
    %v1953 = vmul.f32 %v1845, %v1909
    %v1954 = vmul.f32 %v1849, %v1861
    %v1955 = vmul.f32 %v1851, %v1863
    %v1956 = vsub.f32 %v1952, %v1954
    %v1957 = vsub.f32 %v1953, %v1955
    %v1958 = vmul.f32 %v1843, %v1861
    %v1959 = vmul.f32 %v1845, %v1863
    %v1960 = vmul.f32 %v1849, %v1906
    %v1961 = vmul.f32 %v1851, %v1907
    %v1962 = vsub.f32 %v1958, %v1960
    %v1963 = vsub.f32 %v1959, %v1961
    %v1964 = vmul.f32 %v1825, %v1908
    %v1965 = vmul.f32 %v1827, %v1909
    %v1966 = vmul.f32 %v1831, %v1861
    %v1967 = vmul.f32 %v1833, %v1863
    %v1968 = vsub.f32 %v1964, %v1966
    %v1969 = vsub.f32 %v1965, %v1967
    %v1970 = vmul.f32 %v1825, %v1861
    %v1971 = vmul.f32 %v1827, %v1863
    %v1972 = vmul.f32 %v1831, %v1906
    %v1973 = vmul.f32 %v1833, %v1907
    %v1974 = vsub.f32 %v1970, %v1972
    %v1975 = vsub.f32 %v1971, %v1973
    %v1976 = vmul.f32 %v1914, %v1950
    %v1977 = vmul.f32 %v1915, %v1951
    %v1978 = vmul.f32 %v1920, %v1956
    %v1979 = vmul.f32 %v1921, %v1957
    %v1980 = vsub.f32 %v1976, %v1978
    %v1981 = vsub.f32 %v1977, %v1979
    %v1982 = vmul.f32 %v1926, %v1962
    %v1983 = vmul.f32 %v1927, %v1963
    %v1984 = vadd.f32 %v1980, %v1982
    %v1985 = vadd.f32 %v1981, %v1983
    %v1986 = vmul.f32 %v1932, %v1968
    %v1987 = vmul.f32 %v1933, %v1969
    %v1988 = vadd.f32 %v1984, %v1986
    %v1989 = vadd.f32 %v1985, %v1987
    %v1990 = vmul.f32 %v1938, %v1974
    %v1991 = vmul.f32 %v1939, %v1975
    %v1992 = vsub.f32 %v1988, %v1990
    %v1993 = vsub.f32 %v1989, %v1991
    %v1994 = vmul.f32 %v1944, %v1944
    %v1995 = vmul.f32 %v1945, %v1945
    %v1996 = vadd.f32 %v1992, %v1994
    %v1997 = vadd.f32 %v1993, %v1995
    %v1998 = vrcp.pop %v1996
    %v1999 = vmul.f32 1.0, %v1998
    %v2000 = vrcp.pop %v1997
    %v2001 = vmul.f32 1.0, %v2000
    %v2002 = vmul.f32 %v1904, %v1950
    %v2003 = vmul.f32 %v1905, %v1951
    %v2004 = vmul.f32 %v1843, %v1956
    %v2005 = vmul.f32 %v1845, %v1957
    %v2006 = vsub.f32 %v2002, %v2004
    %v2007 = vsub.f32 %v2003, %v2005
    %v2008 = vmul.f32 %v1849, %v1962
    %v2009 = vmul.f32 %v1851, %v1963
    %v2010 = vadd.f32 %v2006, %v2008
    %v2011 = vadd.f32 %v2007, %v2009
    %v2012 = vmul.f32 %v2010, %v1873
    %v2013 = vmul.f32 %v2011, %v1875
    %v2014 = vsub.f32 0.0, %v1819
    %v2015 = vsub.f32 0.0, %v1821
    %v2016 = vmul.f32 %v2014, %v1950
    %v2017 = vmul.f32 %v2015, %v1951
    %v2018 = vmul.f32 %v1825, %v1956
    %v2019 = vmul.f32 %v1827, %v1957
    %v2020 = vadd.f32 %v2016, %v2018
    %v2021 = vadd.f32 %v2017, %v2019
    %v2022 = vmul.f32 %v1831, %v1962
    %v2023 = vmul.f32 %v1833, %v1963
    %v2024 = vsub.f32 %v2020, %v2022
    %v2025 = vsub.f32 %v2021, %v2023
    %v2026 = vmul.f32 %v2024, %v1879
    %v2027 = vmul.f32 %v2025, %v1881
    %v2028 = vadd.f32 %v2012, %v2026
    %v2029 = vadd.f32 %v2013, %v2027
    %v2030 = vmul.f32 %v1849, %v1944
    %v2031 = vmul.f32 %v1851, %v1945
    %v2032 = vmul.f32 %v1861, %v1938
    %v2033 = vmul.f32 %v1863, %v1939
    %v2034 = vsub.f32 %v2030, %v2032
    %v2035 = vsub.f32 %v2031, %v2033
    %v2036 = vmul.f32 %v1908, %v1932
    %v2037 = vmul.f32 %v1909, %v1933
    %v2038 = vadd.f32 %v2034, %v2036
    %v2039 = vadd.f32 %v2035, %v2037
    %v2040 = vmul.f32 %v2038, %v1885
    %v2041 = vmul.f32 %v2039, %v1887
    %v2042 = vadd.f32 %v2028, %v2040
    %v2043 = vadd.f32 %v2029, %v2041
    %v2044 = vsub.f32 0.0, %v1843
    %v2045 = vsub.f32 0.0, %v1845
    %v2046 = vmul.f32 %v2044, %v1944
    %v2047 = vmul.f32 %v2045, %v1945
    %v2048 = vmul.f32 %v1906, %v1938
    %v2049 = vmul.f32 %v1907, %v1939
    %v2050 = vadd.f32 %v2046, %v2048
    %v2051 = vadd.f32 %v2047, %v2049
    %v2052 = vmul.f32 %v1861, %v1932
    %v2053 = vmul.f32 %v1863, %v1933
    %v2054 = vsub.f32 %v2050, %v2052
    %v2055 = vsub.f32 %v2051, %v2053
    %v2056 = vmul.f32 %v2054, %v1891
    %v2057 = vmul.f32 %v2055, %v1893
    %v2058 = vadd.f32 %v2042, %v2056
    %v2059 = vadd.f32 %v2043, %v2057
    %v2060 = vmul.f32 %v2058, %v1999
    %v2061 = vmul.f32 %v2059, %v2001
    %v2062 = vmul.f32 %v1843, %v1968
    %v2063 = vmul.f32 %v1845, %v1969
    %v2064 = vadd.f32 %v2016, %v2062
    %v2065 = vadd.f32 %v2017, %v2063
    %v2066 = vmul.f32 %v1849, %v1974
    %v2067 = vmul.f32 %v1851, %v1975
    %v2068 = vsub.f32 %v2064, %v2066
    %v2069 = vsub.f32 %v2065, %v2067
    %v2070 = vmul.f32 %v2068, %v1873
    %v2071 = vmul.f32 %v2069, %v1875
    %v2072 = vmul.f32 %v1902, %v1950
    %v2073 = vmul.f32 %v1903, %v1951
    %v2074 = vmul.f32 %v1825, %v1968
    %v2075 = vmul.f32 %v1827, %v1969
    %v2076 = vsub.f32 %v2072, %v2074
    %v2077 = vsub.f32 %v2073, %v2075
    %v2078 = vmul.f32 %v1831, %v1974
    %v2079 = vmul.f32 %v1833, %v1975
    %v2080 = vadd.f32 %v2076, %v2078
    %v2081 = vadd.f32 %v2077, %v2079
    %v2082 = vmul.f32 %v2080, %v1879
    %v2083 = vmul.f32 %v2081, %v1881
    %v2084 = vadd.f32 %v2070, %v2082
    %v2085 = vadd.f32 %v2071, %v2083
    %v2086 = vsub.f32 0.0, %v1831
    %v2087 = vsub.f32 0.0, %v1833
    %v2088 = vmul.f32 %v2086, %v1944
    %v2089 = vmul.f32 %v2087, %v1945
    %v2090 = vmul.f32 %v1861, %v1926
    %v2091 = vmul.f32 %v1863, %v1927
    %v2092 = vadd.f32 %v2088, %v2090
    %v2093 = vadd.f32 %v2089, %v2091
    %v2094 = vmul.f32 %v1908, %v1920
    %v2095 = vmul.f32 %v1909, %v1921
    %v2096 = vsub.f32 %v2092, %v2094
    %v2097 = vsub.f32 %v2093, %v2095
    %v2098 = vmul.f32 %v2096, %v1885
    %v2099 = vmul.f32 %v2097, %v1887
    %v2100 = vadd.f32 %v2084, %v2098
    %v2101 = vadd.f32 %v2085, %v2099
    %v2102 = vmul.f32 %v1825, %v1944
    %v2103 = vmul.f32 %v1827, %v1945
    %v2104 = vmul.f32 %v1906, %v1926
    %v2105 = vmul.f32 %v1907, %v1927
    %v2106 = vsub.f32 %v2102, %v2104
    %v2107 = vsub.f32 %v2103, %v2105
    %v2108 = vmul.f32 %v1861, %v1920
    %v2109 = vmul.f32 %v1863, %v1921
    %v2110 = vadd.f32 %v2106, %v2108
    %v2111 = vadd.f32 %v2107, %v2109
    %v2112 = vmul.f32 %v2110, %v1891
    %v2113 = vmul.f32 %v2111, %v1893
    %v2114 = vadd.f32 %v2100, %v2112
    %v2115 = vadd.f32 %v2101, %v2113
    %v2116 = vmul.f32 %v2114, %v1999
    %v2117 = vmul.f32 %v2115, %v2001
    %v2118 = vmul.f32 %v1819, %v1956
    %v2119 = vmul.f32 %v1821, %v1957
    %v2120 = vmul.f32 %v1904, %v1968
    %v2121 = vmul.f32 %v1905, %v1969
    %v2122 = vsub.f32 %v2118, %v2120
    %v2123 = vsub.f32 %v2119, %v2121
    %v2124 = vadd.f32 %v2122, %v2030
    %v2125 = vadd.f32 %v2123, %v2031
    %v2126 = vmul.f32 %v2124, %v1873
    %v2127 = vmul.f32 %v2125, %v1875
    %v2128 = vsub.f32 0.0, %v1902
    %v2129 = vsub.f32 0.0, %v1903
    %v2130 = vmul.f32 %v2128, %v1956
    %v2131 = vmul.f32 %v2129, %v1957
    %v2132 = vmul.f32 %v1819, %v1968
    %v2133 = vmul.f32 %v1821, %v1969
    %v2134 = vadd.f32 %v2130, %v2132
    %v2135 = vadd.f32 %v2131, %v2133
    %v2136 = vmul.f32 %v1831, %v1944
    %v2137 = vmul.f32 %v1833, %v1945
    %v2138 = vsub.f32 %v2134, %v2136
    %v2139 = vsub.f32 %v2135, %v2137
    %v2140 = vmul.f32 %v2138, %v1879
    %v2141 = vmul.f32 %v2139, %v1881
    %v2142 = vadd.f32 %v2126, %v2140
    %v2143 = vadd.f32 %v2127, %v2141
    %v2144 = vmul.f32 %v1831, %v1938
    %v2145 = vmul.f32 %v1833, %v1939
    %v2146 = vmul.f32 %v1849, %v1926
    %v2147 = vmul.f32 %v1851, %v1927
    %v2148 = vsub.f32 %v2144, %v2146
    %v2149 = vsub.f32 %v2145, %v2147
    %v2150 = vmul.f32 %v1908, %v1914
    %v2151 = vmul.f32 %v1909, %v1915
    %v2152 = vadd.f32 %v2148, %v2150
    %v2153 = vadd.f32 %v2149, %v2151
    %v2154 = vmul.f32 %v2152, %v1885
    %v2155 = vmul.f32 %v2153, %v1887
    %v2156 = vadd.f32 %v2142, %v2154
    %v2157 = vadd.f32 %v2143, %v2155
    %v2158 = vsub.f32 0.0, %v1825
    %v2159 = vsub.f32 0.0, %v1827
    %v2160 = vmul.f32 %v2158, %v1938
    %v2161 = vmul.f32 %v2159, %v1939
    %v2162 = vmul.f32 %v1843, %v1926
    %v2163 = vmul.f32 %v1845, %v1927
    %v2164 = vadd.f32 %v2160, %v2162
    %v2165 = vadd.f32 %v2161, %v2163
    %v2166 = vmul.f32 %v1861, %v1914
    %v2167 = vmul.f32 %v1863, %v1915
    %v2168 = vsub.f32 %v2164, %v2166
    %v2169 = vsub.f32 %v2165, %v2167
    %v2170 = vmul.f32 %v2168, %v1891
    %v2171 = vmul.f32 %v2169, %v1893
    %v2172 = vadd.f32 %v2156, %v2170
    %v2173 = vadd.f32 %v2157, %v2171
    %v2174 = vmul.f32 %v2172, %v1999
    %v2175 = vmul.f32 %v2173, %v2001
    %v2176 = vmul.f32 %v2014, %v1962
    %v2177 = vmul.f32 %v2015, %v1963
    %v2178 = vmul.f32 %v1904, %v1974
    %v2179 = vmul.f32 %v1905, %v1975
    %v2180 = vadd.f32 %v2176, %v2178
    %v2181 = vadd.f32 %v2177, %v2179
    %v2182 = vmul.f32 %v1843, %v1944
    %v2183 = vmul.f32 %v1845, %v1945
    %v2184 = vsub.f32 %v2180, %v2182
    %v2185 = vsub.f32 %v2181, %v2183
    %v2186 = vmul.f32 %v2184, %v1873
    %v2187 = vmul.f32 %v2185, %v1875
    %v2188 = vmul.f32 %v1902, %v1962
    %v2189 = vmul.f32 %v1903, %v1963
    %v2190 = vmul.f32 %v1819, %v1974
    %v2191 = vmul.f32 %v1821, %v1975
    %v2192 = vsub.f32 %v2188, %v2190
    %v2193 = vsub.f32 %v2189, %v2191
    %v2194 = vadd.f32 %v2192, %v2102
    %v2195 = vadd.f32 %v2193, %v2103
    %v2196 = vmul.f32 %v2194, %v1879
    %v2197 = vmul.f32 %v2195, %v1881
    %v2198 = vadd.f32 %v2186, %v2196
    %v2199 = vadd.f32 %v2187, %v2197
    %v2200 = vmul.f32 %v2086, %v1932
    %v2201 = vmul.f32 %v2087, %v1933
    %v2202 = vmul.f32 %v1849, %v1920
    %v2203 = vmul.f32 %v1851, %v1921
    %v2204 = vadd.f32 %v2200, %v2202
    %v2205 = vadd.f32 %v2201, %v2203
    %v2206 = vsub.f32 %v2204, %v2166
    %v2207 = vsub.f32 %v2205, %v2167
    %v2208 = vmul.f32 %v2206, %v1885
    %v2209 = vmul.f32 %v2207, %v1887
    %v2210 = vadd.f32 %v2198, %v2208
    %v2211 = vadd.f32 %v2199, %v2209
    %v2212 = vmul.f32 %v1825, %v1932
    %v2213 = vmul.f32 %v1827, %v1933
    %v2214 = vmul.f32 %v1843, %v1920
    %v2215 = vmul.f32 %v1845, %v1921
    %v2216 = vsub.f32 %v2212, %v2214
    %v2217 = vsub.f32 %v2213, %v2215
    %v2218 = vmul.f32 %v1906, %v1914
    %v2219 = vmul.f32 %v1907, %v1915
    %v2220 = vadd.f32 %v2216, %v2218
    %v2221 = vadd.f32 %v2217, %v2219
    %v2222 = vmul.f32 %v2220, %v1891
    %v2223 = vmul.f32 %v2221, %v1893
    %v2224 = vadd.f32 %v2210, %v2222
    %v2225 = vadd.f32 %v2211, %v2223
    %v2226 = vmul.f32 %v2224, %v1999
    %v2227 = vmul.f32 %v2225, %v2001
    %v2228 = vmul.f32 %v2060, %v1789
    %v2229 = vmul.f32 %v2061, %v1791
    %v2230 = vmul.f32 %v2116, %v1795
    %v2231 = vmul.f32 %v2117, %v1797
    %v2232 = vadd.f32 %v2228, %v2230
    %v2233 = vadd.f32 %v2229, %v2231
    %v2234 = vmul.f32 %v2174, %v1801
    %v2235 = vmul.f32 %v2175, %v1803
    %v2236 = vadd.f32 %v2232, %v2234
    %v2237 = vadd.f32 %v2233, %v2235
    %v2238 = vmul.f32 %v2226, %v1807
    %v2239 = vmul.f32 %v2227, %v1809
    %v2240 = vadd.f32 %v2236, %v2238
    %v2241 = vadd.f32 %v2237, %v2239
    %2242 = vst [vmem:[#allocation9] sm:$0xff] %v2240
    %2243 = vst [vmem:[#allocation9 + $0x8] sm:$0xff] %v2241
    %2244 = vst [vmem:[%s5] sm:$0xff] 0.0
    %2245 = vst [vmem:[%s5 + $0x8] sm:$0xff] 0.0
    %vm2246 = vcmask 7168
    %2247 = vst.msk [vmem:[%s5] sm:$0xff] %vm2246, %v1700
    %2248 = vst.msk [vmem:[%s5 + $0x8] sm:$0xff] %vm2246, %v1701
    %vm2249 = vcmask 15368
    %2250 = vst.msk [vmem:[%s5] sm:$0xff] %vm2249, %v1728
    %2251 = vst.msk [vmem:[%s5 + $0x8] sm:$0xff] %vm2249, %v1729
    %vm2252 = vcmask 23568
    %2253 = vst.msk [vmem:[%s5] sm:$0xff] %vm2252, %v1756
    %2254 = vst.msk [vmem:[%s5 + $0x8] sm:$0xff] %vm2252, %v1757
    %vm2255 = vcmask 31768
    %2256 = vst.msk [vmem:[%s5] sm:$0xff] %vm2255, %v1784
    %2257 = vst.msk [vmem:[%s5 + $0x8] sm:$0xff] %vm2255, %v1785
    // Predicated region
    $region10: #{uvp_regressor.1} parent=1 // pred_check
      _
    $region11: #{uvp_regressor.1} parent=1 // pred_check_branch
      %2259 = sbr.rel (0) target = $region13
    $region12: #{uvp_regressor.1} parent=1 // pred_region
      %s2261 = ssub.s32 256, 256
      %2262 = vsyncadd [#allocation8], %s2261
      %s2263 = sshll.u32 [#allocation9], 4
      %s2264 = int_to_ptr.vmem [resolvable:$true] %s2263
      %2269 = dma.vmem_to_hbm [thread:$0]  %s2264, 256, %s4, [#allocation8], 128, 128, 8
    $region13: #{uvp_regressor.1} parent=1 // pred_fallthru
      _
    // Predicated region
    $region14: #{uvp_regressor.1} parent=1 // pred_check
      _
    $region15: #{uvp_regressor.1} parent=1 // pred_check_branch
      %2271 = sbr.rel (0) target = $region17
    $region16: #{uvp_regressor.1} parent=1 // pred_region
      _
    $region17: #{uvp_regressor.1} parent=1 // pred_fallthru
      _
    // Predicated region
    $region18: #{uvp_regressor.1} parent=1 // pred_check
      _
    $region19: #{uvp_regressor.1} parent=1 // pred_check_branch
      %2273 = sbr.rel (0) target = $region21
    $region20: #{uvp_regressor.1} parent=1 // pred_region
      %2274 = dma.done [#allocation8], 256
    $region21: #{uvp_regressor.1} parent=1 // pred_fallthru
      _
    // Predicated region
    $region22: #{uvp_regressor.1} parent=1 // pred_check
      _
    $region23: #{uvp_regressor.1} parent=1 // pred_check_branch
      %2276 = sbr.rel (0) target = $region25
    $region24: #{uvp_regressor.1} parent=1 // pred_region
      _
    $region25: #{uvp_regressor.1} parent=1 // pred_fallthru
      _
    %2277 = vsyncpa [#allocation7], 1
    %2278 = vsyncpa [#allocation8], 1

</llo_original>
